<compile_context>
chip_gen: v5e
topology: v5e:2x2
jax: 0.10.0
libtpu: 0.0.40
codegen_flags: <defaults>
</compile_context>

<pallas_src>
import functools

import numpy as np
import jax
import jax.numpy as jnp
from jax.experimental import pallas as pl
from jax.experimental.pallas import tpu as pltpu


# ---------------------------------------------------------------------------
# In-kernel helpers
# ---------------------------------------------------------------------------
def _erf(x):
    # Abramowitz & Stegun 7.1.26, |err| <= 1.5e-7 (float32-accurate).
    p = 0.3275911
    a1, a2, a3, a4, a5 = 0.254829592, -0.284496736, 1.421413741, -1.453152027, 1.061405429
    sgn = jnp.where(x < 0.0, -1.0, 1.0)
    ax = jnp.abs(x)
    t = 1.0 / (1.0 + p * ax)
    poly = ((((a5 * t + a4) * t + a3) * t + a2) * t + a1) * t
    return sgn * (1.0 - poly * jnp.exp(-ax * ax))


def _gelu(x, fast):
    if fast:
        # tanh-form GELU: transcendental goes to the (otherwise idle) EUP slot.
        c = 0.7978845608028654  # sqrt(2/pi)
        return 0.5 * x * (1.0 + jnp.tanh(c * (x + 0.044715 * x * x * x)))
    # PyTorch nn.GELU() default (erf form), f32-accurate polynomial.
    return 0.5 * x * (1.0 + _erf(x * 0.7071067811865476))


# ---------------------------------------------------------------------------
# Fused kernel: attention (+ optional residual/RMSNorm/FF), channel-major tiles
# ---------------------------------------------------------------------------
def _att_block_kernel(off_ref, bias_ref, x_ref, wpT_ref, bp_ref, ctx_ref, ctxT_ref,
                      *rest, fast, compute_ff):
    del off_ref  # scalar-prefetch offsets are only consumed by index_maps
    if compute_ff:
        (gamma_ref, w1T_ref, b1_ref, w2T_ref, b2_ref,
         wc_ref, attn_ref, ff_ref) = rest
    else:
        wc_ref, attn_ref = rest

    mm = jnp.bfloat16 if fast else jnp.float32      # MXU operand dtype

    x = x_ref[0]                                     # (idf, tq)
    ctx = ctx_ref[0]                                 # (cdf, S)
    ctxT = ctxT_ref[0]                               # (S, cdf)

    # proj: Linear(idf -> cdf), channel-major:  t = w_proj^T @ x + b
    t = jnp.dot(wpT_ref[...], x, preferred_element_type=jnp.float32) + bp_ref[...]

    # attention logits: (S, tq) = context^T @ t
    logits = jnp.dot(ctxT, t.astype(mm), preferred_element_type=jnp.float32)

    # torch: attn.view(B*Q, S).masked_fill_(mask.repeat(Q,1), -inf).
    # The (b*Q+q)%B row cycling is precomputed on the host into a small additive
    # bias table (0 or -1e30), selected per tile by the scalar-prefetch index_map.
    # NOTE: a fully-masked row gives a uniform softmax here (torch gives NaN).
    logits = logits + bias_ref[0]

    # softmax over sourceL (sublane axis)
    mx = jnp.max(logits, axis=0, keepdims=True)
    e = jnp.exp(logits - mx)
    inv = pl.reciprocal(jnp.sum(e, axis=0, keepdims=True), approx=fast)
    p = e * inv                                      # (S, tq) f32
    attn_ref[0] = p.astype(attn_ref.dtype)           # lane-dense store

    # weightedContext: (cdf, tq) = context @ p
    wc = jnp.dot(ctx, p.astype(mm), preferred_element_type=jnp.float32)
    wc_ref[0] = wc.astype(wc_ref.dtype)              # lane-dense store

    if compute_ff:
        # Dead in the torch forward's return; computed only when requested.
        h = wc + x.astype(jnp.float32)               # attn_x + x
        # RMSNorm sum-of-squares on the MXU (ones-row matmul; rows identical).
        ones8 = jnp.ones((8, h.shape[0]), jnp.float32)
        ssq = jnp.dot(ones8, h * h, preferred_element_type=jnp.float32)[0:1, :]
        nrm = jnp.sqrt(ssq)
        inv_n = pl.reciprocal(jnp.maximum(nrm, 1e-12), approx=fast)
        # gamma_ref already carries the sqrt(idf) ChannelRMSNorm scale
        normed = h * inv_n * gamma_ref[...]
        y = jnp.dot(w1T_ref[...], normed.astype(mm),
                    preferred_element_type=jnp.float32) + b1_ref[...]
        y = _gelu(y, fast)
        y = jnp.dot(w2T_ref[...], y.astype(mm),
                    preferred_element_type=jnp.float32) + b2_ref[...]
        ff_ref[0] = (y + h).astype(ff_ref.dtype)     # ff(x) + x


# ---------------------------------------------------------------------------
# Generation-aware tiling helpers
# ---------------------------------------------------------------------------
def _vmem_budget_bytes():
    try:
        cap = int(pltpu.get_tpu_info().vmem_capacity_bytes)
    except Exception:
        cap = 64 * 1024 * 1024              # conservative (v7x-sized) fallback
    # 128 MiB parts (v5e/v6e) -> 96 MiB scoped limit; 64 MiB (v7x) -> 48 MiB.
    return min(96 * 1024 * 1024, (cap * 3) // 4)


def _pick_tq(Q, idf, cdf, S, hidden, mdt_bytes, out_bytes, compute_ff, budget):
    cands = [t for t in (2048, 1024, 512, 256, 128) if t <= Q and Q % t == 0]
    if not cands:
        cands = [Q]
    # Rough VMEM footprint: single-buffered weights + double-buffered streams.
    const_b = cdf * idf * mdt_bytes + 2 * (2 * cdf * S * mdt_bytes) + cdf * 128 * 4
    if compute_ff:
        const_b += 2 * idf * hidden * mdt_bytes + (hidden + 2 * idf) * 128 * 4
    for t in cands:
        stream = idf * t * mdt_bytes + (cdf + S) * t * out_bytes + S * t * 4
        if compute_ff:
            stream += idf * t * out_bytes
        if const_b + 2 * stream + (2 << 20) <= budget:
            return t
    return cands[-1]


# ---------------------------------------------------------------------------
# Wrapper
# ---------------------------------------------------------------------------
@functools.partial(jax.jit, static_argnames=("use_bf16", "compute_ff", "tq",
                                              "out_dtype", "single_buffer"))
def _att_block_forward_impl(params, x, context, text_mask, *, use_bf16, compute_ff,
                            tq, out_dtype, single_buffer):
    B, idf, ih, iw = x.shape
    Q = ih * iw
    cdf, S = context.shape[1], context.shape[2]
    hidden = params["w1"].shape[1] if compute_ff else 0

    mdt = jnp.bfloat16 if use_bf16 else jnp.float32     # MXU operand dtype
    mdt_bytes = 2 if use_bf16 else 4
    odt = np.dtype(out_dtype)
    budget = _vmem_budget_bytes()

    if tq is None:
        tq = _pick_tq(Q, idf, cdf, S, hidden, mdt_bytes, odt.itemsize,
                      compute_ff, budget)
    if Q % tq != 0:
        raise ValueError(f"tq={tq} must divide Q={Q}")
    n_q = Q // tq

    # Megacore-aware grid order: split B across the 2 TensorCores when it divides
    # evenly (better context reuse: b is outer); otherwise put n_q first.
    b_first = (B % 2 == 0)
    grid = (B, n_q) if b_first else (n_q, B)
    G1 = grid[1]

    if b_first:
        def bq(g0, g1): return g0, g1
    else:
        def bq(g0, g1): return g1, g0

    def _bq_map(f):                 # index_map ignoring the scalar-prefetch ref
        return lambda g0, g1, off: f(*bq(g0, g1))

    def _const_map(ndims):
        zeros = (0,) * ndims
        return lambda g0, g1, off: zeros

    def spec_const(shape):
        # Grid-invariant operand: single-buffer if supported, else default.
        if single_buffer:
            return pl.BlockSpec(shape, _const_map(len(shape)),
                                pipeline_mode=pl.Buffered(1))
        return pl.BlockSpec(shape, _const_map(len(shape)))

    # Scalar prefetch: per-tile mask-row offset  off[b, q] = (b*Q + q*tq) % B,
    # flattened in grid order.  Reproduces torch's mask.repeat(Q,1) row cycling.
    off_bq = (np.arange(B)[:, None] * Q + np.arange(n_q)[None, :] * tq) % B
    off_flat = (off_bq if b_first else off_bq.T).reshape(-1).astype(np.int32)

    def bias_map(g0, g1, off):
        return (off[g0 * G1 + g1], 0, 0)

    # Additive mask-bias table: one (S, tq) slab per distinct offset (<= B slabs).
    rows = (np.arange(B, dtype=np.int32)[:, None]
            + np.arange(tq, dtype=np.int32)[None, :]) % B               # (B, tq)
    mask_f = text_mask.astype(jnp.float32)                              # (B, S)
    bias_tbl = (jnp.transpose(jnp.take(mask_f, jnp.asarray(rows), axis=0),
                              (0, 2, 1)) * jnp.float32(-1e30)).astype(mdt)  # (B,S,tq)

    # NCHW -> channel-major (B, C, Q): pure reshape, no transposes on big tensors.
    x_cq = x.reshape(B, idf, Q).astype(mdt)
    ctx = context.astype(mdt)                                   # (B, cdf, S)
    ctxT = jnp.transpose(context, (0, 2, 1)).astype(mdt)        # (B, S, cdf)  (tiny)
    wpT = params["w_proj"].T.astype(mdt)                        # (cdf, idf)
    bp = params["b_proj"].reshape(cdf, 1)

    in_specs = [
        pl.BlockSpec((1, S, tq), bias_map),                         # mask bias table
        pl.BlockSpec((1, idf, tq), _bq_map(lambda b, q: (b, 0, q))),  # x
        spec_const((cdf, idf)),                                     # w_proj^T
        spec_const((cdf, 1)),                                       # b_proj
        pl.BlockSpec((1, cdf, S), _bq_map(lambda b, q: (b, 0, 0))),   # context
        pl.BlockSpec((1, S, cdf), _bq_map(lambda b, q: (b, 0, 0))),   # context^T
    ]
    args = [jnp.asarray(off_flat), bias_tbl, x_cq, wpT, bp, ctx, ctxT]

    out_shapes = [jax.ShapeDtypeStruct((B, cdf, Q), odt),
                  jax.ShapeDtypeStruct((B, S, Q), odt)]
    out_specs = [pl.BlockSpec((1, cdf, tq), _bq_map(lambda b, q: (b, 0, q))),
                 pl.BlockSpec((1, S, tq), _bq_map(lambda b, q: (b, 0, q)))]

    if compute_ff:
        # TODO(synk): biases/gamma could be packed into one (C_max, k) operand to
        # cut 128-lane VMEM padding; left separate (single-buffered) for clarity.
        gamma = (params["gamma"].reshape(idf, 1) * (float(idf) ** 0.5)).astype(jnp.float32)
        w1T = params["w1"].T.astype(mdt)                        # (hidden, idf)
        b1 = params["b1"].reshape(hidden, 1)
        w2T = params["w2"].T.astype(mdt)                        # (idf, hidden)
        b2 = params["b2"].reshape(idf, 1)
        in_specs += [spec_const((idf, 1)), spec_const((hidden, idf)),
                     spec_const((hidden, 1)), spec_const((idf, hidden)),
                     spec_const((idf, 1))]
        args += [gamma, w1T, b1, w2T, b2]
        out_shapes.append(jax.ShapeDtypeStruct((B, idf, Q), odt))
        out_specs.append(pl.BlockSpec((1, idf, tq), _bq_map(lambda b, q: (b, 0, q))))

    kernel = functools.partial(_att_block_kernel, fast=use_bf16, compute_ff=compute_ff)

    outs = pl.pallas_call(
        kernel,
        out_shape=tuple(out_shapes),
        grid_spec=pltpu.PrefetchScalarGridSpec(
            num_scalar_prefetch=1,
            grid=grid,
            in_specs=in_specs,
            out_specs=tuple(out_specs)),
        compiler_params=pltpu.CompilerParams(
            dimension_semantics=("parallel", "parallel"),
            vmem_limit_bytes=budget),
    )(*args)

    # channel-major -> NCHW is a pure reshape (no transposes).
    attn_x = outs[0].reshape(B, cdf, ih, iw)
    attn_ret = outs[1].reshape(B, S, ih, iw)
    if compute_ff:
        return attn_x, attn_ret, outs[2].reshape(B, idf, ih, iw)
    return attn_x, attn_ret


# Lazily probed: does this jax build accept pipeline_mode=pl.Buffered(1)?
_SINGLE_BUFFER_OK = [None]


def att_block_forward(params, x, context, text_mask, *, use_bf16=True,
                      compute_ff=False, out_dtype=jnp.float32, tq=None):
    """Pallas implementation of ATT_Block.forward.

    Returns (attn_x, attn) like the torch module; with compute_ff=True also
    returns the (dead-in-torch) ff-branch result for verification.
    """
    kwargs = dict(use_bf16=use_bf16, compute_ff=compute_ff, tq=tq,
                  out_dtype=np.dtype(out_dtype))
    if _SINGLE_BUFFER_OK[0] is None:
        try:
            out = _att_block_forward_impl(params, x, context, text_mask,
                                          single_buffer=True, **kwargs)
            jax.block_until_ready(out)
            _SINGLE_BUFFER_OK[0] = True
            return out
        except Exception:
            _SINGLE_BUFFER_OK[0] = False
    return _att_block_forward_impl(params, x, context, text_mask,
                                   single_buffer=_SINGLE_BUFFER_OK[0], **kwargs)


# ---------------------------------------------------------------------------
# Deterministic parameter init (synthetic; shapes from the module's __init__)
# ---------------------------------------------------------------------------
def init_params(key, idf, cdf, ff_mul):
    hidden = idf * ff_mul
    ks = jax.random.split(key, 6)
    return {
        "w_proj": jax.random.normal(ks[0], (idf, cdf), jnp.float32) * 0.1,   # Linear(idf, cdf)
        "b_proj": jax.random.normal(ks[1], (1, cdf), jnp.float32) * 0.1,
        "gamma":  jnp.ones((1, idf), jnp.float32),                            # ChannelRMSNorm gamma
        "w1":     jax.random.normal(ks[2], (idf, hidden), jnp.float32) * 0.1, # Conv2d(idf, hidden, 1)
        "b1":     jax.random.normal(ks[3], (1, hidden), jnp.float32) * 0.1,
        "w2":     jax.random.normal(ks[4], (hidden, idf), jnp.float32) * 0.1, # Conv2d(hidden, idf, 1)
        "b2":     jax.random.normal(ks[5], (1, idf), jnp.float32) * 0.1,
    }


# ---------------------------------------------------------------------------
# Pure-JAX reference replicating the torch forward (for verification)
# ---------------------------------------------------------------------------
def _reference(params, x, context, text_mask):
    B, idf, ih, iw = x.shape
    Q = ih * iw
    cdf, S = context.shape[1], context.shape[2]
    targetT = jnp.transpose(x.reshape(B, idf, Q), (0, 2, 1))
    targetT = targetT @ params["w_proj"] + params["b_proj"]
    attn = jnp.einsum("bqc,bcs->bqs", targetT, context)
    attn_flat = attn.reshape(B * Q, S)
    mask_rep = jnp.tile(text_mask, (Q, 1))
    attn_flat = jnp.where(mask_rep, -jnp.inf, attn_flat)
    attn_flat = jax.nn.softmax(attn_flat, axis=1)
    attn_T = jnp.transpose(attn_flat.reshape(B, Q, S), (0, 2, 1))
    wc = jnp.einsum("bcs,bsq->bcq", context, attn_T)
    attn_x = wc.reshape(B, cdf, ih, iw)
    attn_ret = attn_T.reshape(B, S, ih, iw)
    xr = attn_x + x
    nrm = xr / jnp.maximum(jnp.sqrt(jnp.sum(xr * xr, axis=1, keepdims=True)), 1e-12)
    nrm = nrm * (idf ** 0.5) * params["gamma"].reshape(1, idf, 1, 1)
    y = jnp.einsum("bchw,cd->bdhw", nrm, params["w1"]) + params["b1"].reshape(1, -1, 1, 1)
    y = jax.nn.gelu(y, approximate=False)
    y = jnp.einsum("bchw,cd->bdhw", y, params["w2"]) + params["b2"].reshape(1, -1, 1, 1)
    return attn_x, attn_ret, y + xr


if __name__ == "__main__":
    def run_case(B, idf, cdf, ih, iw, S, ff_mul, seed):
        key = jax.random.PRNGKey(seed)
        kx, kc, kp, kl = jax.random.split(key, 4)
        x = jax.random.normal(kx, (B, idf, ih, iw), jnp.float32)
        context = jax.random.normal(kc, (B, cdf, S), jnp.float32)
        lengths = jax.random.randint(kl, (B,), 2, S)   # >=2 valid, >=1 masked token
        text_mask = jnp.arange(S)[None, :] >= lengths[:, None]    # True == masked (pad)
        params = init_params(kp, idf, cdf, ff_mul)
        ref = _reference(params, x, context, text_mask)

        # Exact path (f32 MXU operands, erf GELU, exact reciprocals), incl. ff branch.
        out_exact = att_block_forward(params, x, context, text_mask,
                                      use_bf16=False, compute_ff=True)
        jax.block_until_ready(out_exact)
        for o, r in zip(out_exact, ref):
            np.testing.assert_allclose(np.asarray(o), np.asarray(r),
                                       rtol=5e-3, atol=1e-4)

        # Production path: bf16 MXU, ff skipped (dead in the torch forward).
        out_fast = att_block_forward(params, x, context, text_mask, use_bf16=True)
        jax.block_until_ready(out_fast)
        for o, r in zip(out_fast, ref[:2]):
            np.testing.assert_allclose(np.asarray(o), np.asarray(r),
                                       rtol=5e-2, atol=1e-1)

        # bf16 output streams (halved HBM writeback).
        out_bf16 = att_block_forward(params, x, context, text_mask, use_bf16=True,
                                     out_dtype=jnp.bfloat16)
        jax.block_until_ready(out_bf16)
        for o, r in zip(out_bf16, ref[:2]):
            np.testing.assert_allclose(np.asarray(o.astype(jnp.float32)),
                                       np.asarray(r), rtol=5e-2, atol=1e-1)

    # Main case (B even -> (B, n_q) grid); idf == cdf so attn_x + x is well-formed.
    run_case(B=2, idf=32, cdf=32, ih=16, iw=16, S=8, ff_mul=2, seed=0)
    # Odd-B case: exercises the (n_q, B) grid order and non-trivial mask row cycling.
    run_case(B=3, idf=16, cdf=16, ih=8, iw=8, S=8, ff_mul=2, seed=1)

    print("KERNEL_OK")
</pallas_src>

<mosaic_0001>
module attributes {stable_mosaic.version = 11 : i64} {
  func.func @_att_block_kernel(%arg0: i32, %arg1: i32, %arg2: memref<2xi32, #tpu.memory_space<smem>>, %arg3: memref<1x8x256xf32, #tpu.memory_space<vmem>>, %arg4: memref<1x32x256xf32, #tpu.memory_space<vmem>>, %arg5: memref<32x32xf32, #tpu.memory_space<vmem>>, %arg6: memref<32x1xf32, #tpu.memory_space<vmem>>, %arg7: memref<1x32x8xf32, #tpu.memory_space<vmem>>, %arg8: memref<1x8x32xf32, #tpu.memory_space<vmem>>, %arg9: memref<32x1xf32, #tpu.memory_space<vmem>>, %arg10: memref<64x32xf32, #tpu.memory_space<vmem>>, %arg11: memref<64x1xf32, #tpu.memory_space<vmem>>, %arg12: memref<32x64xf32, #tpu.memory_space<vmem>>, %arg13: memref<32x1xf32, #tpu.memory_space<vmem>>, %arg14: memref<1x32x256xf32, #tpu.memory_space<vmem>>, %arg15: memref<1x8x256xf32, #tpu.memory_space<vmem>>, %arg16: memref<1x32x256xf32, #tpu.memory_space<vmem>>) attributes {dimension_semantics = [#tpu.dimension_semantics<parallel>, #tpu.dimension_semantics<parallel>], iteration_bounds = array<i64: 2, 1>, scalar_prefetch = 1 : i64, scratch_operands = 0 : i64, tpu.core_type = #tpu.core_type<tc>, window_params = [{transform_indices = @transform_0, window_bounds = array<i64: 1, 8, 256>}, {transform_indices = @transform_1, window_bounds = array<i64: 1, 32, 256>}, {pipeline_mode = #tpu.pipeline_mode<synchronous>, transform_indices = @transform_2, window_bounds = array<i64: 32, 32>}, {pipeline_mode = #tpu.pipeline_mode<synchronous>, transform_indices = @transform_3, window_bounds = array<i64: 32, 1>}, {transform_indices = @transform_4, window_bounds = array<i64: 1, 32, 8>}, {transform_indices = @transform_5, window_bounds = array<i64: 1, 8, 32>}, {pipeline_mode = #tpu.pipeline_mode<synchronous>, transform_indices = @transform_6, window_bounds = array<i64: 32, 1>}, {pipeline_mode = #tpu.pipeline_mode<synchronous>, transform_indices = @transform_7, window_bounds = array<i64: 64, 32>}, {pipeline_mode = #tpu.pipeline_mode<synchronous>, transform_indices = @transform_8, window_bounds = array<i64: 64, 1>}, {pipeline_mode = #tpu.pipeline_mode<synchronous>, transform_indices = @transform_9, window_bounds = array<i64: 32, 64>}, {pipeline_mode = #tpu.pipeline_mode<synchronous>, transform_indices = @transform_10, window_bounds = array<i64: 32, 1>}, {transform_indices = @transform_11, window_bounds = array<i64: 1, 32, 256>}, {transform_indices = @transform_12, window_bounds = array<i64: 1, 8, 256>}, {transform_indices = @transform_13, window_bounds = array<i64: 1, 32, 256>}]} {
    %c0 = arith.constant 0 : index
    %c0_0 = arith.constant 0 : index
    %c0_1 = arith.constant 0 : index
    %0 = vector.load %arg4[%c0, %c0_0, %c0_1] : memref<1x32x256xf32, #tpu.memory_space<vmem>>, vector<1x32x256xf32>
    %1 = vector.shape_cast %0 : vector<1x32x256xf32> to vector<32x256xf32>
    %c0_2 = arith.constant 0 : index
    %c0_3 = arith.constant 0 : index
    %c0_4 = arith.constant 0 : index
    %2 = vector.load %arg7[%c0_2, %c0_3, %c0_4] : memref<1x32x8xf32, #tpu.memory_space<vmem>>, vector<1x32x8xf32>
    %3 = vector.shape_cast %2 : vector<1x32x8xf32> to vector<32x8xf32>
    %c0_5 = arith.constant 0 : index
    %c0_6 = arith.constant 0 : index
    %c0_7 = arith.constant 0 : index
    %4 = vector.load %arg8[%c0_5, %c0_6, %c0_7] : memref<1x8x32xf32, #tpu.memory_space<vmem>>, vector<1x8x32xf32>
    %5 = vector.shape_cast %4 : vector<1x8x32xf32> to vector<8x32xf32>
    %c0_8 = arith.constant 0 : index
    %c0_9 = arith.constant 0 : index
    %6 = vector.load %arg5[%c0_8, %c0_9] : memref<32x32xf32, #tpu.memory_space<vmem>>, vector<32x32xf32>
    %cst = arith.constant dense<0.000000e+00> : vector<32x256xf32>
    %7 = tpu.matmul %6, %1, %cst {dimension_numbers = #tpu.dot_dimension_numbers<[1], [0], [0], [1], [0, 0, 1, 1], [], []>} : vector<32x32xf32>, vector<32x256xf32>, vector<32x256xf32> -> vector<32x256xf32>
    %c0_10 = arith.constant 0 : index
    %c0_11 = arith.constant 0 : index
    %8 = vector.load %arg6[%c0_10, %c0_11] : memref<32x1xf32, #tpu.memory_space<vmem>>, vector<32x1xf32>
    %9 = vector.broadcast %8 : vector<32x1xf32> to vector<32x256xf32>
    %10 = arith.addf %7, %9 : vector<32x256xf32>
    %cst_12 = arith.constant dense<0.000000e+00> : vector<8x256xf32>
    %11 = tpu.matmul %5, %10, %cst_12 {dimension_numbers = #tpu.dot_dimension_numbers<[1], [0], [0], [1], [0, 0, 1, 1], [], []>} : vector<8x32xf32>, vector<32x256xf32>, vector<8x256xf32> -> vector<8x256xf32>
    %c0_13 = arith.constant 0 : index
    %c0_14 = arith.constant 0 : index
    %c0_15 = arith.constant 0 : index
    %12 = vector.load %arg3[%c0_13, %c0_14, %c0_15] : memref<1x8x256xf32, #tpu.memory_space<vmem>>, vector<1x8x256xf32>
    %13 = vector.shape_cast %12 : vector<1x8x256xf32> to vector<8x256xf32>
    %14 = arith.addf %11, %13 : vector<8x256xf32>
    %cst_16 = arith.constant dense<0xFF800000> : vector<256xf32>
    %15 = vector.multi_reduction <maximumf>, %14, %cst_16 [0] : vector<8x256xf32> to vector<256xf32>
    %16 = vector.shape_cast %15 : vector<256xf32> to vector<1x256xf32>
    %17 = vector.broadcast %16 : vector<1x256xf32> to vector<8x256xf32>
    %18 = arith.subf %14, %17 : vector<8x256xf32>
    %19 = math.exp %18 : vector<8x256xf32>
    %cst_17 = arith.constant dense<0.000000e+00> : vector<256xf32>
    %20 = vector.multi_reduction <add>, %19, %cst_17 [0] : vector<8x256xf32> to vector<256xf32>
    %21 = vector.shape_cast %20 : vector<256xf32> to vector<1x256xf32>
    %22 = tpu.reciprocal %21 : vector<1x256xf32> -> vector<1x256xf32>
    %23 = vector.broadcast %22 : vector<1x256xf32> to vector<8x256xf32>
    %24 = arith.mulf %19, %23 : vector<8x256xf32>
    %c0_18 = arith.constant 0 : index
    %c0_19 = arith.constant 0 : index
    %c0_20 = arith.constant 0 : index
    %25 = vector.load %arg15[%c0_18, %c0_19, %c0_20] : memref<1x8x256xf32, #tpu.memory_space<vmem>>, vector<1x8x256xf32>
    %26 = vector.shape_cast %25 : vector<1x8x256xf32> to vector<8x256xf32>
    %27 = vector.shape_cast %24 : vector<8x256xf32> to vector<1x8x256xf32>
    tpu.vector_store %arg15[%c0_18, %c0_19, %c0_20], %27 {strides = array<i32>} : memref<1x8x256xf32, #tpu.memory_space<vmem>>, vector<1x8x256xf32>,
    %cst_21 = arith.constant dense<0.000000e+00> : vector<32x256xf32>
    %28 = tpu.matmul %3, %24, %cst_21 {dimension_numbers = #tpu.dot_dimension_numbers<[1], [0], [0], [1], [0, 0, 1, 1], [], []>} : vector<32x8xf32>, vector<8x256xf32>, vector<32x256xf32> -> vector<32x256xf32>
    %c0_22 = arith.constant 0 : index
    %c0_23 = arith.constant 0 : index
    %c0_24 = arith.constant 0 : index
    %29 = vector.load %arg14[%c0_22, %c0_23, %c0_24] : memref<1x32x256xf32, #tpu.memory_space<vmem>>, vector<1x32x256xf32>
    %30 = vector.shape_cast %29 : vector<1x32x256xf32> to vector<32x256xf32>
    %31 = vector.shape_cast %28 : vector<32x256xf32> to vector<1x32x256xf32>
    tpu.vector_store %arg14[%c0_22, %c0_23, %c0_24], %31 {strides = array<i32>} : memref<1x32x256xf32, #tpu.memory_space<vmem>>, vector<1x32x256xf32>,
    %32 = arith.addf %28, %1 : vector<32x256xf32>
    %cst_25 = arith.constant 1.000000e+00 : f32
    %33 = vector.broadcast %cst_25 : f32 to vector<8x32xf32>
    %34 = arith.mulf %32, %32 : vector<32x256xf32>
    %cst_26 = arith.constant dense<0.000000e+00> : vector<8x256xf32>
    %35 = tpu.matmul %33, %34, %cst_26 {dimension_numbers = #tpu.dot_dimension_numbers<[1], [0], [0], [1], [0, 0, 1, 1], [], []>} : vector<8x32xf32>, vector<32x256xf32>, vector<8x256xf32> -> vector<8x256xf32>
    %36 = vector.extract_strided_slice %35 {offsets = [0, 0], sizes = [1, 256], strides = [1, 1]} : vector<8x256xf32> to vector<1x256xf32>
    %37 = math.sqrt %36 : vector<1x256xf32>
    %cst_27 = arith.constant 9.99999996E-13 : f32
    %38 = vector.broadcast %cst_27 : f32 to vector<1x256xf32>
    %39 = arith.maximumf %37, %38 : vector<1x256xf32>
    %40 = tpu.reciprocal %39 : vector<1x256xf32> -> vector<1x256xf32>
    %41 = vector.broadcast %40 : vector<1x256xf32> to vector<32x256xf32>
    %42 = arith.mulf %32, %41 : vector<32x256xf32>
    %c0_28 = arith.constant 0 : index
    %c0_29 = arith.constant 0 : index
    %43 = vector.load %arg9[%c0_28, %c0_29] : memref<32x1xf32, #tpu.memory_space<vmem>>, vector<32x1xf32>
    %44 = vector.broadcast %43 : vector<32x1xf32> to vector<32x256xf32>
    %45 = arith.mulf %42, %44 : vector<32x256xf32>
    %c0_30 = arith.constant 0 : index
    %c0_31 = arith.constant 0 : index
    %46 = vector.load %arg10[%c0_30, %c0_31] : memref<64x32xf32, #tpu.memory_space<vmem>>, vector<64x32xf32>
    %cst_32 = arith.constant dense<0.000000e+00> : vector<64x256xf32>
    %47 = tpu.matmul %46, %45, %cst_32 {dimension_numbers = #tpu.dot_dimension_numbers<[1], [0], [0], [1], [0, 0, 1, 1], [], []>} : vector<64x32xf32>, vector<32x256xf32>, vector<64x256xf32> -> vector<64x256xf32>
    %c0_33 = arith.constant 0 : index
    %c0_34 = arith.constant 0 : index
    %48 = vector.load %arg11[%c0_33, %c0_34] : memref<64x1xf32, #tpu.memory_space<vmem>>, vector<64x1xf32>
    %49 = vector.broadcast %48 : vector<64x1xf32> to vector<64x256xf32>
    %50 = arith.addf %47, %49 : vector<64x256xf32>
    %cst_35 = arith.constant 5.000000e-01 : f32
    %51 = vector.broadcast %cst_35 : f32 to vector<64x256xf32>
    %52 = arith.mulf %51, %50 : vector<64x256xf32>
    %cst_36 = arith.constant 0.707106769 : f32
    %53 = vector.broadcast %cst_36 : f32 to vector<64x256xf32>
    %54 = arith.mulf %50, %53 : vector<64x256xf32>
    %cst_37 = arith.constant 0.000000e+00 : f32
    %55 = vector.broadcast %cst_37 : f32 to vector<64x256xf32>
    %56 = arith.cmpf olt, %54, %55 : vector<64x256xf32>
    %cst_38 = arith.constant -1.000000e+00 : f32
    %cst_39 = arith.constant 1.000000e+00 : f32
    %57 = vector.broadcast %cst_38 : f32 to vector<64x256xf32>
    %58 = vector.broadcast %cst_39 : f32 to vector<64x256xf32>
    %59 = arith.select %56, %57, %58 : vector<64x256xi1>, vector<64x256xf32>
    %60 = math.absf %54 : vector<64x256xf32>
    %cst_40 = arith.constant 0.327591091 : f32
    %61 = vector.broadcast %cst_40 : f32 to vector<64x256xf32>
    %62 = arith.mulf %61, %60 : vector<64x256xf32>
    %cst_41 = arith.constant 1.000000e+00 : f32
    %63 = vector.broadcast %cst_41 : f32 to vector<64x256xf32>
    %64 = arith.addf %63, %62 : vector<64x256xf32>
    %cst_42 = arith.constant 1.000000e+00 : f32
    %65 = vector.broadcast %cst_42 : f32 to vector<64x256xf32>
    %66 = arith.divf %65, %64 : vector<64x256xf32>
    %cst_43 = arith.constant 1.06140542 : f32
    %67 = vector.broadcast %cst_43 : f32 to vector<64x256xf32>
    %68 = arith.mulf %67, %66 : vector<64x256xf32>
    %cst_44 = arith.constant -1.45315206 : f32
    %69 = vector.broadcast %cst_44 : f32 to vector<64x256xf32>
    %70 = arith.addf %68, %69 : vector<64x256xf32>
    %71 = arith.mulf %70, %66 : vector<64x256xf32>
    %cst_45 = arith.constant 1.42141378 : f32
    %72 = vector.broadcast %cst_45 : f32 to vector<64x256xf32>
    %73 = arith.addf %71, %72 : vector<64x256xf32>
    %74 = arith.mulf %73, %66 : vector<64x256xf32>
    %cst_46 = arith.constant -0.284496725 : f32
    %75 = vector.broadcast %cst_46 : f32 to vector<64x256xf32>
    %76 = arith.addf %74, %75 : vector<64x256xf32>
    %77 = arith.mulf %76, %66 : vector<64x256xf32>
    %cst_47 = arith.constant 0.254829586 : f32
    %78 = vector.broadcast %cst_47 : f32 to vector<64x256xf32>
    %79 = arith.addf %77, %78 : vector<64x256xf32>
    %80 = arith.mulf %79, %66 : vector<64x256xf32>
    %cst_48 = arith.constant 0.000000e+00 : f32
    %81 = vector.broadcast %cst_48 : f32 to vector<64x256xf32>
    %82 = arith.subf %81, %60 : vector<64x256xf32>
    %83 = arith.mulf %82, %60 : vector<64x256xf32>
    %84 = math.exp %83 : vector<64x256xf32>
    %85 = arith.mulf %80, %84 : vector<64x256xf32>
    %cst_49 = arith.constant 1.000000e+00 : f32
    %86 = vector.broadcast %cst_49 : f32 to vector<64x256xf32>
    %87 = arith.subf %86, %85 : vector<64x256xf32>
    %88 = arith.mulf %59, %87 : vector<64x256xf32>
    %cst_50 = arith.constant 1.000000e+00 : f32
    %89 = vector.broadcast %cst_50 : f32 to vector<64x256xf32>
    %90 = arith.addf %89, %88 : vector<64x256xf32>
    %91 = arith.mulf %52, %90 : vector<64x256xf32>
    %c0_51 = arith.constant 0 : index
    %c0_52 = arith.constant 0 : index
    %92 = vector.load %arg12[%c0_51, %c0_52] : memref<32x64xf32, #tpu.memory_space<vmem>>, vector<32x64xf32>
    %cst_53 = arith.constant dense<0.000000e+00> : vector<32x256xf32>
    %93 = tpu.matmul %92, %91, %cst_53 {dimension_numbers = #tpu.dot_dimension_numbers<[1], [0], [0], [1], [0, 0, 1, 1], [], []>} : vector<32x64xf32>, vector<64x256xf32>, vector<32x256xf32> -> vector<32x256xf32>
    %c0_54 = arith.constant 0 : index
    %c0_55 = arith.constant 0 : index
    %94 = vector.load %arg13[%c0_54, %c0_55] : memref<32x1xf32, #tpu.memory_space<vmem>>, vector<32x1xf32>
    %95 = vector.broadcast %94 : vector<32x1xf32> to vector<32x256xf32>
    %96 = arith.addf %93, %95 : vector<32x256xf32>
    %97 = arith.addf %96, %32 : vector<32x256xf32>
    %c0_56 = arith.constant 0 : index
    %c0_57 = arith.constant 0 : index
    %c0_58 = arith.constant 0 : index
    %98 = vector.load %arg16[%c0_56, %c0_57, %c0_58] : memref<1x32x256xf32, #tpu.memory_space<vmem>>, vector<1x32x256xf32>
    %99 = vector.shape_cast %98 : vector<1x32x256xf32> to vector<32x256xf32>
    %100 = vector.shape_cast %97 : vector<32x256xf32> to vector<1x32x256xf32>
    tpu.vector_store %arg16[%c0_56, %c0_57, %c0_58], %100 {strides = array<i32>} : memref<1x32x256xf32, #tpu.memory_space<vmem>>, vector<1x32x256xf32>,
    return
  }
  func.func @transform_0(%arg0: i32, %arg1: i32, %arg2: memref<2xi32, #tpu.memory_space<smem>>) -> (i32, i32, i32) {
    %c1_i32 = arith.constant 1 : i32
    %0 = arith.muli %arg0, %c1_i32 : i32
    %1 = arith.addi %0, %arg1 : i32
    %2 = arith.index_cast %1 : i32 to index
    %3 = memref.load %arg2[%2] : memref<2xi32, #tpu.memory_space<smem>>
    %c0_i32 = arith.constant 0 : i32
    %c0_i32_0 = arith.constant 0 : i32
    %c0_i32_1 = arith.constant 0 : i32
    return %3, %c0_i32, %c0_i32_0 : i32, i32, i32
  }
  func.func @transform_1(%arg0: i32, %arg1: i32, %arg2: memref<2xi32, #tpu.memory_space<smem>>) -> (i32, i32, i32) {
    %c0_i32 = arith.constant 0 : i32
    %c0_i32_0 = arith.constant 0 : i32
    return %arg0, %c0_i32, %arg1 : i32, i32, i32
  }
  func.func @transform_2(%arg0: i32, %arg1: i32, %arg2: memref<2xi32, #tpu.memory_space<smem>>) -> (i32, i32) {
    %c0_i32 = arith.constant 0 : i32
    %c0_i32_0 = arith.constant 0 : i32
    %c0_i32_1 = arith.constant 0 : i32
    return %c0_i32, %c0_i32_0 : i32, i32
  }
  func.func @transform_3(%arg0: i32, %arg1: i32, %arg2: memref<2xi32, #tpu.memory_space<smem>>) -> (i32, i32) {
    %c0_i32 = arith.constant 0 : i32
    %c0_i32_0 = arith.constant 0 : i32
    %c0_i32_1 = arith.constant 0 : i32
    return %c0_i32, %c0_i32_0 : i32, i32
  }
  func.func @transform_4(%arg0: i32, %arg1: i32, %arg2: memref<2xi32, #tpu.memory_space<smem>>) -> (i32, i32, i32) {
    %c0_i32 = arith.constant 0 : i32
    %c0_i32_0 = arith.constant 0 : i32
    %c0_i32_1 = arith.constant 0 : i32
    return %arg0, %c0_i32, %c0_i32_0 : i32, i32, i32
  }
  func.func @transform_5(%arg0: i32, %arg1: i32, %arg2: memref<2xi32, #tpu.memory_space<smem>>) -> (i32, i32, i32) {
    %c0_i32 = arith.constant 0 : i32
    %c0_i32_0 = arith.constant 0 : i32
    %c0_i32_1 = arith.constant 0 : i32
    return %arg0, %c0_i32, %c0_i32_0 : i32, i32, i32
  }
  func.func @transform_6(%arg0: i32, %arg1: i32, %arg2: memref<2xi32, #tpu.memory_space<smem>>) -> (i32, i32) {
    %c0_i32 = arith.constant 0 : i32
    %c0_i32_0 = arith.constant 0 : i32
    %c0_i32_1 = arith.constant 0 : i32
    return %c0_i32, %c0_i32_0 : i32, i32
  }
  func.func @transform_7(%arg0: i32, %arg1: i32, %arg2: memref<2xi32, #tpu.memory_space<smem>>) -> (i32, i32) {
    %c0_i32 = arith.constant 0 : i32
    %c0_i32_0 = arith.constant 0 : i32
    %c0_i32_1 = arith.constant 0 : i32
    return %c0_i32, %c0_i32_0 : i32, i32
  }
  func.func @transform_8(%arg0: i32, %arg1: i32, %arg2: memref<2xi32, #tpu.memory_space<smem>>) -> (i32, i32) {
    %c0_i32 = arith.constant 0 : i32
    %c0_i32_0 = arith.constant 0 : i32
    %c0_i32_1 = arith.constant 0 : i32
    return %c0_i32, %c0_i32_0 : i32, i32
  }
  func.func @transform_9(%arg0: i32, %arg1: i32, %arg2: memref<2xi32, #tpu.memory_space<smem>>) -> (i32, i32) {
    %c0_i32 = arith.constant 0 : i32
    %c0_i32_0 = arith.constant 0 : i32
    %c0_i32_1 = arith.constant 0 : i32
    return %c0_i32, %c0_i32_0 : i32, i32
  }
  func.func @transform_10(%arg0: i32, %arg1: i32, %arg2: memref<2xi32, #tpu.memory_space<smem>>) -> (i32, i32) {
    %c0_i32 = arith.constant 0 : i32
    %c0_i32_0 = arith.constant 0 : i32
    %c0_i32_1 = arith.constant 0 : i32
    return %c0_i32, %c0_i32_0 : i32, i32
  }
  func.func @transform_11(%arg0: i32, %arg1: i32, %arg2: memref<2xi32, #tpu.memory_space<smem>>) -> (i32, i32, i32) {
    %c0_i32 = arith.constant 0 : i32
    %c0_i32_0 = arith.constant 0 : i32
    return %arg0, %c0_i32, %arg1 : i32, i32, i32
  }
  func.func @transform_12(%arg0: i32, %arg1: i32, %arg2: memref<2xi32, #tpu.memory_space<smem>>) -> (i32, i32, i32) {
    %c0_i32 = arith.constant 0 : i32
    %c0_i32_0 = arith.constant 0 : i32
    return %arg0, %c0_i32, %arg1 : i32, i32, i32
  }
  func.func @transform_13(%arg0: i32, %arg1: i32, %arg2: memref<2xi32, #tpu.memory_space<smem>>) -> (i32, i32, i32) {
    %c0_i32 = arith.constant 0 : i32
    %c0_i32_0 = arith.constant 0 : i32
    return %arg0, %c0_i32, %arg1 : i32, i32, i32
  }
}

module attributes {stable_mosaic.version = 11 : i64} {
  func.func @_att_block_kernel(%arg0: i32, %arg1: i32, %arg2: memref<2xi32, #tpu.memory_space<smem>>, %arg3: memref<1x8x256xf32, #tpu.memory_space<vmem>>, %arg4: memref<1x32x256xf32, #tpu.memory_space<vmem>>, %arg5: memref<32x32xf32, #tpu.memory_space<vmem>>, %arg6: memref<32x1xf32, #tpu.memory_space<vmem>>, %arg7: memref<1x32x8xf32, #tpu.memory_space<vmem>>, %arg8: memref<1x8x32xf32, #tpu.memory_space<vmem>>, %arg9: memref<32x1xf32, #tpu.memory_space<vmem>>, %arg10: memref<64x32xf32, #tpu.memory_space<vmem>>, %arg11: memref<64x1xf32, #tpu.memory_space<vmem>>, %arg12: memref<32x64xf32, #tpu.memory_space<vmem>>, %arg13: memref<32x1xf32, #tpu.memory_space<vmem>>, %arg14: memref<1x32x256xf32, #tpu.memory_space<vmem>>, %arg15: memref<1x8x256xf32, #tpu.memory_space<vmem>>, %arg16: memref<1x32x256xf32, #tpu.memory_space<vmem>>) attributes {dimension_semantics = [#tpu.dimension_semantics<parallel>, #tpu.dimension_semantics<parallel>], iteration_bounds = array<i64: 2, 1>, scalar_prefetch = 1 : i64, scratch_operands = 0 : i64, tpu.core_type = #tpu.core_type<tc>, window_params = [{transform_indices = @transform_0, window_bounds = array<i64: 1, 8, 256>}, {transform_indices = @transform_1, window_bounds = array<i64: 1, 32, 256>}, {pipeline_mode = #tpu.pipeline_mode<synchronous>, transform_indices = @transform_2, window_bounds = array<i64: 32, 32>}, {pipeline_mode = #tpu.pipeline_mode<synchronous>, transform_indices = @transform_3, window_bounds = array<i64: 32, 1>}, {transform_indices = @transform_4, window_bounds = array<i64: 1, 32, 8>}, {transform_indices = @transform_5, window_bounds = array<i64: 1, 8, 32>}, {pipeline_mode = #tpu.pipeline_mode<synchronous>, transform_indices = @transform_6, window_bounds = array<i64: 32, 1>}, {pipeline_mode = #tpu.pipeline_mode<synchronous>, transform_indices = @transform_7, window_bounds = array<i64: 64, 32>}, {pipeline_mode = #tpu.pipeline_mode<synchronous>, transform_indices = @transform_8, window_bounds = array<i64: 64, 1>}, {pipeline_mode = #tpu.pipeline_mode<synchronous>, transform_indices = @transform_9, window_bounds = array<i64: 32, 64>}, {pipeline_mode = #tpu.pipeline_mode<synchronous>, transform_indices = @transform_10, window_bounds = array<i64: 32, 1>}, {transform_indices = @transform_11, window_bounds = array<i64: 1, 32, 256>}, {transform_indices = @transform_12, window_bounds = array<i64: 1, 8, 256>}, {transform_indices = @transform_13, window_bounds = array<i64: 1, 32, 256>}]} {
    %c0 = arith.constant 0 : index
    %c0_0 = arith.constant 0 : index
    %c0_1 = arith.constant 0 : index
    %0 = vector.load %arg4[%c0, %c0_0, %c0_1] : memref<1x32x256xf32, #tpu.memory_space<vmem>>, vector<1x32x256xf32>
    %1 = vector.shape_cast %0 : vector<1x32x256xf32> to vector<32x256xf32>
    %c0_2 = arith.constant 0 : index
    %c0_3 = arith.constant 0 : index
    %c0_4 = arith.constant 0 : index
    %2 = vector.load %arg7[%c0_2, %c0_3, %c0_4] : memref<1x32x8xf32, #tpu.memory_space<vmem>>, vector<1x32x8xf32>
    %3 = vector.shape_cast %2 : vector<1x32x8xf32> to vector<32x8xf32>
    %c0_5 = arith.constant 0 : index
    %c0_6 = arith.constant 0 : index
    %c0_7 = arith.constant 0 : index
    %4 = vector.load %arg8[%c0_5, %c0_6, %c0_7] : memref<1x8x32xf32, #tpu.memory_space<vmem>>, vector<1x8x32xf32>
    %5 = vector.shape_cast %4 : vector<1x8x32xf32> to vector<8x32xf32>
    %c0_8 = arith.constant 0 : index
    %c0_9 = arith.constant 0 : index
    %6 = vector.load %arg5[%c0_8, %c0_9] : memref<32x32xf32, #tpu.memory_space<vmem>>, vector<32x32xf32>
    %cst = arith.constant dense<0.000000e+00> : vector<32x256xf32>
    %7 = tpu.matmul %6, %1, %cst {dimension_numbers = #tpu.dot_dimension_numbers<[1], [0], [0], [1], [0, 0, 1, 1], [], []>} : vector<32x32xf32>, vector<32x256xf32>, vector<32x256xf32> -> vector<32x256xf32>
    %c0_10 = arith.constant 0 : index
    %c0_11 = arith.constant 0 : index
    %8 = vector.load %arg6[%c0_10, %c0_11] : memref<32x1xf32, #tpu.memory_space<vmem>>, vector<32x1xf32>
    %9 = vector.broadcast %8 : vector<32x1xf32> to vector<32x256xf32>
    %10 = arith.addf %7, %9 : vector<32x256xf32>
    %cst_12 = arith.constant dense<0.000000e+00> : vector<8x256xf32>
    %11 = tpu.matmul %5, %10, %cst_12 {dimension_numbers = #tpu.dot_dimension_numbers<[1], [0], [0], [1], [0, 0, 1, 1], [], []>} : vector<8x32xf32>, vector<32x256xf32>, vector<8x256xf32> -> vector<8x256xf32>
    %c0_13 = arith.constant 0 : index
    %c0_14 = arith.constant 0 : index
    %c0_15 = arith.constant 0 : index
    %12 = vector.load %arg3[%c0_13, %c0_14, %c0_15] : memref<1x8x256xf32, #tpu.memory_space<vmem>>, vector<1x8x256xf32>
    %13 = vector.shape_cast %12 : vector<1x8x256xf32> to vector<8x256xf32>
    %14 = arith.addf %11, %13 : vector<8x256xf32>
    %cst_16 = arith.constant dense<0xFF800000> : vector<256xf32>
    %15 = vector.multi_reduction <maximumf>, %14, %cst_16 [0] : vector<8x256xf32> to vector<256xf32>
    %16 = vector.shape_cast %15 : vector<256xf32> to vector<1x256xf32>
    %17 = vector.broadcast %16 : vector<1x256xf32> to vector<8x256xf32>
    %18 = arith.subf %14, %17 : vector<8x256xf32>
    %19 = math.exp %18 : vector<8x256xf32>
    %cst_17 = arith.constant dense<0.000000e+00> : vector<256xf32>
    %20 = vector.multi_reduction <add>, %19, %cst_17 [0] : vector<8x256xf32> to vector<256xf32>
    %21 = vector.shape_cast %20 : vector<256xf32> to vector<1x256xf32>
    %22 = tpu.reciprocal %21 : vector<1x256xf32> -> vector<1x256xf32>
    %23 = vector.broadcast %22 : vector<1x256xf32> to vector<8x256xf32>
    %24 = arith.mulf %19, %23 : vector<8x256xf32>
    %c0_18 = arith.constant 0 : index
    %c0_19 = arith.constant 0 : index
    %c0_20 = arith.constant 0 : index
    %25 = vector.load %arg15[%c0_18, %c0_19, %c0_20] : memref<1x8x256xf32, #tpu.memory_space<vmem>>, vector<1x8x256xf32>
    %26 = vector.shape_cast %25 : vector<1x8x256xf32> to vector<8x256xf32>
    %27 = vector.shape_cast %24 : vector<8x256xf32> to vector<1x8x256xf32>
    tpu.vector_store %arg15[%c0_18, %c0_19, %c0_20], %27 {strides = array<i32>} : memref<1x8x256xf32, #tpu.memory_space<vmem>>, vector<1x8x256xf32>,
    %cst_21 = arith.constant dense<0.000000e+00> : vector<32x256xf32>
    %28 = tpu.matmul %3, %24, %cst_21 {dimension_numbers = #tpu.dot_dimension_numbers<[1], [0], [0], [1], [0, 0, 1, 1], [], []>} : vector<32x8xf32>, vector<8x256xf32>, vector<32x256xf32> -> vector<32x256xf32>
    %c0_22 = arith.constant 0 : index
    %c0_23 = arith.constant 0 : index
    %c0_24 = arith.constant 0 : index
    %29 = vector.load %arg14[%c0_22, %c0_23, %c0_24] : memref<1x32x256xf32, #tpu.memory_space<vmem>>, vector<1x32x256xf32>
    %30 = vector.shape_cast %29 : vector<1x32x256xf32> to vector<32x256xf32>
    %31 = vector.shape_cast %28 : vector<32x256xf32> to vector<1x32x256xf32>
    tpu.vector_store %arg14[%c0_22, %c0_23, %c0_24], %31 {strides = array<i32>} : memref<1x32x256xf32, #tpu.memory_space<vmem>>, vector<1x32x256xf32>,
    %32 = arith.addf %28, %1 : vector<32x256xf32>
    %cst_25 = arith.constant 1.000000e+00 : f32
    %33 = vector.broadcast %cst_25 : f32 to vector<8x32xf32>
    %34 = arith.mulf %32, %32 : vector<32x256xf32>
    %cst_26 = arith.constant dense<0.000000e+00> : vector<8x256xf32>
    %35 = tpu.matmul %33, %34, %cst_26 {dimension_numbers = #tpu.dot_dimension_numbers<[1], [0], [0], [1], [0, 0, 1, 1], [], []>} : vector<8x32xf32>, vector<32x256xf32>, vector<8x256xf32> -> vector<8x256xf32>
    %36 = vector.extract_strided_slice %35 {offsets = [0, 0], sizes = [1, 256], strides = [1, 1]} : vector<8x256xf32> to vector<1x256xf32>
    %37 = math.sqrt %36 : vector<1x256xf32>
    %cst_27 = arith.constant 9.99999996E-13 : f32
    %38 = vector.broadcast %cst_27 : f32 to vector<1x256xf32>
    %39 = arith.maximumf %37, %38 : vector<1x256xf32>
    %40 = tpu.reciprocal %39 : vector<1x256xf32> -> vector<1x256xf32>
    %41 = vector.broadcast %40 : vector<1x256xf32> to vector<32x256xf32>
    %42 = arith.mulf %32, %41 : vector<32x256xf32>
    %c0_28 = arith.constant 0 : index
    %c0_29 = arith.constant 0 : index
    %43 = vector.load %arg9[%c0_28, %c0_29] : memref<32x1xf32, #tpu.memory_space<vmem>>, vector<32x1xf32>
    %44 = vector.broadcast %43 : vector<32x1xf32> to vector<32x256xf32>
    %45 = arith.mulf %42, %44 : vector<32x256xf32>
    %c0_30 = arith.constant 0 : index
    %c0_31 = arith.constant 0 : index
    %46 = vector.load %arg10[%c0_30, %c0_31] : memref<64x32xf32, #tpu.memory_space<vmem>>, vector<64x32xf32>
    %cst_32 = arith.constant dense<0.000000e+00> : vector<64x256xf32>
    %47 = tpu.matmul %46, %45, %cst_32 {dimension_numbers = #tpu.dot_dimension_numbers<[1], [0], [0], [1], [0, 0, 1, 1], [], []>} : vector<64x32xf32>, vector<32x256xf32>, vector<64x256xf32> -> vector<64x256xf32>
    %c0_33 = arith.constant 0 : index
    %c0_34 = arith.constant 0 : index
    %48 = vector.load %arg11[%c0_33, %c0_34] : memref<64x1xf32, #tpu.memory_space<vmem>>, vector<64x1xf32>
    %49 = vector.broadcast %48 : vector<64x1xf32> to vector<64x256xf32>
    %50 = arith.addf %47, %49 : vector<64x256xf32>
    %cst_35 = arith.constant 5.000000e-01 : f32
    %51 = vector.broadcast %cst_35 : f32 to vector<64x256xf32>
    %52 = arith.mulf %51, %50 : vector<64x256xf32>
    %cst_36 = arith.constant 0.707106769 : f32
    %53 = vector.broadcast %cst_36 : f32 to vector<64x256xf32>
    %54 = arith.mulf %50, %53 : vector<64x256xf32>
    %cst_37 = arith.constant 0.000000e+00 : f32
    %55 = vector.broadcast %cst_37 : f32 to vector<64x256xf32>
    %56 = arith.cmpf olt, %54, %55 : vector<64x256xf32>
    %cst_38 = arith.constant -1.000000e+00 : f32
    %cst_39 = arith.constant 1.000000e+00 : f32
    %57 = vector.broadcast %cst_38 : f32 to vector<64x256xf32>
    %58 = vector.broadcast %cst_39 : f32 to vector<64x256xf32>
    %59 = arith.select %56, %57, %58 : vector<64x256xi1>, vector<64x256xf32>
    %60 = math.absf %54 : vector<64x256xf32>
    %cst_40 = arith.constant 0.327591091 : f32
    %61 = vector.broadcast %cst_40 : f32 to vector<64x256xf32>
    %62 = arith.mulf %61, %60 : vector<64x256xf32>
    %cst_41 = arith.constant 1.000000e+00 : f32
    %63 = vector.broadcast %cst_41 : f32 to vector<64x256xf32>
    %64 = arith.addf %63, %62 : vector<64x256xf32>
    %cst_42 = arith.constant 1.000000e+00 : f32
    %65 = vector.broadcast %cst_42 : f32 to vector<64x256xf32>
    %66 = arith.divf %65, %64 : vector<64x256xf32>
    %cst_43 = arith.constant 1.06140542 : f32
    %67 = vector.broadcast %cst_43 : f32 to vector<64x256xf32>
    %68 = arith.mulf %67, %66 : vector<64x256xf32>
    %cst_44 = arith.constant -1.45315206 : f32
    %69 = vector.broadcast %cst_44 : f32 to vector<64x256xf32>
    %70 = arith.addf %68, %69 : vector<64x256xf32>
    %71 = arith.mulf %70, %66 : vector<64x256xf32>
    %cst_45 = arith.constant 1.42141378 : f32
    %72 = vector.broadcast %cst_45 : f32 to vector<64x256xf32>
    %73 = arith.addf %71, %72 : vector<64x256xf32>
    %74 = arith.mulf %73, %66 : vector<64x256xf32>
    %cst_46 = arith.constant -0.284496725 : f32
    %75 = vector.broadcast %cst_46 : f32 to vector<64x256xf32>
    %76 = arith.addf %74, %75 : vector<64x256xf32>
    %77 = arith.mulf %76, %66 : vector<64x256xf32>
    %cst_47 = arith.constant 0.254829586 : f32
    %78 = vector.broadcast %cst_47 : f32 to vector<64x256xf32>
    %79 = arith.addf %77, %78 : vector<64x256xf32>
    %80 = arith.mulf %79, %66 : vector<64x256xf32>
    %cst_48 = arith.constant 0.000000e+00 : f32
    %81 = vector.broadcast %cst_48 : f32 to vector<64x256xf32>
    %82 = arith.subf %81, %60 : vector<64x256xf32>
    %83 = arith.mulf %82, %60 : vector<64x256xf32>
    %84 = math.exp %83 : vector<64x256xf32>
    %85 = arith.mulf %80, %84 : vector<64x256xf32>
    %cst_49 = arith.constant 1.000000e+00 : f32
    %86 = vector.broadcast %cst_49 : f32 to vector<64x256xf32>
    %87 = arith.subf %86, %85 : vector<64x256xf32>
    %88 = arith.mulf %59, %87 : vector<64x256xf32>
    %cst_50 = arith.constant 1.000000e+00 : f32
    %89 = vector.broadcast %cst_50 : f32 to vector<64x256xf32>
    %90 = arith.addf %89, %88 : vector<64x256xf32>
    %91 = arith.mulf %52, %90 : vector<64x256xf32>
    %c0_51 = arith.constant 0 : index
    %c0_52 = arith.constant 0 : index
    %92 = vector.load %arg12[%c0_51, %c0_52] : memref<32x64xf32, #tpu.memory_space<vmem>>, vector<32x64xf32>
    %cst_53 = arith.constant dense<0.000000e+00> : vector<32x256xf32>
    %93 = tpu.matmul %92, %91, %cst_53 {dimension_numbers = #tpu.dot_dimension_numbers<[1], [0], [0], [1], [0, 0, 1, 1], [], []>} : vector<32x64xf32>, vector<64x256xf32>, vector<32x256xf32> -> vector<32x256xf32>
    %c0_54 = arith.constant 0 : index
    %c0_55 = arith.constant 0 : index
    %94 = vector.load %arg13[%c0_54, %c0_55] : memref<32x1xf32, #tpu.memory_space<vmem>>, vector<32x1xf32>
    %95 = vector.broadcast %94 : vector<32x1xf32> to vector<32x256xf32>
    %96 = arith.addf %93, %95 : vector<32x256xf32>
    %97 = arith.addf %96, %32 : vector<32x256xf32>
    %c0_56 = arith.constant 0 : index
    %c0_57 = arith.constant 0 : index
    %c0_58 = arith.constant 0 : index
    %98 = vector.load %arg16[%c0_56, %c0_57, %c0_58] : memref<1x32x256xf32, #tpu.memory_space<vmem>>, vector<1x32x256xf32>
    %99 = vector.shape_cast %98 : vector<1x32x256xf32> to vector<32x256xf32>
    %100 = vector.shape_cast %97 : vector<32x256xf32> to vector<1x32x256xf32>
    tpu.vector_store %arg16[%c0_56, %c0_57, %c0_58], %100 {strides = array<i32>} : memref<1x32x256xf32, #tpu.memory_space<vmem>>, vector<1x32x256xf32>,
    return
  }
  func.func @transform_0(%arg0: i32, %arg1: i32, %arg2: memref<2xi32, #tpu.memory_space<smem>>) -> (i32, i32, i32) {
    %c1_i32 = arith.constant 1 : i32
    %0 = arith.muli %arg0, %c1_i32 : i32
    %1 = arith.addi %0, %arg1 : i32
    %2 = arith.index_cast %1 : i32 to index
    %3 = memref.load %arg2[%2] : memref<2xi32, #tpu.memory_space<smem>>
    %c0_i32 = arith.constant 0 : i32
    %c0_i32_0 = arith.constant 0 : i32
    %c0_i32_1 = arith.constant 0 : i32
    return %3, %c0_i32, %c0_i32_0 : i32, i32, i32
  }
  func.func @transform_1(%arg0: i32, %arg1: i32, %arg2: memref<2xi32, #tpu.memory_space<smem>>) -> (i32, i32, i32) {
    %c0_i32 = arith.constant 0 : i32
    %c0_i32_0 = arith.constant 0 : i32
    return %arg0, %c0_i32, %arg1 : i32, i32, i32
  }
  func.func @transform_2(%arg0: i32, %arg1: i32, %arg2: memref<2xi32, #tpu.memory_space<smem>>) -> (i32, i32) {
    %c0_i32 = arith.constant 0 : i32
    %c0_i32_0 = arith.constant 0 : i32
    %c0_i32_1 = arith.constant 0 : i32
    return %c0_i32, %c0_i32_0 : i32, i32
  }
  func.func @transform_3(%arg0: i32, %arg1: i32, %arg2: memref<2xi32, #tpu.memory_space<smem>>) -> (i32, i32) {
    %c0_i32 = arith.constant 0 : i32
    %c0_i32_0 = arith.constant 0 : i32
    %c0_i32_1 = arith.constant 0 : i32
    return %c0_i32, %c0_i32_0 : i32, i32
  }
  func.func @transform_4(%arg0: i32, %arg1: i32, %arg2: memref<2xi32, #tpu.memory_space<smem>>) -> (i32, i32, i32) {
    %c0_i32 = arith.constant 0 : i32
    %c0_i32_0 = arith.constant 0 : i32
    %c0_i32_1 = arith.constant 0 : i32
    return %arg0, %c0_i32, %c0_i32_0 : i32, i32, i32
  }
  func.func @transform_5(%arg0: i32, %arg1: i32, %arg2: memref<2xi32, #tpu.memory_space<smem>>) -> (i32, i32, i32) {
    %c0_i32 = arith.constant 0 : i32
    %c0_i32_0 = arith.constant 0 : i32
    %c0_i32_1 = arith.constant 0 : i32
    return %arg0, %c0_i32, %c0_i32_0 : i32, i32, i32
  }
  func.func @transform_6(%arg0: i32, %arg1: i32, %arg2: memref<2xi32, #tpu.memory_space<smem>>) -> (i32, i32) {
    %c0_i32 = arith.constant 0 : i32
    %c0_i32_0 = arith.constant 0 : i32
    %c0_i32_1 = arith.constant 0 : i32
    return %c0_i32, %c0_i32_0 : i32, i32
  }
  func.func @transform_7(%arg0: i32, %arg1: i32, %arg2: memref<2xi32, #tpu.memory_space<smem>>) -> (i32, i32) {
    %c0_i32 = arith.constant 0 : i32
    %c0_i32_0 = arith.constant 0 : i32
    %c0_i32_1 = arith.constant 0 : i32
    return %c0_i32, %c0_i32_0 : i32, i32
  }
  func.func @transform_8(%arg0: i32, %arg1: i32, %arg2: memref<2xi32, #tpu.memory_space<smem>>) -> (i32, i32) {
    %c0_i32 = arith.constant 0 : i32
    %c0_i32_0 = arith.constant 0 : i32
    %c0_i32_1 = arith.constant 0 : i32
    return %c0_i32, %c0_i32_0 : i32, i32
  }
  func.func @transform_9(%arg0: i32, %arg1: i32, %arg2: memref<2xi32, #tpu.memory_space<smem>>) -> (i32, i32) {
    %c0_i32 = arith.constant 0 : i32
    %c0_i32_0 = arith.constant 0 : i32
    %c0_i32_1 = arith.constant 0 : i32
    return %c0_i32, %c0_i32_0 : i32, i32
  }
  func.func @transform_10(%arg0: i32, %arg1: i32, %arg2: memref<2xi32, #tpu.memory_space<smem>>) -> (i32, i32) {
    %c0_i32 = arith.constant 0 : i32
    %c0_i32_0 = arith.constant 0 : i32
    %c0_i32_1 = arith.constant 0 : i32
    return %c0_i32, %c0_i32_0 : i32, i32
  }
  func.func @transform_11(%arg0: i32, %arg1: i32, %arg2: memref<2xi32, #tpu.memory_space<smem>>) -> (i32, i32, i32) {
    %c0_i32 = arith.constant 0 : i32
    %c0_i32_0 = arith.constant 0 : i32
    return %arg0, %c0_i32, %arg1 : i32, i32, i32
  }
  func.func @transform_12(%arg0: i32, %arg1: i32, %arg2: memref<2xi32, #tpu.memory_space<smem>>) -> (i32, i32, i32) {
    %c0_i32 = arith.constant 0 : i32
    %c0_i32_0 = arith.constant 0 : i32
    return %arg0, %c0_i32, %arg1 : i32, i32, i32
  }
  func.func @transform_13(%arg0: i32, %arg1: i32, %arg2: memref<2xi32, #tpu.memory_space<smem>>) -> (i32, i32, i32) {
    %c0_i32 = arith.constant 0 : i32
    %c0_i32_0 = arith.constant 0 : i32
    return %arg0, %c0_i32, %arg1 : i32, i32, i32
  }
}

</mosaic_0001>

<llo_original>
// kernel: _att_block_forward_impl.1
$region0: #{_att_block_forward_impl.1}
  #allocation0 [shape = 'u32[]', space=smem, size = 0x4, offset = 0x4, fixed_abs, tag = 'smem constant byte address 0x4 - core index']
  #allocation1 [shape = 'u32[72,128]{1,0:T(1,128)}', space=vmem, size = 0x9000, scoped, tag = 'internal scratch']
  #allocation2 [shape = 's32[1]{0}', space=sflag, size = 0x4, scoped, tag = 'scoped memory for _att_block_forward_impl.1']
  #allocation3 [shape = 'u8[512]{0}', space=smem, size = 0x200, scoped, tag = 'prefetched SMEM operand 0']
  %s0 = inlined_call_operand.vmem [shape: s32[2], index: 0, kind: input, shape index: {}]
  %s1 = inlined_call_operand.vmem [shape: f32[2,8,256], index: 1, kind: input, shape index: {}]
  %s2 = inlined_call_operand.vmem [shape: f32[2,32,256], index: 2, kind: input, shape index: {}]
  %s3 = inlined_call_operand.vmem [shape: f32[32,32], index: 3, kind: input, shape index: {}]
  %s4 = inlined_call_operand.vmem [shape: f32[32,1], index: 4, kind: input, shape index: {}]
  %s5 = inlined_call_operand.vmem [shape: f32[2,32,8], index: 5, kind: input, shape index: {}]
  %s6 = inlined_call_operand.vmem [shape: f32[2,8,32], index: 6, kind: input, shape index: {}]
  %s7 = inlined_call_operand.vmem [shape: f32[32,1], index: 7, kind: input, shape index: {}]
  %s8 = inlined_call_operand.vmem [shape: f32[64,32], index: 8, kind: input, shape index: {}]
  %s9 = inlined_call_operand.vmem [shape: f32[64,1], index: 9, kind: input, shape index: {}]
  %s10 = inlined_call_operand.vmem [shape: f32[32,64], index: 10, kind: input, shape index: {}]
  %s11 = inlined_call_operand.vmem [shape: f32[32,1], index: 11, kind: input, shape index: {}]
  %s12 = inlined_call_operand.vmem [shape: f32[2,32,256], index: 12, kind: output, shape index: {0}]
  %s13 = inlined_call_operand.vmem [shape: f32[2,8,256], index: 13, kind: output, shape index: {1}]
  %s14 = inlined_call_operand.vmem [shape: f32[2,32,256], index: 14, kind: output, shape index: {2}]
  %15 = xla_tuple %s12, %s13, %s14
  %s16 = sld [smem:[#allocation0]]
  $region93: #{_att_block_forward_impl.1} parent=0
    _
  %s18 = ssub.s32 1, %s16
  %s19 = scalar_select 0, %s18, %s16
  %s21 = sshll.u32 %s0, 4
  %s22 = int_to_ptr.vmem [resolvable:$true] %s21
  %24 = dma.vmem_to_smem %s22, 16, [#allocation3], [#allocation2]
  %26 = dma.done [#allocation2], 16
  %27 = sfence
  loop: start=0, step=1, limit=4
  $region2: #{_att_block_forward_impl.1} parent=0 // loop_pre_header
    _
  $region3: #{_att_block_forward_impl.1} parent=0 // loop_header
    %s29 = sphi 0, %s33
    %p30 = scmp.ge.s32.totalorder %s29, 4
    %s36 = sphi 0, %s48
    %s37 = sphi 0, %s44
    %s38 = sphi 0, %s36
    %s39 = sphi 0, %s37
    %s40 = sphi 0, %s38
    %s41 = sphi 0, %s39
    %s55 = sphi 0, %s57
    %s58 = sphi 0, %s55
    %s59 = sphi 0, %s58
    %s75 = sphi 0, %s59
    %s83 = sphi 0, %s85
    %s86 = sphi 0, %s83
    %s87 = sphi 0, %s86
    %s103 = sphi 0, %s87
    %s107 = sphi 0, %s107
    %s109 = sphi 0, %s107
    %s110 = sphi 0, %s109
    %s124 = sphi 0, %s110
    %s128 = sphi 0, %s128
    %s130 = sphi 0, %s128
    %s131 = sphi 0, %s130
    %s145 = sphi 0, %s131
    %s151 = sphi 0, %s153
    %s154 = sphi 0, %s151
    %s155 = sphi 0, %s154
    %s171 = sphi 0, %s155
    %s177 = sphi 0, %s179
    %s180 = sphi 0, %s177
    %s181 = sphi 0, %s180
    %s197 = sphi 0, %s181
    %s201 = sphi 0, %s201
    %s203 = sphi 0, %s201
    %s204 = sphi 0, %s203
    %s218 = sphi 0, %s204
    %s222 = sphi 0, %s222
    %s224 = sphi 0, %s222
    %s225 = sphi 0, %s224
    %s239 = sphi 0, %s225
    %s243 = sphi 0, %s243
    %s245 = sphi 0, %s243
    %s246 = sphi 0, %s245
    %s260 = sphi 0, %s246
    %s264 = sphi 0, %s264
    %s266 = sphi 0, %s264
    %s267 = sphi 0, %s266
    %s281 = sphi 0, %s267
    %s285 = sphi 0, %s285
    %s287 = sphi 0, %s285
    %s288 = sphi 0, %s287
    %s302 = sphi 0, %s288
    %s310 = sphi 0, %s312
    %s313 = sphi 0, %s310
    %s314 = sphi 0, %s313
    %s330 = sphi 0, %s314
    %s338 = sphi 0, %s340
    %s341 = sphi 0, %s338
    %s342 = sphi 0, %s341
    %s358 = sphi 0, %s342
    %s366 = sphi 0, %s368
    %s369 = sphi 0, %s366
    %s370 = sphi 0, %s369
    %s386 = sphi 0, %s370
  $region4: #{_att_block_forward_impl.1} parent=0 // loop_header_branch
    %32 = sbr.rel (%p30) target = $region8
  $region5: #{_att_block_forward_impl.1} parent=0 // loop_body
    %s34 = ssub.s32 %s29, 1
    %s35 = ssub.s32 %s29, 2
    %s42 = sadd.s32 1, %s37
    %p43 = scmp.ge.s32.totalorder %s42, 1
    %s44 = scalar_select %p43, 0, %s42
    %s45 = sadd.s32 1, %s36
    %s46 = scalar_select %p43, %s45, %s36
    %p47 = scmp.ge.s32.totalorder %s46, 2
    %s48 = scalar_select %p47, 0, %s46
    %s49 = sadd.s32 %s36, %s37
    %s50 = sld [smem:[#allocation3 + %s49]]
    %s51 = sadd.s32 %s48, %s44
    %s52 = sld [smem:[#allocation3 + %s51]]
    %s53 = ssub.s32 %s50, %s52
    %p54 = scmp.eq.s32.totalorder %s53, 0
    %s56 = sadd.s32 %s55, 1
    %s57 = scalar_select %p54, %s55, %s56
    %p60 = pneg %p54
    %p61 = scmp.eq.s32.totalorder %s29, 1
    %p62 = por %p60, %p61
    %p63 = scmp.ne.s32.totalorder %s55, %s58
    %p64 = scmp.eq.s32.totalorder %s29, 0
    %p65 = por %p63, %p64
    %p66 = scmp.ne.s32.totalorder %s55, %s58
    %p67 = scmp.eq.s32.totalorder %s34, 1
    %p68 = por %p66, %p67
    %p69 = scmp.ne.s32.totalorder %s58, %s59
    %p70 = scmp.eq.s32.totalorder %s34, 0
    %p71 = por %p69, %p70
    %p72 = scmp.ne.s32.totalorder %s58, %s59
    %p73 = scmp.eq.s32.totalorder %s35, 1
    %p74 = por %p72, %p73
    %p76 = scmp.ne.s32.totalorder %s59, %s75
    %p77 = scmp.eq.s32.totalorder %s35, 0
    %p78 = por %p76, %p77
    %s79 = ssub.s32 %s36, %s48
    %s80 = ssub.s32 %s37, %s44
    %s81 = sor.u32 %s79, %s80
    %p82 = scmp.eq.s32.totalorder %s81, 0
    %s84 = sadd.s32 %s83, 1
    %s85 = scalar_select %p82, %s83, %s84
    %p88 = pneg %p82
    %p89 = scmp.eq.s32.totalorder %s29, 1
    %p90 = por %p88, %p89
    %p91 = scmp.ne.s32.totalorder %s83, %s86
    %p92 = scmp.eq.s32.totalorder %s29, 0
    %p93 = por %p91, %p92
    %p94 = scmp.ne.s32.totalorder %s83, %s86
    %p95 = scmp.eq.s32.totalorder %s34, 1
    %p96 = por %p94, %p95
    %p97 = scmp.ne.s32.totalorder %s86, %s87
    %p98 = scmp.eq.s32.totalorder %s34, 0
    %p99 = por %p97, %p98
    %p100 = scmp.ne.s32.totalorder %s86, %s87
    %p101 = scmp.eq.s32.totalorder %s35, 1
    %p102 = por %p100, %p101
    %p104 = scmp.ne.s32.totalorder %s87, %s103
    %p105 = scmp.eq.s32.totalorder %s35, 0
    %p106 = por %p104, %p105
    %s108 = sadd.s32 %s107, 1
    %p111 = scmp.eq.s32.totalorder %s29, 1
    %p112 = scmp.ne.s32.totalorder %s107, %s109
    %p113 = scmp.eq.s32.totalorder %s29, 0
    %p114 = por %p112, %p113
    %p115 = scmp.ne.s32.totalorder %s107, %s109
    %p116 = scmp.eq.s32.totalorder %s34, 1
    %p117 = por %p115, %p116
    %p118 = scmp.ne.s32.totalorder %s109, %s110
    %p119 = scmp.eq.s32.totalorder %s34, 0
    %p120 = por %p118, %p119
    %p121 = scmp.ne.s32.totalorder %s109, %s110
    %p122 = scmp.eq.s32.totalorder %s35, 1
    %p123 = por %p121, %p122
    %p125 = scmp.ne.s32.totalorder %s110, %s124
    %p126 = scmp.eq.s32.totalorder %s35, 0
    %p127 = por %p125, %p126
    %s129 = sadd.s32 %s128, 1
    %p132 = scmp.eq.s32.totalorder %s29, 1
    %p133 = scmp.ne.s32.totalorder %s128, %s130
    %p134 = scmp.eq.s32.totalorder %s29, 0
    %p135 = por %p133, %p134
    %p136 = scmp.ne.s32.totalorder %s128, %s130
    %p137 = scmp.eq.s32.totalorder %s34, 1
    %p138 = por %p136, %p137
    %p139 = scmp.ne.s32.totalorder %s130, %s131
    %p140 = scmp.eq.s32.totalorder %s34, 0
    %p141 = por %p139, %p140
    %p142 = scmp.ne.s32.totalorder %s130, %s131
    %p143 = scmp.eq.s32.totalorder %s35, 1
    %p144 = por %p142, %p143
    %p146 = scmp.ne.s32.totalorder %s131, %s145
    %p147 = scmp.eq.s32.totalorder %s35, 0
    %p148 = por %p146, %p147
    %s149 = ssub.s32 %s36, %s48
    %p150 = scmp.eq.s32.totalorder %s149, 0
    %s152 = sadd.s32 %s151, 1
    %s153 = scalar_select %p150, %s151, %s152
    %p156 = pneg %p150
    %p157 = scmp.eq.s32.totalorder %s29, 1
    %p158 = por %p156, %p157
    %p159 = scmp.ne.s32.totalorder %s151, %s154
    %p160 = scmp.eq.s32.totalorder %s29, 0
    %p161 = por %p159, %p160
    %p162 = scmp.ne.s32.totalorder %s151, %s154
    %p163 = scmp.eq.s32.totalorder %s34, 1
    %p164 = por %p162, %p163
    %p165 = scmp.ne.s32.totalorder %s154, %s155
    %p166 = scmp.eq.s32.totalorder %s34, 0
    %p167 = por %p165, %p166
    %p168 = scmp.ne.s32.totalorder %s154, %s155
    %p169 = scmp.eq.s32.totalorder %s35, 1
    %p170 = por %p168, %p169
    %p172 = scmp.ne.s32.totalorder %s155, %s171
    %p173 = scmp.eq.s32.totalorder %s35, 0
    %p174 = por %p172, %p173
    %s175 = ssub.s32 %s36, %s48
    %p176 = scmp.eq.s32.totalorder %s175, 0
    %s178 = sadd.s32 %s177, 1
    %s179 = scalar_select %p176, %s177, %s178
    %p182 = pneg %p176
    %p183 = scmp.eq.s32.totalorder %s29, 1
    %p184 = por %p182, %p183
    %p185 = scmp.ne.s32.totalorder %s177, %s180
    %p186 = scmp.eq.s32.totalorder %s29, 0
    %p187 = por %p185, %p186
    %p188 = scmp.ne.s32.totalorder %s177, %s180
    %p189 = scmp.eq.s32.totalorder %s34, 1
    %p190 = por %p188, %p189
    %p191 = scmp.ne.s32.totalorder %s180, %s181
    %p192 = scmp.eq.s32.totalorder %s34, 0
    %p193 = por %p191, %p192
    %p194 = scmp.ne.s32.totalorder %s180, %s181
    %p195 = scmp.eq.s32.totalorder %s35, 1
    %p196 = por %p194, %p195
    %p198 = scmp.ne.s32.totalorder %s181, %s197
    %p199 = scmp.eq.s32.totalorder %s35, 0
    %p200 = por %p198, %p199
    %s202 = sadd.s32 %s201, 1
    %p205 = scmp.eq.s32.totalorder %s29, 1
    %p206 = scmp.ne.s32.totalorder %s201, %s203
    %p207 = scmp.eq.s32.totalorder %s29, 0
    %p208 = por %p206, %p207
    %p209 = scmp.ne.s32.totalorder %s201, %s203
    %p210 = scmp.eq.s32.totalorder %s34, 1
    %p211 = por %p209, %p210
    %p212 = scmp.ne.s32.totalorder %s203, %s204
    %p213 = scmp.eq.s32.totalorder %s34, 0
    %p214 = por %p212, %p213
    %p215 = scmp.ne.s32.totalorder %s203, %s204
    %p216 = scmp.eq.s32.totalorder %s35, 1
    %p217 = por %p215, %p216
    %p219 = scmp.ne.s32.totalorder %s204, %s218
    %p220 = scmp.eq.s32.totalorder %s35, 0
    %p221 = por %p219, %p220
    %s223 = sadd.s32 %s222, 1
    %p226 = scmp.eq.s32.totalorder %s29, 1
    %p227 = scmp.ne.s32.totalorder %s222, %s224
    %p228 = scmp.eq.s32.totalorder %s29, 0
    %p229 = por %p227, %p228
    %p230 = scmp.ne.s32.totalorder %s222, %s224
    %p231 = scmp.eq.s32.totalorder %s34, 1
    %p232 = por %p230, %p231
    %p233 = scmp.ne.s32.totalorder %s224, %s225
    %p234 = scmp.eq.s32.totalorder %s34, 0
    %p235 = por %p233, %p234
    %p236 = scmp.ne.s32.totalorder %s224, %s225
    %p237 = scmp.eq.s32.totalorder %s35, 1
    %p238 = por %p236, %p237
    %p240 = scmp.ne.s32.totalorder %s225, %s239
    %p241 = scmp.eq.s32.totalorder %s35, 0
    %p242 = por %p240, %p241
    %s244 = sadd.s32 %s243, 1
    %p247 = scmp.eq.s32.totalorder %s29, 1
    %p248 = scmp.ne.s32.totalorder %s243, %s245
    %p249 = scmp.eq.s32.totalorder %s29, 0
    %p250 = por %p248, %p249
    %p251 = scmp.ne.s32.totalorder %s243, %s245
    %p252 = scmp.eq.s32.totalorder %s34, 1
    %p253 = por %p251, %p252
    %p254 = scmp.ne.s32.totalorder %s245, %s246
    %p255 = scmp.eq.s32.totalorder %s34, 0
    %p256 = por %p254, %p255
    %p257 = scmp.ne.s32.totalorder %s245, %s246
    %p258 = scmp.eq.s32.totalorder %s35, 1
    %p259 = por %p257, %p258
    %p261 = scmp.ne.s32.totalorder %s246, %s260
    %p262 = scmp.eq.s32.totalorder %s35, 0
    %p263 = por %p261, %p262
    %s265 = sadd.s32 %s264, 1
    %p268 = scmp.eq.s32.totalorder %s29, 1
    %p269 = scmp.ne.s32.totalorder %s264, %s266
    %p270 = scmp.eq.s32.totalorder %s29, 0
    %p271 = por %p269, %p270
    %p272 = scmp.ne.s32.totalorder %s264, %s266
    %p273 = scmp.eq.s32.totalorder %s34, 1
    %p274 = por %p272, %p273
    %p275 = scmp.ne.s32.totalorder %s266, %s267
    %p276 = scmp.eq.s32.totalorder %s34, 0
    %p277 = por %p275, %p276
    %p278 = scmp.ne.s32.totalorder %s266, %s267
    %p279 = scmp.eq.s32.totalorder %s35, 1
    %p280 = por %p278, %p279
    %p282 = scmp.ne.s32.totalorder %s267, %s281
    %p283 = scmp.eq.s32.totalorder %s35, 0
    %p284 = por %p282, %p283
    %s286 = sadd.s32 %s285, 1
    %p289 = scmp.eq.s32.totalorder %s29, 1
    %p290 = scmp.ne.s32.totalorder %s285, %s287
    %p291 = scmp.eq.s32.totalorder %s29, 0
    %p292 = por %p290, %p291
    %p293 = scmp.ne.s32.totalorder %s285, %s287
    %p294 = scmp.eq.s32.totalorder %s34, 1
    %p295 = por %p293, %p294
    %p296 = scmp.ne.s32.totalorder %s287, %s288
    %p297 = scmp.eq.s32.totalorder %s34, 0
    %p298 = por %p296, %p297
    %p299 = scmp.ne.s32.totalorder %s287, %s288
    %p300 = scmp.eq.s32.totalorder %s35, 1
    %p301 = por %p299, %p300
    %p303 = scmp.ne.s32.totalorder %s288, %s302
    %p304 = scmp.eq.s32.totalorder %s35, 0
    %p305 = por %p303, %p304
    %s306 = ssub.s32 %s36, %s48
    %s307 = ssub.s32 %s37, %s44
    %s308 = sor.u32 %s306, %s307
    %p309 = scmp.eq.s32.totalorder %s308, 0
    %s311 = sadd.s32 %s310, 1
    %s312 = scalar_select %p309, %s310, %s311
    %p315 = pneg %p309
    %p316 = scmp.eq.s32.totalorder %s29, 1
    %p317 = por %p315, %p316
    %p318 = scmp.ne.s32.totalorder %s310, %s313
    %p319 = scmp.eq.s32.totalorder %s29, 0
    %p320 = por %p318, %p319
    %p321 = scmp.ne.s32.totalorder %s310, %s313
    %p322 = scmp.eq.s32.totalorder %s34, 1
    %p323 = por %p321, %p322
    %p324 = scmp.ne.s32.totalorder %s313, %s314
    %p325 = scmp.eq.s32.totalorder %s34, 0
    %p326 = por %p324, %p325
    %p327 = scmp.ne.s32.totalorder %s313, %s314
    %p328 = scmp.eq.s32.totalorder %s35, 1
    %p329 = por %p327, %p328
    %p331 = scmp.ne.s32.totalorder %s314, %s330
    %p332 = scmp.eq.s32.totalorder %s35, 0
    %p333 = por %p331, %p332
    %s334 = ssub.s32 %s36, %s48
    %s335 = ssub.s32 %s37, %s44
    %s336 = sor.u32 %s334, %s335
    %p337 = scmp.eq.s32.totalorder %s336, 0
    %s339 = sadd.s32 %s338, 1
    %s340 = scalar_select %p337, %s338, %s339
    %p343 = pneg %p337
    %p344 = scmp.eq.s32.totalorder %s29, 1
    %p345 = por %p343, %p344
    %p346 = scmp.ne.s32.totalorder %s338, %s341
    %p347 = scmp.eq.s32.totalorder %s29, 0
    %p348 = por %p346, %p347
    %p349 = scmp.ne.s32.totalorder %s338, %s341
    %p350 = scmp.eq.s32.totalorder %s34, 1
    %p351 = por %p349, %p350
    %p352 = scmp.ne.s32.totalorder %s341, %s342
    %p353 = scmp.eq.s32.totalorder %s34, 0
    %p354 = por %p352, %p353
    %p355 = scmp.ne.s32.totalorder %s341, %s342
    %p356 = scmp.eq.s32.totalorder %s35, 1
    %p357 = por %p355, %p356
    %p359 = scmp.ne.s32.totalorder %s342, %s358
    %p360 = scmp.eq.s32.totalorder %s35, 0
    %p361 = por %p359, %p360
    %s362 = ssub.s32 %s36, %s48
    %s363 = ssub.s32 %s37, %s44
    %s364 = sor.u32 %s362, %s363
    %p365 = scmp.eq.s32.totalorder %s364, 0
    %s367 = sadd.s32 %s366, 1
    %s368 = scalar_select %p365, %s366, %s367
    %p371 = pneg %p365
    %p372 = scmp.eq.s32.totalorder %s29, 1
    %p373 = por %p371, %p372
    %p374 = scmp.ne.s32.totalorder %s366, %s369
    %p375 = scmp.eq.s32.totalorder %s29, 0
    %p376 = por %p374, %p375
    %p377 = scmp.ne.s32.totalorder %s366, %s369
    %p378 = scmp.eq.s32.totalorder %s34, 1
    %p379 = por %p377, %p378
    %p380 = scmp.ne.s32.totalorder %s369, %s370
    %p381 = scmp.eq.s32.totalorder %s34, 0
    %p382 = por %p380, %p381
    %p383 = scmp.ne.s32.totalorder %s369, %s370
    %p384 = scmp.eq.s32.totalorder %s35, 1
    %p385 = por %p383, %p384
    %p387 = scmp.ne.s32.totalorder %s370, %s386
    %p388 = scmp.eq.s32.totalorder %s35, 0
    %p389 = por %p387, %p388
    %p390 = scmp.le.s32.totalorder 1, %s29
    %p391 = scmp.lt.s32.totalorder %s29, 3
    %p392 = pnand %p390, %p391
    %p393 = pneg %p392
    // Predicated region
    $region9: #{_att_block_forward_impl.1} parent=5 // pred_check
      _
    $region10: #{_att_block_forward_impl.1} parent=5 // pred_check_branch
      %395 = sbr.rel (%p392) target = $region12
    $region11: #{_att_block_forward_impl.1} parent=5 // pred_region
      %s396 = ssub.s32 %s29, 1
      // Predicated region
      $region13: #{_att_block_forward_impl.1} parent=11 // pred_check
        %p397 = pneg %p120
      $region14: #{_att_block_forward_impl.1} parent=11 // pred_check_branch
        %399 = sbr.rel (%p397) target = $region16
      $region15: #{_att_block_forward_impl.1} parent=11 // pred_region
        _
      $region16: #{_att_block_forward_impl.1} parent=11 // pred_fallthru
        _
      // Predicated region
      $region17: #{_att_block_forward_impl.1} parent=11 // pred_check
        %p400 = pneg %p141
      $region18: #{_att_block_forward_impl.1} parent=11 // pred_check_branch
        %402 = sbr.rel (%p400) target = $region20
      $region19: #{_att_block_forward_impl.1} parent=11 // pred_region
        _
      $region20: #{_att_block_forward_impl.1} parent=11 // pred_fallthru
        _
      // Predicated region
      $region21: #{_att_block_forward_impl.1} parent=11 // pred_check
        %p403 = pneg %p214
      $region22: #{_att_block_forward_impl.1} parent=11 // pred_check_branch
        %405 = sbr.rel (%p403) target = $region24
      $region23: #{_att_block_forward_impl.1} parent=11 // pred_region
        _
      $region24: #{_att_block_forward_impl.1} parent=11 // pred_fallthru
        _
      // Predicated region
      $region25: #{_att_block_forward_impl.1} parent=11 // pred_check
        %p406 = pneg %p235
      $region26: #{_att_block_forward_impl.1} parent=11 // pred_check_branch
        %408 = sbr.rel (%p406) target = $region28
      $region27: #{_att_block_forward_impl.1} parent=11 // pred_region
        _
      $region28: #{_att_block_forward_impl.1} parent=11 // pred_fallthru
        _
      // Predicated region
      $region29: #{_att_block_forward_impl.1} parent=11 // pred_check
        %p409 = pneg %p256
      $region30: #{_att_block_forward_impl.1} parent=11 // pred_check_branch
        %411 = sbr.rel (%p409) target = $region32
      $region31: #{_att_block_forward_impl.1} parent=11 // pred_region
        _
      $region32: #{_att_block_forward_impl.1} parent=11 // pred_fallthru
        _
      // Predicated region
      $region33: #{_att_block_forward_impl.1} parent=11 // pred_check
        %p412 = pneg %p277
      $region34: #{_att_block_forward_impl.1} parent=11 // pred_check_branch
        %414 = sbr.rel (%p412) target = $region36
      $region35: #{_att_block_forward_impl.1} parent=11 // pred_region
        _
      $region36: #{_att_block_forward_impl.1} parent=11 // pred_fallthru
        _
      // Predicated region
      $region37: #{_att_block_forward_impl.1} parent=11 // pred_check
        %p415 = pneg %p298
      $region38: #{_att_block_forward_impl.1} parent=11 // pred_check_branch
        %417 = sbr.rel (%p415) target = $region40
      $region39: #{_att_block_forward_impl.1} parent=11 // pred_region
        _
      $region40: #{_att_block_forward_impl.1} parent=11 // pred_fallthru
        _
    $region12: #{_att_block_forward_impl.1} parent=5 // pred_fallthru
      _
    %p418 = scmp.lt.s32.totalorder %s29, 2
    // Predicated region
    $region41: #{_att_block_forward_impl.1} parent=5 // pred_check
      %p419 = pneg %p418
    $region42: #{_att_block_forward_impl.1} parent=5 // pred_check_branch
      %421 = sbr.rel (%p419) target = $region44
    $region43: #{_att_block_forward_impl.1} parent=5 // pred_region
      // Predicated region
      $region45: #{_att_block_forward_impl.1} parent=43 // pred_check
        %p422 = pneg %p65
      $region46: #{_att_block_forward_impl.1} parent=43 // pred_check_branch
        %424 = sbr.rel (%p422) target = $region48
      $region47: #{_att_block_forward_impl.1} parent=43 // pred_region
        %s425 = sadd.s32 %s36, %s37
        %s426 = sld [smem:[#allocation3 + %s425]]
        %p427 = scmp.lt.s32.totalorder %s426, 1
        %s428 = scalar_select %p427, %s426, 1
        %s429 = smul.addr %s428, 2
        %s430 = smul.addr %s429, 8
        %s431 = scalar_lea.vmem %s1, %s430
        %s432 = sadd.s32 %s36, %s37
        %s433 = sld [smem:[#allocation3 + %s432]]
      $region48: #{_att_block_forward_impl.1} parent=43 // pred_fallthru
        _
      // Predicated region
      $region49: #{_att_block_forward_impl.1} parent=43 // pred_check
        %p434 = pneg %p93
      $region50: #{_att_block_forward_impl.1} parent=43 // pred_check_branch
        %436 = sbr.rel (%p434) target = $region52
      $region51: #{_att_block_forward_impl.1} parent=43 // pred_region
        %s437 = smul.u32 2, %s37
        %p438 = scmp.lt.s32.totalorder %s36, 1
        %s439 = scalar_select %p438, %s36, 1
        %p440 = scmp.lt.s32.totalorder %s437, 1
        %s441 = scalar_select %p440, %s437, 1
        %s442 = smul.addr %s439, 8
        %s443 = sadd.s32 %s441, %s442
        %s444 = smul.addr %s443, 8
        %s445 = scalar_lea.vmem %s2, %s444
        %s446 = smul.u32 2, %s37
      $region52: #{_att_block_forward_impl.1} parent=43 // pred_fallthru
        _
      // Predicated region
      $region53: #{_att_block_forward_impl.1} parent=43 // pred_check
        %p447 = pneg %p161
      $region54: #{_att_block_forward_impl.1} parent=43 // pred_check_branch
        %449 = sbr.rel (%p447) target = $region56
      $region55: #{_att_block_forward_impl.1} parent=43 // pred_region
        %p450 = scmp.lt.s32.totalorder %s36, 1
        %s451 = scalar_select %p450, %s36, 1
        %s452 = smul.addr %s451, 4
        %s453 = smul.addr %s452, 8
        %s454 = scalar_lea.vmem %s5, %s453
      $region56: #{_att_block_forward_impl.1} parent=43 // pred_fallthru
        _
      // Predicated region
      $region57: #{_att_block_forward_impl.1} parent=43 // pred_check
        %p455 = pneg %p187
      $region58: #{_att_block_forward_impl.1} parent=43 // pred_check_branch
        %457 = sbr.rel (%p455) target = $region60
      $region59: #{_att_block_forward_impl.1} parent=43 // pred_region
        %p458 = scmp.lt.s32.totalorder %s36, 1
        %s459 = scalar_select %p458, %s36, 1
        %s460 = smul.addr %s459, 8
        %s461 = scalar_lea.vmem %s6, %s460
      $region60: #{_att_block_forward_impl.1} parent=43 // pred_fallthru
        _
    $region44: #{_att_block_forward_impl.1} parent=5 // pred_fallthru
      _
    %p462 = scmp.le.s32.totalorder 1, %s29
    %p463 = scmp.lt.s32.totalorder %s29, 3
    %p464 = pnand %p462, %p463
    %p465 = pneg %p464
    // Predicated region
    $region61: #{_att_block_forward_impl.1} parent=5 // pred_check
      _
    $region62: #{_att_block_forward_impl.1} parent=5 // pred_check_branch
      %467 = sbr.rel (%p464) target = $region64
    $region63: #{_att_block_forward_impl.1} parent=5 // pred_region
      %s468 = ssub.s32 %s29, 1
      %s469 = sadd.s32 %s38, %s39
      %s470 = sld [smem:[#allocation3 + %s469]]
      %p471 = scmp.lt.s32.totalorder %s470, 1
      %s472 = scalar_select %p471, %s470, 1
      %s473 = smul.addr %s472, 2
      %s474 = smul.addr %s473, 8
      %s475 = scalar_lea.vmem %s1, %s474
      %p476 = pneg %p71
      %p477 = pneg %p68
      %s478 = smul.u32 2, %s39
      %p479 = scmp.lt.s32.totalorder %s38, 1
      %s480 = scalar_select %p479, %s38, 1
      %p481 = scmp.lt.s32.totalorder %s478, 1
      %s482 = scalar_select %p481, %s478, 1
      %s483 = smul.addr %s480, 8
      %s484 = sadd.s32 %s482, %s483
      %s485 = smul.addr %s484, 8
      %s486 = scalar_lea.vmem %s2, %s485
      %p487 = pneg %p99
      %p488 = pneg %p96
      %p489 = pneg %p120
      %p490 = pneg %p117
      %p491 = pneg %p141
      %p492 = pneg %p138
      %p493 = scmp.lt.s32.totalorder %s38, 1
      %s494 = scalar_select %p493, %s38, 1
      %s495 = smul.addr %s494, 4
      %s496 = smul.addr %s495, 8
      %s497 = scalar_lea.vmem %s5, %s496
      %p498 = pneg %p167
      %p499 = pneg %p164
      %p500 = scmp.lt.s32.totalorder %s38, 1
      %s501 = scalar_select %p500, %s38, 1
      %s502 = smul.addr %s501, 8
      %s503 = scalar_lea.vmem %s6, %s502
      %p504 = pneg %p193
      %p505 = pneg %p190
      %p506 = pneg %p214
      %p507 = pneg %p211
      %p508 = pneg %p235
      %p509 = pneg %p232
      %p510 = pneg %p256
      %p511 = pneg %p253
      %p512 = pneg %p277
      %p513 = pneg %p274
      %p514 = pneg %p298
      %p515 = pneg %p295
      %p516 = pneg %p326
      %p517 = pneg %p323
      %s518 = smul.u32 2, %s39
      %p519 = scmp.lt.s32.totalorder %s38, 1
      %s520 = scalar_select %p519, %s38, 1
      %p521 = scmp.lt.s32.totalorder %s518, 1
      %s522 = scalar_select %p521, %s518, 1
      %s523 = smul.addr %s520, 8
      %s524 = sadd.s32 %s522, %s523
      %s525 = smul.addr %s524, 8
      %s526 = scalar_lea.vmem %s12, %s525
      %p527 = pneg %p354
      %p528 = pneg %p351
      %s529 = smul.u32 2, %s39
      %p530 = scmp.lt.s32.totalorder %s38, 1
      %s531 = scalar_select %p530, %s38, 1
      %p532 = scmp.lt.s32.totalorder %s529, 1
      %s533 = scalar_select %p532, %s529, 1
      %s534 = smul.addr %s531, 2
      %s535 = sadd.s32 %s533, %s534
      %s536 = smul.addr %s535, 8
      %s537 = scalar_lea.vmem %s13, %s536
      %p538 = pneg %p382
      %p539 = pneg %p379
      %s540 = smul.u32 2, %s39
      %p541 = scmp.lt.s32.totalorder %s38, 1
      %s542 = scalar_select %p541, %s38, 1
      %p543 = scmp.lt.s32.totalorder %s540, 1
      %s544 = scalar_select %p543, %s540, 1
      %s545 = smul.addr %s542, 8
      %s546 = sadd.s32 %s544, %s545
      %s547 = smul.addr %s546, 8
      %s548 = scalar_lea.vmem %s14, %s547
      %s549 = sadd.s32 %s38, %s39
      %s550 = sld [smem:[#allocation3 + %s549]]
      %p551 = scmp.lt.s32.totalorder %s550, 1
      %s552 = scalar_select %p551, %s550, 1
      %s553 = smul.addr %s552, 2
      %s554 = smul.addr %s553, 8
      %s555 = scalar_lea.vmem %s1, %s554
      %s556 = sadd.s32 %s38, %s39
      %s557 = sld [smem:[#allocation3 + %s556]]
      %s558 = smul.u32 2, %s39
      %p559 = scmp.lt.s32.totalorder %s38, 1
      %s560 = scalar_select %p559, %s38, 1
      %p561 = scmp.lt.s32.totalorder %s558, 1
      %s562 = scalar_select %p561, %s558, 1
      %s563 = smul.addr %s560, 8
      %s564 = sadd.s32 %s562, %s563
      %s565 = smul.addr %s564, 8
      %s566 = scalar_lea.vmem %s2, %s565
      %s567 = smul.u32 2, %s39
      %p568 = scmp.lt.s32.totalorder %s38, 1
      %s569 = scalar_select %p568, %s38, 1
      %s570 = smul.addr %s569, 4
      %s571 = smul.addr %s570, 8
      %s572 = scalar_lea.vmem %s5, %s571
      %p573 = scmp.lt.s32.totalorder %s38, 1
      %s574 = scalar_select %p573, %s38, 1
      %s575 = smul.addr %s574, 8
      %s576 = scalar_lea.vmem %s6, %s575
      %s577 = smul.u32 2, %s39
      %p578 = scmp.lt.s32.totalorder %s38, 1
      %s579 = scalar_select %p578, %s38, 1
      %p580 = scmp.lt.s32.totalorder %s577, 1
      %s581 = scalar_select %p580, %s577, 1
      %s582 = smul.addr %s579, 8
      %s583 = sadd.s32 %s581, %s582
      %s584 = smul.addr %s583, 8
      %s585 = scalar_lea.vmem %s12, %s584
      %s586 = smul.u32 2, %s39
      %s587 = smul.u32 2, %s39
      %p588 = scmp.lt.s32.totalorder %s38, 1
      %s589 = scalar_select %p588, %s38, 1
      %p590 = scmp.lt.s32.totalorder %s587, 1
      %s591 = scalar_select %p590, %s587, 1
      %s592 = smul.addr %s589, 2
      %s593 = sadd.s32 %s591, %s592
      %s594 = smul.addr %s593, 8
      %s595 = scalar_lea.vmem %s13, %s594
      %s596 = smul.u32 2, %s39
      %s597 = smul.u32 2, %s39
      %p598 = scmp.lt.s32.totalorder %s38, 1
      %s599 = scalar_select %p598, %s38, 1
      %p600 = scmp.lt.s32.totalorder %s597, 1
      %s601 = scalar_select %p600, %s597, 1
      %s602 = smul.addr %s599, 8
      %s603 = sadd.s32 %s601, %s602
      %s604 = smul.addr %s603, 8
      %s605 = scalar_lea.vmem %s14, %s604
      %s606 = smul.u32 2, %s39
      %v607 = vld [vmem:[%s566] sm:$0xff]
      %v608 = vld [vmem:[%s566 + $0x8] sm:$0xff]
      %v609 = vld [vmem:[%s566 + $0x10] sm:$0xff]
      %v610 = vld [vmem:[%s566 + $0x18] sm:$0xff]
      %v611 = vld [vmem:[%s566 + $0x20] sm:$0xff]
      %v612 = vld [vmem:[%s566 + $0x28] sm:$0xff]
      %v613 = vld [vmem:[%s566 + $0x30] sm:$0xff]
      %v614 = vld [vmem:[%s566 + $0x38] sm:$0xff]
      %v615 = vld [vmem:[%s572] sm:$0xff]
      %v616 = vld [vmem:[%s572 + $0x8] sm:$0xff]
      %v617 = vld [vmem:[%s572 + $0x10] sm:$0xff]
      %v618 = vld [vmem:[%s572 + $0x18] sm:$0xff]
      %v619 = vld [vmem:[%s576] sm:$0xff]
      %v620 = vld [vmem:[%s3] sm:$0xff]
      %v621 = vld [vmem:[%s3 + $0x8] sm:$0xff]
      %v622 = vld [vmem:[%s3 + $0x10] sm:$0xff]
      %v623 = vld [vmem:[%s3 + $0x18] sm:$0xff]
      %v624 = vld [vmem:[%s4] sm:$0xff]
      %v625 = vld [vmem:[%s4 + $0x8] sm:$0xff]
      %v626 = vld [vmem:[%s4 + $0x10] sm:$0xff]
      %v627 = vld [vmem:[%s4 + $0x18] sm:$0xff]
      %629 = vset.pattern.permute.xlu0 0
      %630 = vperm.xlu0 %629, %v624
      %v631 = vpop.permute.xlu0 %630
      %634 = vset.pattern.permute.xlu0 0
      %635 = vperm.xlu0 %634, %v625
      %v636 = vpop.permute.xlu0 %635
      %639 = vset.pattern.permute.xlu0 0
      %640 = vperm.xlu0 %639, %v626
      %v641 = vpop.permute.xlu0 %640
      %644 = vset.pattern.permute.xlu0 0
      %645 = vperm.xlu0 %644, %v627
      %v646 = vpop.permute.xlu0 %645
      %vm648 = vcmask 261120
      %v650 = vsel %vm648, %v620, 0
      %v653 = vsel %vm648, %v621, 0
      %v656 = vsel %vm648, %v622, 0
      %v659 = vsel %vm648, %v623, 0
      %661 = vmatpush.msra.mxu0 0.0
      %662 = vmatpush.msra.mxu0 0.0
      %663 = vmatpush.msra.mxu0 0.0
      %664 = vmatpush.msra.mxu0 0.0
      %665 = vmatpush.msra.mxu0 0.0
      %666 = vmatpush.msra.mxu0 0.0
      %667 = vmatpush.msra.mxu0 0.0
      %668 = vmatpush.msra.mxu0 0.0
      %669 = vmatpush.msra.mxu0 0.0
      %670 = vmatpush.msra.mxu0 0.0
      %671 = vmatpush.msra.mxu0 0.0
      %672 = vmatpush.msra.mxu0 0.0
      %673 = vmatpush.msra.mxu0 %v613
      %674 = vmatpush.msra.mxu0 %v611
      %675 = vmatpush.msra.mxu0 %v609
      %676 = vmatpush.msra.mxu0 %v607
      %677 = vmatmul.f32.gmra.mxu0 %v650
      %v678 = vpop.f32.mrf.mxu0
      %v679 = vadd.f32 %v631, %v678
      %680 = vmatmul.f32.gmra.mxu0 %v653
      %v681 = vpop.f32.mrf.mxu0
      %v682 = vadd.f32 %v636, %v681
      %683 = vmatmul.f32.gmra.mxu0 %v656
      %v684 = vpop.f32.mrf.mxu0
      %v685 = vadd.f32 %v641, %v684
      %686 = vmatmul.f32.gmra.mxu0 %v659
      %v687 = vpop.f32.mrf.mxu0
      %v688 = vadd.f32 %v646, %v687
      %689 = vdwg.mxu0
      %690 = vmatpush.msra.mxu0 0.0
      %691 = vmatpush.msra.mxu0 0.0
      %692 = vmatpush.msra.mxu0 0.0
      %693 = vmatpush.msra.mxu0 0.0
      %694 = vmatpush.msra.mxu0 0.0
      %695 = vmatpush.msra.mxu0 0.0
      %696 = vmatpush.msra.mxu0 0.0
      %697 = vmatpush.msra.mxu0 0.0
      %698 = vmatpush.msra.mxu0 0.0
      %699 = vmatpush.msra.mxu0 0.0
      %700 = vmatpush.msra.mxu0 0.0
      %701 = vmatpush.msra.mxu0 0.0
      %702 = vmatpush.msra.mxu0 %v614
      %703 = vmatpush.msra.mxu0 %v612
      %704 = vmatpush.msra.mxu0 %v610
      %705 = vmatpush.msra.mxu0 %v608
      %706 = vmatmul.f32.gmra.mxu0 %v650
      %v707 = vpop.f32.mrf.mxu0
      %v708 = vadd.f32 %v631, %v707
      %709 = vmatmul.f32.gmra.mxu0 %v653
      %v710 = vpop.f32.mrf.mxu0
      %v711 = vadd.f32 %v636, %v710
      %712 = vmatmul.f32.gmra.mxu0 %v656
      %v713 = vpop.f32.mrf.mxu0
      %v714 = vadd.f32 %v641, %v713
      %715 = vmatmul.f32.gmra.mxu0 %v659
      %v716 = vpop.f32.mrf.mxu0
      %v717 = vadd.f32 %v646, %v716
      %718 = vdwg.mxu0
      %v719 = vld [vmem:[%s555] sm:$0xff]
      %v720 = vld [vmem:[%s555 + $0x8] sm:$0xff]
      %v722 = vsel %vm648, %v619, 0
      %724 = vmatpush.msra.mxu0 0.0
      %725 = vmatpush.msra.mxu0 0.0
      %726 = vmatpush.msra.mxu0 0.0
      %727 = vmatpush.msra.mxu0 0.0
      %728 = vmatpush.msra.mxu0 0.0
      %729 = vmatpush.msra.mxu0 0.0
      %730 = vmatpush.msra.mxu0 0.0
      %731 = vmatpush.msra.mxu0 0.0
      %732 = vmatpush.msra.mxu0 0.0
      %733 = vmatpush.msra.mxu0 0.0
      %734 = vmatpush.msra.mxu0 0.0
      %735 = vmatpush.msra.mxu0 0.0
      %736 = vmatpush.msra.mxu0 %v688
      %737 = vmatpush.msra.mxu0 %v685
      %738 = vmatpush.msra.mxu0 %v682
      %739 = vmatpush.msra.mxu0 %v679
      %740 = vmatmul.f32.gmra.mxu0 %v722
      %v741 = vpop.f32.mrf.mxu0
      %v742 = vadd.f32 %v719, %v741
      %743 = vdwg.mxu0
      %744 = vmatpush.msra.mxu0 0.0
      %745 = vmatpush.msra.mxu0 0.0
      %746 = vmatpush.msra.mxu0 0.0
      %747 = vmatpush.msra.mxu0 0.0
      %748 = vmatpush.msra.mxu0 0.0
      %749 = vmatpush.msra.mxu0 0.0
      %750 = vmatpush.msra.mxu0 0.0
      %751 = vmatpush.msra.mxu0 0.0
      %752 = vmatpush.msra.mxu0 0.0
      %753 = vmatpush.msra.mxu0 0.0
      %754 = vmatpush.msra.mxu0 0.0
      %755 = vmatpush.msra.mxu0 0.0
      %756 = vmatpush.msra.mxu0 %v717
      %757 = vmatpush.msra.mxu0 %v714
      %758 = vmatpush.msra.mxu0 %v711
      %759 = vmatpush.msra.mxu0 %v708
      %760 = vmatmul.f32.gmra.mxu0 %v722
      %v761 = vpop.f32.mrf.mxu0
      %v762 = vadd.f32 %v720, %v761
      %763 = vdwg.mxu0
      %v764 = vrot.slane %v742, 4
      %v765 = vmax.f32 %v742, %v764
      %v766 = vrot.slane %v765, 2
      %v767 = vmax.f32 %v765, %v766
      %v768 = vrot.slane %v767, 1
      %v769 = vmax.f32 %v767, %v768
      %v770 = vrot.slane %v762, 4
      %v771 = vmax.f32 %v762, %v770
      %v772 = vrot.slane %v771, 2
      %v773 = vmax.f32 %v771, %v772
      %v774 = vrot.slane %v773, 1
      %v775 = vmax.f32 %v773, %v774
      %v776 = vsub.f32 %v742, %v769
      %v777 = vsub.f32 %v762, %v775
      %v778 = vmul.f32 %v776, 1.442695
      %v779 = vpow.pop %v778
      %v780 = vmul.f32 %v777, 1.442695
      %v781 = vpow.pop %v780
      %v782 = vrot.slane %v779, 4
      %v783 = vadd.f32 %v779, %v782
      %v784 = vrot.slane %v783, 2
      %v785 = vadd.f32 %v783, %v784
      %v786 = vrot.slane %v785, 1
      %v787 = vadd.f32 %v785, %v786
      %v788 = vrot.slane %v781, 4
      %v789 = vadd.f32 %v781, %v788
      %v790 = vrot.slane %v789, 2
      %v791 = vadd.f32 %v789, %v790
      %v792 = vrot.slane %v791, 1
      %v793 = vadd.f32 %v791, %v792
      %v794 = vrcp.pop %v787
      %v795 = vmul.f32 %v787, %v794
      %v796 = vsub.f32 1.0, %v795
      %v797 = vmul.f32 %v794, %v796
      %v798 = vadd.f32 %v794, %v797
      %vm799 = vweird.f32 %v787
      %vm800 = vweird.f32 %v794
      %vm801 = vmor %vm799, %vm800
      %v802 = vsel %vm801, %v794, %v798
      %v803 = vand.u32 2147483647, %v787
      %vm804 = vcmp.eq.f32.partialorder %v803, 8.507059e+37
      %v805 = vand.u32 %v787, 2147483648
      %v806 = vor.u32 1.1754944e-38, %v805
      %v807 = vsel %vm804, %v806, %v802
      %v808 = vrcp.pop %v793
      %v809 = vmul.f32 %v793, %v808
      %v810 = vsub.f32 1.0, %v809
      %v811 = vmul.f32 %v808, %v810
      %v812 = vadd.f32 %v808, %v811
      %vm813 = vweird.f32 %v793
      %vm814 = vweird.f32 %v808
      %vm815 = vmor %vm813, %vm814
      %v816 = vsel %vm815, %v808, %v812
      %v817 = vand.u32 2147483647, %v793
      %vm818 = vcmp.eq.f32.partialorder %v817, 8.507059e+37
      %v819 = vand.u32 %v793, 2147483648
      %v820 = vor.u32 1.1754944e-38, %v819
      %v821 = vsel %vm818, %v820, %v816
      %v822 = vmul.f32 %v779, %v807
      %v823 = vmul.f32 %v781, %v821
      %824 = vst [vmem:[%s595] sm:$0xff] %v822
      %825 = vst [vmem:[%s595 + $0x8] sm:$0xff] %v823
      %vm826 = vcmask 64512
      %v828 = vsel %vm826, %v615, 0
      %v831 = vsel %vm826, %v616, 0
      %v834 = vsel %vm826, %v617, 0
      %v837 = vsel %vm826, %v618, 0
      %839 = vmatpush.msra.mxu0 0.0
      %840 = vmatpush.msra.mxu0 0.0
      %841 = vmatpush.msra.mxu0 0.0
      %842 = vmatpush.msra.mxu0 0.0
      %843 = vmatpush.msra.mxu0 0.0
      %844 = vmatpush.msra.mxu0 0.0
      %845 = vmatpush.msra.mxu0 0.0
      %846 = vmatpush.msra.mxu0 0.0
      %847 = vmatpush.msra.mxu0 0.0
      %848 = vmatpush.msra.mxu0 0.0
      %849 = vmatpush.msra.mxu0 0.0
      %850 = vmatpush.msra.mxu0 0.0
      %851 = vmatpush.msra.mxu0 0.0
      %852 = vmatpush.msra.mxu0 0.0
      %853 = vmatpush.msra.mxu0 0.0
      %854 = vmatpush.msra.mxu0 %v822
      %855 = vmatmul.f32.gmra.mxu0 %v828
      %v856 = vpop.f32.mrf.mxu0
      %v857 = vadd.f32 0.0, %v856
      %858 = vmatmul.f32.gmra.mxu0 %v831
      %v859 = vpop.f32.mrf.mxu0
      %v860 = vadd.f32 0.0, %v859
      %861 = vmatmul.f32.gmra.mxu0 %v834
      %v862 = vpop.f32.mrf.mxu0
      %v863 = vadd.f32 0.0, %v862
      %864 = vmatmul.f32.gmra.mxu0 %v837
      %v865 = vpop.f32.mrf.mxu0
      %v866 = vadd.f32 0.0, %v865
      %867 = vdwg.mxu0
      %868 = vmatpush.msra.mxu0 0.0
      %869 = vmatpush.msra.mxu0 0.0
      %870 = vmatpush.msra.mxu0 0.0
      %871 = vmatpush.msra.mxu0 0.0
      %872 = vmatpush.msra.mxu0 0.0
      %873 = vmatpush.msra.mxu0 0.0
      %874 = vmatpush.msra.mxu0 0.0
      %875 = vmatpush.msra.mxu0 0.0
      %876 = vmatpush.msra.mxu0 0.0
      %877 = vmatpush.msra.mxu0 0.0
      %878 = vmatpush.msra.mxu0 0.0
      %879 = vmatpush.msra.mxu0 0.0
      %880 = vmatpush.msra.mxu0 0.0
      %881 = vmatpush.msra.mxu0 0.0
      %882 = vmatpush.msra.mxu0 0.0
      %883 = vmatpush.msra.mxu0 %v823
      %884 = vmatmul.f32.gmra.mxu0 %v828
      %v885 = vpop.f32.mrf.mxu0
      %v886 = vadd.f32 0.0, %v885
      %887 = vmatmul.f32.gmra.mxu0 %v831
      %v888 = vpop.f32.mrf.mxu0
      %v889 = vadd.f32 0.0, %v888
      %890 = vmatmul.f32.gmra.mxu0 %v834
      %v891 = vpop.f32.mrf.mxu0
      %v892 = vadd.f32 0.0, %v891
      %893 = vmatmul.f32.gmra.mxu0 %v837
      %v894 = vpop.f32.mrf.mxu0
      %v895 = vadd.f32 0.0, %v894
      %896 = vdwg.mxu0
      %897 = vst [vmem:[%s585] sm:$0xff] %v857
      %898 = vst [vmem:[%s585 + $0x8] sm:$0xff] %v886
      %899 = vst [vmem:[%s585 + $0x10] sm:$0xff] %v860
      %900 = vst [vmem:[%s585 + $0x18] sm:$0xff] %v889
      %901 = vst [vmem:[%s585 + $0x20] sm:$0xff] %v863
      %902 = vst [vmem:[%s585 + $0x28] sm:$0xff] %v892
      %903 = vst [vmem:[%s585 + $0x30] sm:$0xff] %v866
      %904 = vst [vmem:[%s585 + $0x38] sm:$0xff] %v895
      %v905 = vadd.f32 %v857, %v607
      %v906 = vadd.f32 %v886, %v608
      %v907 = vadd.f32 %v860, %v609
      %v908 = vadd.f32 %v889, %v610
      %v909 = vadd.f32 %v863, %v611
      %v910 = vadd.f32 %v892, %v612
      %v911 = vadd.f32 %v866, %v613
      %v912 = vadd.f32 %v895, %v614
      %v913 = vmul.f32 %v905, %v905
      %v914 = vmul.f32 %v906, %v906
      %v915 = vmul.f32 %v907, %v907
      %v916 = vmul.f32 %v908, %v908
      %v917 = vmul.f32 %v909, %v909
      %v918 = vmul.f32 %v910, %v910
      %v919 = vmul.f32 %v911, %v911
      %v920 = vmul.f32 %v912, %v912
      %v922 = vsel %vm648, 1.0, 0
      %924 = vmatpush.msra.mxu0 0.0
      %925 = vmatpush.msra.mxu0 0.0
      %926 = vmatpush.msra.mxu0 0.0
      %927 = vmatpush.msra.mxu0 0.0
      %928 = vmatpush.msra.mxu0 0.0
      %929 = vmatpush.msra.mxu0 0.0
      %930 = vmatpush.msra.mxu0 0.0
      %931 = vmatpush.msra.mxu0 0.0
      %932 = vmatpush.msra.mxu0 0.0
      %933 = vmatpush.msra.mxu0 0.0
      %934 = vmatpush.msra.mxu0 0.0
      %935 = vmatpush.msra.mxu0 0.0
      %936 = vmatpush.msra.mxu0 %v919
      %937 = vmatpush.msra.mxu0 %v917
      %938 = vmatpush.msra.mxu0 %v915
      %939 = vmatpush.msra.mxu0 %v913
      %940 = vmatmul.f32.gmra.mxu0 %v922
      %v941 = vpop.f32.mrf.mxu0
      %v942 = vadd.f32 0.0, %v941
      %943 = vdwg.mxu0
      %944 = vmatpush.msra.mxu0 0.0
      %945 = vmatpush.msra.mxu0 0.0
      %946 = vmatpush.msra.mxu0 0.0
      %947 = vmatpush.msra.mxu0 0.0
      %948 = vmatpush.msra.mxu0 0.0
      %949 = vmatpush.msra.mxu0 0.0
      %950 = vmatpush.msra.mxu0 0.0
      %951 = vmatpush.msra.mxu0 0.0
      %952 = vmatpush.msra.mxu0 0.0
      %953 = vmatpush.msra.mxu0 0.0
      %954 = vmatpush.msra.mxu0 0.0
      %955 = vmatpush.msra.mxu0 0.0
      %956 = vmatpush.msra.mxu0 %v920
      %957 = vmatpush.msra.mxu0 %v918
      %958 = vmatpush.msra.mxu0 %v916
      %959 = vmatpush.msra.mxu0 %v914
      %960 = vmatmul.f32.gmra.mxu0 %v922
      %v961 = vpop.f32.mrf.mxu0
      %v962 = vadd.f32 0.0, %v961
      %963 = vdwg.mxu0
      %v964 = vrsqrt.pop %v942
      %v965 = vmul.f32 %v964, %v942
      %v966 = vmul.f32 %v965, %v964
      %v967 = vmul.f32 0.5, %v966
      %v968 = vsub.f32 1.5, %v967
      %v969 = vmul.f32 %v964, %v968
      %v970 = vmul.f32 %v942, %v969
      %vm971 = vcmp.eq.f32.partialorder %v942, inf
      %v972 = vsel %vm971, %v942, %v970
      %vm973 = vcmp.eq.f32.partialorder %v942, 0.0
      %v974 = vand.u32 %v942, 2147483648
      %v975 = vsel %vm973, %v974, %v972
      %v976 = vrsqrt.pop %v962
      %v977 = vmul.f32 %v976, %v962
      %v978 = vmul.f32 %v977, %v976
      %v979 = vmul.f32 0.5, %v978
      %v980 = vsub.f32 1.5, %v979
      %v981 = vmul.f32 %v976, %v980
      %v982 = vmul.f32 %v962, %v981
      %vm983 = vcmp.eq.f32.partialorder %v962, inf
      %v984 = vsel %vm983, %v962, %v982
      %vm985 = vcmp.eq.f32.partialorder %v962, 0.0
      %v986 = vand.u32 %v962, 2147483648
      %v987 = vsel %vm985, %v986, %v984
      %v988 = vmax.f32 %v975, 1e-12
      %v989 = vmax.f32 %v987, 1e-12
      %v990 = vrcp.pop %v988
      %v991 = vmul.f32 %v988, %v990
      %v992 = vsub.f32 1.0, %v991
      %v993 = vmul.f32 %v990, %v992
      %v994 = vadd.f32 %v990, %v993
      %vm995 = vweird.f32 %v988
      %vm996 = vweird.f32 %v990
      %vm997 = vmor %vm995, %vm996
      %v998 = vsel %vm997, %v990, %v994
      %v999 = vand.u32 2147483647, %v988
      %vm1000 = vcmp.eq.f32.partialorder %v999, 8.507059e+37
      %v1001 = vand.u32 %v988, 2147483648
      %v1002 = vor.u32 1.1754944e-38, %v1001
      %v1003 = vsel %vm1000, %v1002, %v998
      %v1004 = vrcp.pop %v989
      %v1005 = vmul.f32 %v989, %v1004
      %v1006 = vsub.f32 1.0, %v1005
      %v1007 = vmul.f32 %v1004, %v1006
      %v1008 = vadd.f32 %v1004, %v1007
      %vm1009 = vweird.f32 %v989
      %vm1010 = vweird.f32 %v1004
      %vm1011 = vmor %vm1009, %vm1010
      %v1012 = vsel %vm1011, %v1004, %v1008
      %v1013 = vand.u32 2147483647, %v989
      %vm1014 = vcmp.eq.f32.partialorder %v1013, 8.507059e+37
      %v1015 = vand.u32 %v989, 2147483648
      %v1016 = vor.u32 1.1754944e-38, %v1015
      %v1017 = vsel %vm1014, %v1016, %v1012
      %v1018 = vperm.slane %v1003, 0
      %v1019 = vperm.slane %v1017, 0
      %v1020 = vmul.f32 %v905, %v1018
      %v1021 = vmul.f32 %v906, %v1019
      %v1022 = vmul.f32 %v907, %v1018
      %v1023 = vmul.f32 %v908, %v1019
      %v1024 = vmul.f32 %v909, %v1018
      %v1025 = vmul.f32 %v910, %v1019
      %v1026 = vmul.f32 %v911, %v1018
      %v1027 = vmul.f32 %v912, %v1019
      %v1028 = vld [vmem:[%s7] sm:$0xff]
      %v1029 = vld [vmem:[%s7 + $0x8] sm:$0xff]
      %v1030 = vld [vmem:[%s7 + $0x10] sm:$0xff]
      %v1031 = vld [vmem:[%s7 + $0x18] sm:$0xff]
      %1033 = vset.pattern.permute.xlu0 0
      %1034 = vperm.xlu0 %1033, %v1028
      %v1035 = vpop.permute.xlu0 %1034
      %1038 = vset.pattern.permute.xlu0 0
      %1039 = vperm.xlu0 %1038, %v1029
      %v1040 = vpop.permute.xlu0 %1039
      %1043 = vset.pattern.permute.xlu0 0
      %1044 = vperm.xlu0 %1043, %v1030
      %v1045 = vpop.permute.xlu0 %1044
      %1048 = vset.pattern.permute.xlu0 0
      %1049 = vperm.xlu0 %1048, %v1031
      %v1050 = vpop.permute.xlu0 %1049
      %v1052 = vmul.f32 %v1020, %v1035
      %v1053 = vmul.f32 %v1021, %v1035
      %v1054 = vmul.f32 %v1022, %v1040
      %v1055 = vmul.f32 %v1023, %v1040
      %v1056 = vmul.f32 %v1024, %v1045
      %v1057 = vmul.f32 %v1025, %v1045
      %v1058 = vmul.f32 %v1026, %v1050
      %v1059 = vmul.f32 %v1027, %v1050
      %v1060 = vld [vmem:[%s8] sm:$0xff]
      %v1061 = vld [vmem:[%s8 + $0x8] sm:$0xff]
      %v1062 = vld [vmem:[%s8 + $0x10] sm:$0xff]
      %v1063 = vld [vmem:[%s8 + $0x18] sm:$0xff]
      %v1064 = vld [vmem:[%s8 + $0x20] sm:$0xff]
      %v1065 = vld [vmem:[%s8 + $0x28] sm:$0xff]
      %v1066 = vld [vmem:[%s8 + $0x30] sm:$0xff]
      %v1067 = vld [vmem:[%s8 + $0x38] sm:$0xff]
      %v1068 = vld [vmem:[%s9] sm:$0xff]
      %v1069 = vld [vmem:[%s9 + $0x8] sm:$0xff]
      %v1070 = vld [vmem:[%s9 + $0x10] sm:$0xff]
      %v1071 = vld [vmem:[%s9 + $0x18] sm:$0xff]
      %v1072 = vld [vmem:[%s9 + $0x20] sm:$0xff]
      %v1073 = vld [vmem:[%s9 + $0x28] sm:$0xff]
      %v1074 = vld [vmem:[%s9 + $0x30] sm:$0xff]
      %v1075 = vld [vmem:[%s9 + $0x38] sm:$0xff]
      %1077 = vset.pattern.permute.xlu0 0
      %1078 = vperm.xlu0 %1077, %v1068
      %v1079 = vpop.permute.xlu0 %1078
      %1082 = vset.pattern.permute.xlu0 0
      %1083 = vperm.xlu0 %1082, %v1069
      %v1084 = vpop.permute.xlu0 %1083
      %1087 = vset.pattern.permute.xlu0 0
      %1088 = vperm.xlu0 %1087, %v1070
      %v1089 = vpop.permute.xlu0 %1088
      %1092 = vset.pattern.permute.xlu0 0
      %1093 = vperm.xlu0 %1092, %v1071
      %v1094 = vpop.permute.xlu0 %1093
      %1097 = vset.pattern.permute.xlu0 0
      %1098 = vperm.xlu0 %1097, %v1072
      %v1099 = vpop.permute.xlu0 %1098
      %1102 = vset.pattern.permute.xlu0 0
      %1103 = vperm.xlu0 %1102, %v1073
      %v1104 = vpop.permute.xlu0 %1103
      %1107 = vset.pattern.permute.xlu0 0
      %1108 = vperm.xlu0 %1107, %v1074
      %v1109 = vpop.permute.xlu0 %1108
      %1112 = vset.pattern.permute.xlu0 0
      %1113 = vperm.xlu0 %1112, %v1075
      %v1114 = vpop.permute.xlu0 %1113
      %v1117 = vsel %vm648, %v1060, 0
      %v1120 = vsel %vm648, %v1061, 0
      %v1123 = vsel %vm648, %v1062, 0
      %v1126 = vsel %vm648, %v1063, 0
      %v1129 = vsel %vm648, %v1064, 0
      %v1132 = vsel %vm648, %v1065, 0
      %v1135 = vsel %vm648, %v1066, 0
      %v1138 = vsel %vm648, %v1067, 0
      %1140 = vmatpush.msra.mxu0 0.0
      %1141 = vmatpush.msra.mxu0 0.0
      %1142 = vmatpush.msra.mxu0 0.0
      %1143 = vmatpush.msra.mxu0 0.0
      %1144 = vmatpush.msra.mxu0 0.0
      %1145 = vmatpush.msra.mxu0 0.0
      %1146 = vmatpush.msra.mxu0 0.0
      %1147 = vmatpush.msra.mxu0 0.0
      %1148 = vmatpush.msra.mxu0 0.0
      %1149 = vmatpush.msra.mxu0 0.0
      %1150 = vmatpush.msra.mxu0 0.0
      %1151 = vmatpush.msra.mxu0 0.0
      %1152 = vmatpush.msra.mxu0 %v1058
      %1153 = vmatpush.msra.mxu0 %v1056
      %1154 = vmatpush.msra.mxu0 %v1054
      %1155 = vmatpush.msra.mxu0 %v1052
      %1156 = vmatmul.f32.gmra.mxu0 %v1117
      %v1157 = vpop.f32.mrf.mxu0
      %v1158 = vadd.f32 %v1079, %v1157
      %1159 = vmatmul.f32.gmra.mxu0 %v1120
      %v1160 = vpop.f32.mrf.mxu0
      %v1161 = vadd.f32 %v1084, %v1160
      %1162 = vmatmul.f32.gmra.mxu0 %v1123
      %v1163 = vpop.f32.mrf.mxu0
      %v1164 = vadd.f32 %v1089, %v1163
      %1165 = vmatmul.f32.gmra.mxu0 %v1126
      %v1166 = vpop.f32.mrf.mxu0
      %v1167 = vadd.f32 %v1094, %v1166
      %1168 = vmatmul.f32.gmra.mxu0 %v1129
      %v1169 = vpop.f32.mrf.mxu0
      %v1170 = vadd.f32 %v1099, %v1169
      %1171 = vmatmul.f32.gmra.mxu0 %v1132
      %v1172 = vpop.f32.mrf.mxu0
      %v1173 = vadd.f32 %v1104, %v1172
      %1174 = vmatmul.f32.gmra.mxu0 %v1135
      %v1175 = vpop.f32.mrf.mxu0
      %v1176 = vadd.f32 %v1109, %v1175
      %1177 = vmatmul.f32.gmra.mxu0 %v1138
      %v1178 = vpop.f32.mrf.mxu0
      %v1179 = vadd.f32 %v1114, %v1178
      %1180 = vdwg.mxu0
      %1181 = vmatpush.msra.mxu0 0.0
      %1182 = vmatpush.msra.mxu0 0.0
      %1183 = vmatpush.msra.mxu0 0.0
      %1184 = vmatpush.msra.mxu0 0.0
      %1185 = vmatpush.msra.mxu0 0.0
      %1186 = vmatpush.msra.mxu0 0.0
      %1187 = vmatpush.msra.mxu0 0.0
      %1188 = vmatpush.msra.mxu0 0.0
      %1189 = vmatpush.msra.mxu0 0.0
      %1190 = vmatpush.msra.mxu0 0.0
      %1191 = vmatpush.msra.mxu0 0.0
      %1192 = vmatpush.msra.mxu0 0.0
      %1193 = vmatpush.msra.mxu0 %v1059
      %1194 = vmatpush.msra.mxu0 %v1057
      %1195 = vmatpush.msra.mxu0 %v1055
      %1196 = vmatpush.msra.mxu0 %v1053
      %1197 = vmatmul.f32.gmra.mxu0 %v1117
      %v1198 = vpop.f32.mrf.mxu0
      %v1199 = vadd.f32 %v1079, %v1198
      %1200 = vmatmul.f32.gmra.mxu0 %v1120
      %v1201 = vpop.f32.mrf.mxu0
      %v1202 = vadd.f32 %v1084, %v1201
      %1203 = vmatmul.f32.gmra.mxu0 %v1123
      %v1204 = vpop.f32.mrf.mxu0
      %v1205 = vadd.f32 %v1089, %v1204
      %1206 = vmatmul.f32.gmra.mxu0 %v1126
      %v1207 = vpop.f32.mrf.mxu0
      %v1208 = vadd.f32 %v1094, %v1207
      %1209 = vmatmul.f32.gmra.mxu0 %v1129
      %v1210 = vpop.f32.mrf.mxu0
      %v1211 = vadd.f32 %v1099, %v1210
      %1212 = vmatmul.f32.gmra.mxu0 %v1132
      %v1213 = vpop.f32.mrf.mxu0
      %v1214 = vadd.f32 %v1104, %v1213
      %1215 = vmatmul.f32.gmra.mxu0 %v1135
      %v1216 = vpop.f32.mrf.mxu0
      %v1217 = vadd.f32 %v1109, %v1216
      %1218 = vmatmul.f32.gmra.mxu0 %v1138
      %v1219 = vpop.f32.mrf.mxu0
      %v1220 = vadd.f32 %v1114, %v1219
      %1221 = vdwg.mxu0
      %v1222 = vmul.f32 %v1158, 0.5
      %v1223 = vmul.f32 %v1199, 0.5
      %v1224 = vmul.f32 %v1161, 0.5
      %v1225 = vmul.f32 %v1202, 0.5
      %v1226 = vmul.f32 %v1164, 0.5
      %v1227 = vmul.f32 %v1205, 0.5
      %v1228 = vmul.f32 %v1167, 0.5
      %v1229 = vmul.f32 %v1208, 0.5
      %v1230 = vmul.f32 %v1170, 0.5
      %v1231 = vmul.f32 %v1211, 0.5
      %v1232 = vmul.f32 %v1173, 0.5
      %v1233 = vmul.f32 %v1214, 0.5
      %v1234 = vmul.f32 %v1176, 0.5
      %v1235 = vmul.f32 %v1217, 0.5
      %v1236 = vmul.f32 %v1179, 0.5
      %v1237 = vmul.f32 %v1220, 0.5
      %v1238 = vmul.f32 %v1158, 0.70710677
      %v1239 = vmul.f32 %v1199, 0.70710677
      %v1240 = vmul.f32 %v1161, 0.70710677
      %v1241 = vmul.f32 %v1202, 0.70710677
      %v1242 = vmul.f32 %v1164, 0.70710677
      %v1243 = vmul.f32 %v1205, 0.70710677
      %v1244 = vmul.f32 %v1167, 0.70710677
      %v1245 = vmul.f32 %v1208, 0.70710677
      %v1246 = vmul.f32 %v1170, 0.70710677
      %v1247 = vmul.f32 %v1211, 0.70710677
      %v1248 = vmul.f32 %v1173, 0.70710677
      %v1249 = vmul.f32 %v1214, 0.70710677
      %v1250 = vmul.f32 %v1176, 0.70710677
      %v1251 = vmul.f32 %v1217, 0.70710677
      %v1252 = vmul.f32 %v1179, 0.70710677
      %v1253 = vmul.f32 %v1220, 0.70710677
      %vm1254 = vcmp.lt.f32.partialorder %v1238, 0.0
      %vm1255 = vcmp.lt.f32.partialorder %v1239, 0.0
      %vm1256 = vcmp.lt.f32.partialorder %v1240, 0.0
      %vm1257 = vcmp.lt.f32.partialorder %v1241, 0.0
      %vm1258 = vcmp.lt.f32.partialorder %v1242, 0.0
      %vm1259 = vcmp.lt.f32.partialorder %v1243, 0.0
      %vm1260 = vcmp.lt.f32.partialorder %v1244, 0.0
      %vm1261 = vcmp.lt.f32.partialorder %v1245, 0.0
      %vm1262 = vcmp.lt.f32.partialorder %v1246, 0.0
      %vm1263 = vcmp.lt.f32.partialorder %v1247, 0.0
      %vm1264 = vcmp.lt.f32.partialorder %v1248, 0.0
      %vm1265 = vcmp.lt.f32.partialorder %v1249, 0.0
      %vm1266 = vcmp.lt.f32.partialorder %v1250, 0.0
      %vm1267 = vcmp.lt.f32.partialorder %v1251, 0.0
      %vm1268 = vcmp.lt.f32.partialorder %v1252, 0.0
      %vm1269 = vcmp.lt.f32.partialorder %v1253, 0.0
      %v1270 = vsel %vm1254, -1.0, 1.0
      %v1271 = vsel %vm1255, -1.0, 1.0
      %v1272 = vsel %vm1256, -1.0, 1.0
      %v1273 = vsel %vm1257, -1.0, 1.0
      %v1274 = vsel %vm1258, -1.0, 1.0
      %v1275 = vsel %vm1259, -1.0, 1.0
      %v1276 = vsel %vm1260, -1.0, 1.0
      %v1277 = vsel %vm1261, -1.0, 1.0
      %v1278 = vsel %vm1262, -1.0, 1.0
      %v1279 = vsel %vm1263, -1.0, 1.0
      %v1280 = vsel %vm1264, -1.0, 1.0
      %v1281 = vsel %vm1265, -1.0, 1.0
      %v1282 = vsel %vm1266, -1.0, 1.0
      %v1283 = vsel %vm1267, -1.0, 1.0
      %v1284 = vsel %vm1268, -1.0, 1.0
      %v1285 = vsel %vm1269, -1.0, 1.0
      %v1286 = vand.u32 2147483647, %v1238
      %v1287 = vand.u32 2147483647, %v1239
      %v1288 = vand.u32 2147483647, %v1240
      %v1289 = vand.u32 2147483647, %v1241
      %v1290 = vand.u32 2147483647, %v1242
      %v1291 = vand.u32 2147483647, %v1243
      %v1292 = vand.u32 2147483647, %v1244
      %v1293 = vand.u32 2147483647, %v1245
      %v1294 = vand.u32 2147483647, %v1246
      %v1295 = vand.u32 2147483647, %v1247
      %v1296 = vand.u32 2147483647, %v1248
      %v1297 = vand.u32 2147483647, %v1249
      %v1298 = vand.u32 2147483647, %v1250
      %v1299 = vand.u32 2147483647, %v1251
      %v1300 = vand.u32 2147483647, %v1252
      %v1301 = vand.u32 2147483647, %v1253
      %v1302 = vmul.f32 %v1286, 0.3275911
      %v1303 = vmul.f32 %v1287, 0.3275911
      %v1304 = vmul.f32 %v1288, 0.3275911
      %v1305 = vmul.f32 %v1289, 0.3275911
      %v1306 = vmul.f32 %v1290, 0.3275911
      %v1307 = vmul.f32 %v1291, 0.3275911
      %v1308 = vmul.f32 %v1292, 0.3275911
      %v1309 = vmul.f32 %v1293, 0.3275911
      %v1310 = vmul.f32 %v1294, 0.3275911
      %v1311 = vmul.f32 %v1295, 0.3275911
      %v1312 = vmul.f32 %v1296, 0.3275911
      %v1313 = vmul.f32 %v1297, 0.3275911
      %v1314 = vmul.f32 %v1298, 0.3275911
      %v1315 = vmul.f32 %v1299, 0.3275911
      %v1316 = vmul.f32 %v1300, 0.3275911
      %v1317 = vmul.f32 %v1301, 0.3275911
      %v1318 = vadd.f32 %v1302, 1.0
      %v1319 = vadd.f32 %v1303, 1.0
      %v1320 = vadd.f32 %v1304, 1.0
      %v1321 = vadd.f32 %v1305, 1.0
      %v1322 = vadd.f32 %v1306, 1.0
      %v1323 = vadd.f32 %v1307, 1.0
      %v1324 = vadd.f32 %v1308, 1.0
      %v1325 = vadd.f32 %v1309, 1.0
      %v1326 = vadd.f32 %v1310, 1.0
      %v1327 = vadd.f32 %v1311, 1.0
      %v1328 = vadd.f32 %v1312, 1.0
      %v1329 = vadd.f32 %v1313, 1.0
      %v1330 = vadd.f32 %v1314, 1.0
      %v1331 = vadd.f32 %v1315, 1.0
      %v1332 = vadd.f32 %v1316, 1.0
      %v1333 = vadd.f32 %v1317, 1.0
      %v1334 = vrcp.pop %v1318
      %v1335 = vmul.f32 %v1318, %v1334
      %v1336 = vsub.f32 1.0, %v1335
      %v1337 = vmul.f32 %v1334, %v1336
      %v1338 = vadd.f32 %v1334, %v1337
      %vm1339 = vweird.f32 %v1318
      %vm1340 = vweird.f32 %v1334
      %vm1341 = vmor %vm1339, %vm1340
      %v1342 = vsel %vm1341, %v1334, %v1338
      %v1343 = vand.u32 2147483647, %v1318
      %vm1344 = vcmp.eq.f32.partialorder %v1343, 8.507059e+37
      %v1345 = vand.u32 %v1318, 2147483648
      %v1346 = vor.u32 1.1754944e-38, %v1345
      %v1347 = vsel %vm1344, %v1346, %v1342
      %v1348 = vmul.f32 1.0, %v1347
      %v1349 = vrcp.pop %v1319
      %v1350 = vmul.f32 %v1319, %v1349
      %v1351 = vsub.f32 1.0, %v1350
      %v1352 = vmul.f32 %v1349, %v1351
      %v1353 = vadd.f32 %v1349, %v1352
      %vm1354 = vweird.f32 %v1319
      %vm1355 = vweird.f32 %v1349
      %vm1356 = vmor %vm1354, %vm1355
      %v1357 = vsel %vm1356, %v1349, %v1353
      %v1358 = vand.u32 2147483647, %v1319
      %vm1359 = vcmp.eq.f32.partialorder %v1358, 8.507059e+37
      %v1360 = vand.u32 %v1319, 2147483648
      %v1361 = vor.u32 1.1754944e-38, %v1360
      %v1362 = vsel %vm1359, %v1361, %v1357
      %v1363 = vmul.f32 1.0, %v1362
      %v1364 = vrcp.pop %v1320
      %v1365 = vmul.f32 %v1320, %v1364
      %v1366 = vsub.f32 1.0, %v1365
      %v1367 = vmul.f32 %v1364, %v1366
      %v1368 = vadd.f32 %v1364, %v1367
      %vm1369 = vweird.f32 %v1320
      %vm1370 = vweird.f32 %v1364
      %vm1371 = vmor %vm1369, %vm1370
      %v1372 = vsel %vm1371, %v1364, %v1368
      %v1373 = vand.u32 2147483647, %v1320
      %vm1374 = vcmp.eq.f32.partialorder %v1373, 8.507059e+37
      %v1375 = vand.u32 %v1320, 2147483648
      %v1376 = vor.u32 1.1754944e-38, %v1375
      %v1377 = vsel %vm1374, %v1376, %v1372
      %v1378 = vmul.f32 1.0, %v1377
      %v1379 = vrcp.pop %v1321
      %v1380 = vmul.f32 %v1321, %v1379
      %v1381 = vsub.f32 1.0, %v1380
      %v1382 = vmul.f32 %v1379, %v1381
      %v1383 = vadd.f32 %v1379, %v1382
      %vm1384 = vweird.f32 %v1321
      %vm1385 = vweird.f32 %v1379
      %vm1386 = vmor %vm1384, %vm1385
      %v1387 = vsel %vm1386, %v1379, %v1383
      %v1388 = vand.u32 2147483647, %v1321
      %vm1389 = vcmp.eq.f32.partialorder %v1388, 8.507059e+37
      %v1390 = vand.u32 %v1321, 2147483648
      %v1391 = vor.u32 1.1754944e-38, %v1390
      %v1392 = vsel %vm1389, %v1391, %v1387
      %v1393 = vmul.f32 1.0, %v1392
      %v1394 = vrcp.pop %v1322
      %v1395 = vmul.f32 %v1322, %v1394
      %v1396 = vsub.f32 1.0, %v1395
      %v1397 = vmul.f32 %v1394, %v1396
      %v1398 = vadd.f32 %v1394, %v1397
      %vm1399 = vweird.f32 %v1322
      %vm1400 = vweird.f32 %v1394
      %vm1401 = vmor %vm1399, %vm1400
      %v1402 = vsel %vm1401, %v1394, %v1398
      %v1403 = vand.u32 2147483647, %v1322
      %vm1404 = vcmp.eq.f32.partialorder %v1403, 8.507059e+37
      %v1405 = vand.u32 %v1322, 2147483648
      %v1406 = vor.u32 1.1754944e-38, %v1405
      %v1407 = vsel %vm1404, %v1406, %v1402
      %v1408 = vmul.f32 1.0, %v1407
      %v1409 = vrcp.pop %v1323
      %v1410 = vmul.f32 %v1323, %v1409
      %v1411 = vsub.f32 1.0, %v1410
      %v1412 = vmul.f32 %v1409, %v1411
      %v1413 = vadd.f32 %v1409, %v1412
      %vm1414 = vweird.f32 %v1323
      %vm1415 = vweird.f32 %v1409
      %vm1416 = vmor %vm1414, %vm1415
      %v1417 = vsel %vm1416, %v1409, %v1413
      %v1418 = vand.u32 2147483647, %v1323
      %vm1419 = vcmp.eq.f32.partialorder %v1418, 8.507059e+37
      %v1420 = vand.u32 %v1323, 2147483648
      %v1421 = vor.u32 1.1754944e-38, %v1420
      %v1422 = vsel %vm1419, %v1421, %v1417
      %v1423 = vmul.f32 1.0, %v1422
      %v1424 = vrcp.pop %v1324
      %v1425 = vmul.f32 %v1324, %v1424
      %v1426 = vsub.f32 1.0, %v1425
      %v1427 = vmul.f32 %v1424, %v1426
      %v1428 = vadd.f32 %v1424, %v1427
      %vm1429 = vweird.f32 %v1324
      %vm1430 = vweird.f32 %v1424
      %vm1431 = vmor %vm1429, %vm1430
      %v1432 = vsel %vm1431, %v1424, %v1428
      %v1433 = vand.u32 2147483647, %v1324
      %vm1434 = vcmp.eq.f32.partialorder %v1433, 8.507059e+37
      %v1435 = vand.u32 %v1324, 2147483648
      %v1436 = vor.u32 1.1754944e-38, %v1435
      %v1437 = vsel %vm1434, %v1436, %v1432
      %v1438 = vmul.f32 1.0, %v1437
      %v1439 = vrcp.pop %v1325
      %v1440 = vmul.f32 %v1325, %v1439
      %v1441 = vsub.f32 1.0, %v1440
      %v1442 = vmul.f32 %v1439, %v1441
      %v1443 = vadd.f32 %v1439, %v1442
      %vm1444 = vweird.f32 %v1325
      %vm1445 = vweird.f32 %v1439
      %vm1446 = vmor %vm1444, %vm1445
      %v1447 = vsel %vm1446, %v1439, %v1443
      %v1448 = vand.u32 2147483647, %v1325
      %vm1449 = vcmp.eq.f32.partialorder %v1448, 8.507059e+37
      %v1450 = vand.u32 %v1325, 2147483648
      %v1451 = vor.u32 1.1754944e-38, %v1450
      %v1452 = vsel %vm1449, %v1451, %v1447
      %v1453 = vmul.f32 1.0, %v1452
      %v1454 = vrcp.pop %v1326
      %v1455 = vmul.f32 %v1326, %v1454
      %v1456 = vsub.f32 1.0, %v1455
      %v1457 = vmul.f32 %v1454, %v1456
      %v1458 = vadd.f32 %v1454, %v1457
      %vm1459 = vweird.f32 %v1326
      %vm1460 = vweird.f32 %v1454
      %vm1461 = vmor %vm1459, %vm1460
      %v1462 = vsel %vm1461, %v1454, %v1458
      %v1463 = vand.u32 2147483647, %v1326
      %vm1464 = vcmp.eq.f32.partialorder %v1463, 8.507059e+37
      %v1465 = vand.u32 %v1326, 2147483648
      %v1466 = vor.u32 1.1754944e-38, %v1465
      %v1467 = vsel %vm1464, %v1466, %v1462
      %v1468 = vmul.f32 1.0, %v1467
      %v1469 = vrcp.pop %v1327
      %v1470 = vmul.f32 %v1327, %v1469
      %v1471 = vsub.f32 1.0, %v1470
      %v1472 = vmul.f32 %v1469, %v1471
      %v1473 = vadd.f32 %v1469, %v1472
      %vm1474 = vweird.f32 %v1327
      %vm1475 = vweird.f32 %v1469
      %vm1476 = vmor %vm1474, %vm1475
      %v1477 = vsel %vm1476, %v1469, %v1473
      %v1478 = vand.u32 2147483647, %v1327
      %vm1479 = vcmp.eq.f32.partialorder %v1478, 8.507059e+37
      %v1480 = vand.u32 %v1327, 2147483648
      %v1481 = vor.u32 1.1754944e-38, %v1480
      %v1482 = vsel %vm1479, %v1481, %v1477
      %v1483 = vmul.f32 1.0, %v1482
      %v1484 = vrcp.pop %v1328
      %v1485 = vmul.f32 %v1328, %v1484
      %v1486 = vsub.f32 1.0, %v1485
      %v1487 = vmul.f32 %v1484, %v1486
      %v1488 = vadd.f32 %v1484, %v1487
      %vm1489 = vweird.f32 %v1328
      %vm1490 = vweird.f32 %v1484
      %vm1491 = vmor %vm1489, %vm1490
      %v1492 = vsel %vm1491, %v1484, %v1488
      %v1493 = vand.u32 2147483647, %v1328
      %vm1494 = vcmp.eq.f32.partialorder %v1493, 8.507059e+37
      %v1495 = vand.u32 %v1328, 2147483648
      %v1496 = vor.u32 1.1754944e-38, %v1495
      %v1497 = vsel %vm1494, %v1496, %v1492
      %v1498 = vmul.f32 1.0, %v1497
      %v1499 = vrcp.pop %v1329
      %v1500 = vmul.f32 %v1329, %v1499
      %v1501 = vsub.f32 1.0, %v1500
      %v1502 = vmul.f32 %v1499, %v1501
      %v1503 = vadd.f32 %v1499, %v1502
      %vm1504 = vweird.f32 %v1329
      %vm1505 = vweird.f32 %v1499
      %vm1506 = vmor %vm1504, %vm1505
      %v1507 = vsel %vm1506, %v1499, %v1503
      %v1508 = vand.u32 2147483647, %v1329
      %vm1509 = vcmp.eq.f32.partialorder %v1508, 8.507059e+37
      %v1510 = vand.u32 %v1329, 2147483648
      %v1511 = vor.u32 1.1754944e-38, %v1510
      %v1512 = vsel %vm1509, %v1511, %v1507
      %v1513 = vmul.f32 1.0, %v1512
      %v1514 = vrcp.pop %v1330
      %v1515 = vmul.f32 %v1330, %v1514
      %v1516 = vsub.f32 1.0, %v1515
      %v1517 = vmul.f32 %v1514, %v1516
      %v1518 = vadd.f32 %v1514, %v1517
      %vm1519 = vweird.f32 %v1330
      %vm1520 = vweird.f32 %v1514
      %vm1521 = vmor %vm1519, %vm1520
      %v1522 = vsel %vm1521, %v1514, %v1518
      %v1523 = vand.u32 2147483647, %v1330
      %vm1524 = vcmp.eq.f32.partialorder %v1523, 8.507059e+37
      %v1525 = vand.u32 %v1330, 2147483648
      %v1526 = vor.u32 1.1754944e-38, %v1525
      %v1527 = vsel %vm1524, %v1526, %v1522
      %v1528 = vmul.f32 1.0, %v1527
      %v1529 = vrcp.pop %v1331
      %v1530 = vmul.f32 %v1331, %v1529
      %v1531 = vsub.f32 1.0, %v1530
      %v1532 = vmul.f32 %v1529, %v1531
      %v1533 = vadd.f32 %v1529, %v1532
      %vm1534 = vweird.f32 %v1331
      %vm1535 = vweird.f32 %v1529
      %vm1536 = vmor %vm1534, %vm1535
      %v1537 = vsel %vm1536, %v1529, %v1533
      %v1538 = vand.u32 2147483647, %v1331
      %vm1539 = vcmp.eq.f32.partialorder %v1538, 8.507059e+37
      %v1540 = vand.u32 %v1331, 2147483648
      %v1541 = vor.u32 1.1754944e-38, %v1540
      %v1542 = vsel %vm1539, %v1541, %v1537
      %v1543 = vmul.f32 1.0, %v1542
      %v1544 = vrcp.pop %v1332
      %v1545 = vmul.f32 %v1332, %v1544
      %v1546 = vsub.f32 1.0, %v1545
      %v1547 = vmul.f32 %v1544, %v1546
      %v1548 = vadd.f32 %v1544, %v1547
      %vm1549 = vweird.f32 %v1332
      %vm1550 = vweird.f32 %v1544
      %vm1551 = vmor %vm1549, %vm1550
      %v1552 = vsel %vm1551, %v1544, %v1548
      %v1553 = vand.u32 2147483647, %v1332
      %vm1554 = vcmp.eq.f32.partialorder %v1553, 8.507059e+37
      %v1555 = vand.u32 %v1332, 2147483648
      %v1556 = vor.u32 1.1754944e-38, %v1555
      %v1557 = vsel %vm1554, %v1556, %v1552
      %v1558 = vmul.f32 1.0, %v1557
      %v1559 = vrcp.pop %v1333
      %v1560 = vmul.f32 %v1333, %v1559
      %v1561 = vsub.f32 1.0, %v1560
      %v1562 = vmul.f32 %v1559, %v1561
      %v1563 = vadd.f32 %v1559, %v1562
      %vm1564 = vweird.f32 %v1333
      %vm1565 = vweird.f32 %v1559
      %vm1566 = vmor %vm1564, %vm1565
      %v1567 = vsel %vm1566, %v1559, %v1563
      %v1568 = vand.u32 2147483647, %v1333
      %vm1569 = vcmp.eq.f32.partialorder %v1568, 8.507059e+37
      %v1570 = vand.u32 %v1333, 2147483648
      %v1571 = vor.u32 1.1754944e-38, %v1570
      %v1572 = vsel %vm1569, %v1571, %v1567
      %v1573 = vmul.f32 1.0, %v1572
      %v1574 = vmul.f32 %v1348, 1.0614054
      %v1575 = vmul.f32 %v1363, 1.0614054
      %v1576 = vmul.f32 %v1378, 1.0614054
      %v1577 = vmul.f32 %v1393, 1.0614054
      %v1578 = vmul.f32 %v1408, 1.0614054
      %v1579 = vmul.f32 %v1423, 1.0614054
      %v1580 = vmul.f32 %v1438, 1.0614054
      %v1581 = vmul.f32 %v1453, 1.0614054
      %v1582 = vmul.f32 %v1468, 1.0614054
      %v1583 = vmul.f32 %v1483, 1.0614054
      %v1584 = vmul.f32 %v1498, 1.0614054
      %v1585 = vmul.f32 %v1513, 1.0614054
      %v1586 = vmul.f32 %v1528, 1.0614054
      %v1587 = vmul.f32 %v1543, 1.0614054
      %v1588 = vmul.f32 %v1558, 1.0614054
      %v1589 = vmul.f32 %v1573, 1.0614054
      %v1590 = vadd.f32 %v1574, -1.4531521
      %v1591 = vadd.f32 %v1575, -1.4531521
      %v1592 = vadd.f32 %v1576, -1.4531521
      %v1593 = vadd.f32 %v1577, -1.4531521
      %v1594 = vadd.f32 %v1578, -1.4531521
      %v1595 = vadd.f32 %v1579, -1.4531521
      %v1596 = vadd.f32 %v1580, -1.4531521
      %v1597 = vadd.f32 %v1581, -1.4531521
      %v1598 = vadd.f32 %v1582, -1.4531521
      %v1599 = vadd.f32 %v1583, -1.4531521
      %v1600 = vadd.f32 %v1584, -1.4531521
      %v1601 = vadd.f32 %v1585, -1.4531521
      %v1602 = vadd.f32 %v1586, -1.4531521
      %v1603 = vadd.f32 %v1587, -1.4531521
      %v1604 = vadd.f32 %v1588, -1.4531521
      %v1605 = vadd.f32 %v1589, -1.4531521
      %v1606 = vmul.f32 %v1590, %v1348
      %v1607 = vmul.f32 %v1591, %v1363
      %v1608 = vmul.f32 %v1592, %v1378
      %v1609 = vmul.f32 %v1593, %v1393
      %v1610 = vmul.f32 %v1594, %v1408
      %v1611 = vmul.f32 %v1595, %v1423
      %v1612 = vmul.f32 %v1596, %v1438
      %v1613 = vmul.f32 %v1597, %v1453
      %v1614 = vmul.f32 %v1598, %v1468
      %v1615 = vmul.f32 %v1599, %v1483
      %v1616 = vmul.f32 %v1600, %v1498
      %v1617 = vmul.f32 %v1601, %v1513
      %v1618 = vmul.f32 %v1602, %v1528
      %v1619 = vmul.f32 %v1603, %v1543
      %v1620 = vmul.f32 %v1604, %v1558
      %v1621 = vmul.f32 %v1605, %v1573
      %v1622 = vadd.f32 %v1606, 1.4214138
      %v1623 = vadd.f32 %v1607, 1.4214138
      %v1624 = vadd.f32 %v1608, 1.4214138
      %v1625 = vadd.f32 %v1609, 1.4214138
      %v1626 = vadd.f32 %v1610, 1.4214138
      %v1627 = vadd.f32 %v1611, 1.4214138
      %v1628 = vadd.f32 %v1612, 1.4214138
      %v1629 = vadd.f32 %v1613, 1.4214138
      %v1630 = vadd.f32 %v1614, 1.4214138
      %v1631 = vadd.f32 %v1615, 1.4214138
      %v1632 = vadd.f32 %v1616, 1.4214138
      %v1633 = vadd.f32 %v1617, 1.4214138
      %v1634 = vadd.f32 %v1618, 1.4214138
      %v1635 = vadd.f32 %v1619, 1.4214138
      %v1636 = vadd.f32 %v1620, 1.4214138
      %v1637 = vadd.f32 %v1621, 1.4214138
      %v1638 = vmul.f32 %v1622, %v1348
      %v1639 = vmul.f32 %v1623, %v1363
      %v1640 = vmul.f32 %v1624, %v1378
      %v1641 = vmul.f32 %v1625, %v1393
      %v1642 = vmul.f32 %v1626, %v1408
      %v1643 = vmul.f32 %v1627, %v1423
      %v1644 = vmul.f32 %v1628, %v1438
      %v1645 = vmul.f32 %v1629, %v1453
      %v1646 = vmul.f32 %v1630, %v1468
      %v1647 = vmul.f32 %v1631, %v1483
      %v1648 = vmul.f32 %v1632, %v1498
      %v1649 = vmul.f32 %v1633, %v1513
      %v1650 = vmul.f32 %v1634, %v1528
      %v1651 = vmul.f32 %v1635, %v1543
      %v1652 = vmul.f32 %v1636, %v1558
      %v1653 = vmul.f32 %v1637, %v1573
      %v1654 = vadd.f32 %v1638, -0.28449672
      %v1655 = vadd.f32 %v1639, -0.28449672
      %v1656 = vadd.f32 %v1640, -0.28449672
      %v1657 = vadd.f32 %v1641, -0.28449672
      %v1658 = vadd.f32 %v1642, -0.28449672
      %v1659 = vadd.f32 %v1643, -0.28449672
      %v1660 = vadd.f32 %v1644, -0.28449672
      %v1661 = vadd.f32 %v1645, -0.28449672
      %v1662 = vadd.f32 %v1646, -0.28449672
      %v1663 = vadd.f32 %v1647, -0.28449672
      %v1664 = vadd.f32 %v1648, -0.28449672
      %v1665 = vadd.f32 %v1649, -0.28449672
      %v1666 = vadd.f32 %v1650, -0.28449672
      %v1667 = vadd.f32 %v1651, -0.28449672
      %v1668 = vadd.f32 %v1652, -0.28449672
      %v1669 = vadd.f32 %v1653, -0.28449672
      %v1670 = vmul.f32 %v1654, %v1348
      %v1671 = vmul.f32 %v1655, %v1363
      %v1672 = vmul.f32 %v1656, %v1378
      %v1673 = vmul.f32 %v1657, %v1393
      %v1674 = vmul.f32 %v1658, %v1408
      %v1675 = vmul.f32 %v1659, %v1423
      %v1676 = vmul.f32 %v1660, %v1438
      %v1677 = vmul.f32 %v1661, %v1453
      %v1678 = vmul.f32 %v1662, %v1468
      %v1679 = vmul.f32 %v1663, %v1483
      %v1680 = vmul.f32 %v1664, %v1498
      %v1681 = vmul.f32 %v1665, %v1513
      %v1682 = vmul.f32 %v1666, %v1528
      %v1683 = vmul.f32 %v1667, %v1543
      %v1684 = vmul.f32 %v1668, %v1558
      %v1685 = vmul.f32 %v1669, %v1573
      %v1686 = vadd.f32 %v1670, 0.2548296
      %v1687 = vadd.f32 %v1671, 0.2548296
      %v1688 = vadd.f32 %v1672, 0.2548296
      %v1689 = vadd.f32 %v1673, 0.2548296
      %v1690 = vadd.f32 %v1674, 0.2548296
      %v1691 = vadd.f32 %v1675, 0.2548296
      %v1692 = vadd.f32 %v1676, 0.2548296
      %v1693 = vadd.f32 %v1677, 0.2548296
      %v1694 = vadd.f32 %v1678, 0.2548296
      %v1695 = vadd.f32 %v1679, 0.2548296
      %v1696 = vadd.f32 %v1680, 0.2548296
      %v1697 = vadd.f32 %v1681, 0.2548296
      %v1698 = vadd.f32 %v1682, 0.2548296
      %v1699 = vadd.f32 %v1683, 0.2548296
      %v1700 = vadd.f32 %v1684, 0.2548296
      %v1701 = vadd.f32 %v1685, 0.2548296
      %v1702 = vmul.f32 %v1686, %v1348
      %v1703 = vmul.f32 %v1687, %v1363
      %v1704 = vmul.f32 %v1688, %v1378
      %v1705 = vmul.f32 %v1689, %v1393
      %v1706 = vmul.f32 %v1690, %v1408
      %v1707 = vmul.f32 %v1691, %v1423
      %v1708 = vmul.f32 %v1692, %v1438
      %v1709 = vmul.f32 %v1693, %v1453
      %v1710 = vmul.f32 %v1694, %v1468
      %v1711 = vmul.f32 %v1695, %v1483
      %v1712 = vmul.f32 %v1696, %v1498
      %v1713 = vmul.f32 %v1697, %v1513
      %v1714 = vmul.f32 %v1698, %v1528
      %v1715 = vmul.f32 %v1699, %v1543
      %v1716 = vmul.f32 %v1700, %v1558
      %v1717 = vmul.f32 %v1701, %v1573
      %v1718 = vsub.f32 0.0, %v1286
      %v1719 = vsub.f32 0.0, %v1287
      %v1720 = vsub.f32 0.0, %v1288
      %v1721 = vsub.f32 0.0, %v1289
      %v1722 = vsub.f32 0.0, %v1290
      %v1723 = vsub.f32 0.0, %v1291
      %v1724 = vsub.f32 0.0, %v1292
      %v1725 = vsub.f32 0.0, %v1293
      %v1726 = vsub.f32 0.0, %v1294
      %v1727 = vsub.f32 0.0, %v1295
      %v1728 = vsub.f32 0.0, %v1296
      %v1729 = vsub.f32 0.0, %v1297
      %v1730 = vsub.f32 0.0, %v1298
      %v1731 = vsub.f32 0.0, %v1299
      %v1732 = vsub.f32 0.0, %v1300
      %v1733 = vsub.f32 0.0, %v1301
      %v1734 = vmul.f32 %v1718, %v1286
      %v1735 = vmul.f32 %v1719, %v1287
      %v1736 = vmul.f32 %v1720, %v1288
      %v1737 = vmul.f32 %v1721, %v1289
      %v1738 = vmul.f32 %v1722, %v1290
      %v1739 = vmul.f32 %v1723, %v1291
      %v1740 = vmul.f32 %v1724, %v1292
      %v1741 = vmul.f32 %v1725, %v1293
      %v1742 = vmul.f32 %v1726, %v1294
      %v1743 = vmul.f32 %v1727, %v1295
      %v1744 = vmul.f32 %v1728, %v1296
      %v1745 = vmul.f32 %v1729, %v1297
      %v1746 = vmul.f32 %v1730, %v1298
      %v1747 = vmul.f32 %v1731, %v1299
      %v1748 = vmul.f32 %v1732, %v1300
      %v1749 = vmul.f32 %v1733, %v1301
      %v1750 = vmul.f32 %v1734, 1.442695
      %v1751 = vpow.pop %v1750
      %v1752 = vmul.f32 %v1735, 1.442695
      %v1753 = vpow.pop %v1752
      %v1754 = vmul.f32 %v1736, 1.442695
      %v1755 = vpow.pop %v1754
      %v1756 = vmul.f32 %v1737, 1.442695
      %v1757 = vpow.pop %v1756
      %v1758 = vmul.f32 %v1738, 1.442695
      %v1759 = vpow.pop %v1758
      %v1760 = vmul.f32 %v1739, 1.442695
      %v1761 = vpow.pop %v1760
      %v1762 = vmul.f32 %v1740, 1.442695
      %v1763 = vpow.pop %v1762
      %v1764 = vmul.f32 %v1741, 1.442695
      %v1765 = vpow.pop %v1764
      %v1766 = vmul.f32 %v1742, 1.442695
      %v1767 = vpow.pop %v1766
      %v1768 = vmul.f32 %v1743, 1.442695
      %v1769 = vpow.pop %v1768
      %v1770 = vmul.f32 %v1744, 1.442695
      %v1771 = vpow.pop %v1770
      %v1772 = vmul.f32 %v1745, 1.442695
      %v1773 = vpow.pop %v1772
      %v1774 = vmul.f32 %v1746, 1.442695
      %v1775 = vpow.pop %v1774
      %v1776 = vmul.f32 %v1747, 1.442695
      %v1777 = vpow.pop %v1776
      %v1778 = vmul.f32 %v1748, 1.442695
      %v1779 = vpow.pop %v1778
      %v1780 = vmul.f32 %v1749, 1.442695
      %v1781 = vpow.pop %v1780
      %v1782 = vmul.f32 %v1702, %v1751
      %v1783 = vmul.f32 %v1703, %v1753
      %v1784 = vmul.f32 %v1704, %v1755
      %v1785 = vmul.f32 %v1705, %v1757
      %v1786 = vmul.f32 %v1706, %v1759
      %v1787 = vmul.f32 %v1707, %v1761
      %v1788 = vmul.f32 %v1708, %v1763
      %v1789 = vmul.f32 %v1709, %v1765
      %v1790 = vmul.f32 %v1710, %v1767
      %v1791 = vmul.f32 %v1711, %v1769
      %v1792 = vmul.f32 %v1712, %v1771
      %v1793 = vmul.f32 %v1713, %v1773
      %v1794 = vmul.f32 %v1714, %v1775
      %v1795 = vmul.f32 %v1715, %v1777
      %v1796 = vmul.f32 %v1716, %v1779
      %v1797 = vmul.f32 %v1717, %v1781
      %v1798 = vsub.f32 1.0, %v1782
      %v1799 = vsub.f32 1.0, %v1783
      %v1800 = vsub.f32 1.0, %v1784
      %v1801 = vsub.f32 1.0, %v1785
      %v1802 = vsub.f32 1.0, %v1786
      %v1803 = vsub.f32 1.0, %v1787
      %v1804 = vsub.f32 1.0, %v1788
      %v1805 = vsub.f32 1.0, %v1789
      %v1806 = vsub.f32 1.0, %v1790
      %v1807 = vsub.f32 1.0, %v1791
      %v1808 = vsub.f32 1.0, %v1792
      %v1809 = vsub.f32 1.0, %v1793
      %v1810 = vsub.f32 1.0, %v1794
      %v1811 = vsub.f32 1.0, %v1795
      %v1812 = vsub.f32 1.0, %v1796
      %v1813 = vsub.f32 1.0, %v1797
      %v1814 = vmul.f32 %v1270, %v1798
      %v1815 = vmul.f32 %v1271, %v1799
      %v1816 = vmul.f32 %v1272, %v1800
      %v1817 = vmul.f32 %v1273, %v1801
      %v1818 = vmul.f32 %v1274, %v1802
      %v1819 = vmul.f32 %v1275, %v1803
      %v1820 = vmul.f32 %v1276, %v1804
      %v1821 = vmul.f32 %v1277, %v1805
      %v1822 = vmul.f32 %v1278, %v1806
      %v1823 = vmul.f32 %v1279, %v1807
      %v1824 = vmul.f32 %v1280, %v1808
      %v1825 = vmul.f32 %v1281, %v1809
      %v1826 = vmul.f32 %v1282, %v1810
      %v1827 = vmul.f32 %v1283, %v1811
      %v1828 = vmul.f32 %v1284, %v1812
      %v1829 = vmul.f32 %v1285, %v1813
      %v1830 = vadd.f32 %v1814, 1.0
      %v1831 = vadd.f32 %v1815, 1.0
      %v1832 = vadd.f32 %v1816, 1.0
      %v1833 = vadd.f32 %v1817, 1.0
      %v1834 = vadd.f32 %v1818, 1.0
      %v1835 = vadd.f32 %v1819, 1.0
      %v1836 = vadd.f32 %v1820, 1.0
      %v1837 = vadd.f32 %v1821, 1.0
      %v1838 = vadd.f32 %v1822, 1.0
      %v1839 = vadd.f32 %v1823, 1.0
      %v1840 = vadd.f32 %v1824, 1.0
      %v1841 = vadd.f32 %v1825, 1.0
      %v1842 = vadd.f32 %v1826, 1.0
      %v1843 = vadd.f32 %v1827, 1.0
      %v1844 = vadd.f32 %v1828, 1.0
      %v1845 = vadd.f32 %v1829, 1.0
      %v1846 = vmul.f32 %v1222, %v1830
      %v1847 = vmul.f32 %v1223, %v1831
      %v1848 = vmul.f32 %v1224, %v1832
      %v1849 = vmul.f32 %v1225, %v1833
      %v1850 = vmul.f32 %v1226, %v1834
      %v1851 = vmul.f32 %v1227, %v1835
      %v1852 = vmul.f32 %v1228, %v1836
      %v1853 = vmul.f32 %v1229, %v1837
      %v1854 = vmul.f32 %v1230, %v1838
      %v1855 = vmul.f32 %v1231, %v1839
      %v1856 = vmul.f32 %v1232, %v1840
      %v1857 = vmul.f32 %v1233, %v1841
      %v1858 = vmul.f32 %v1234, %v1842
      %v1859 = vmul.f32 %v1235, %v1843
      %v1860 = vmul.f32 %v1236, %v1844
      %v1861 = vmul.f32 %v1237, %v1845
      %v1862 = vld [vmem:[%s10] sm:$0xff]
      %v1863 = vld [vmem:[%s10 + $0x8] sm:$0xff]
      %v1864 = vld [vmem:[%s10 + $0x10] sm:$0xff]
      %v1865 = vld [vmem:[%s10 + $0x18] sm:$0xff]
      %v1866 = vld [vmem:[%s11] sm:$0xff]
      %v1867 = vld [vmem:[%s11 + $0x8] sm:$0xff]
      %v1868 = vld [vmem:[%s11 + $0x10] sm:$0xff]
      %v1869 = vld [vmem:[%s11 + $0x18] sm:$0xff]
      %1871 = vset.pattern.permute.xlu0 0
      %1872 = vperm.xlu0 %1871, %v1866
      %v1873 = vpop.permute.xlu0 %1872
      %1876 = vset.pattern.permute.xlu0 0
      %1877 = vperm.xlu0 %1876, %v1867
      %v1878 = vpop.permute.xlu0 %1877
      %1881 = vset.pattern.permute.xlu0 0
      %1882 = vperm.xlu0 %1881, %v1868
      %v1883 = vpop.permute.xlu0 %1882
      %1886 = vset.pattern.permute.xlu0 0
      %1887 = vperm.xlu0 %1886, %v1869
      %v1888 = vpop.permute.xlu0 %1887
      %vm1890 = vcmask 523264
      %v1892 = vsel %vm1890, %v1862, 0
      %v1895 = vsel %vm1890, %v1863, 0
      %v1898 = vsel %vm1890, %v1864, 0
      %v1901 = vsel %vm1890, %v1865, 0
      %1903 = vmatpush.msra.mxu0 0.0
      %1904 = vmatpush.msra.mxu0 0.0
      %1905 = vmatpush.msra.mxu0 0.0
      %1906 = vmatpush.msra.mxu0 0.0
      %1907 = vmatpush.msra.mxu0 0.0
      %1908 = vmatpush.msra.mxu0 0.0
      %1909 = vmatpush.msra.mxu0 0.0
      %1910 = vmatpush.msra.mxu0 0.0
      %1911 = vmatpush.msra.mxu0 %v1860
      %1912 = vmatpush.msra.mxu0 %v1858
      %1913 = vmatpush.msra.mxu0 %v1856
      %1914 = vmatpush.msra.mxu0 %v1854
      %1915 = vmatpush.msra.mxu0 %v1852
      %1916 = vmatpush.msra.mxu0 %v1850
      %1917 = vmatpush.msra.mxu0 %v1848
      %1918 = vmatpush.msra.mxu0 %v1846
      %1919 = vmatmul.f32.gmra.mxu0 %v1892
      %v1920 = vpop.f32.mrf.mxu0
      %v1921 = vadd.f32 %v1873, %v1920
      %1922 = vmatmul.f32.gmra.mxu0 %v1895
      %v1923 = vpop.f32.mrf.mxu0
      %v1924 = vadd.f32 %v1878, %v1923
      %1925 = vmatmul.f32.gmra.mxu0 %v1898
      %v1926 = vpop.f32.mrf.mxu0
      %v1927 = vadd.f32 %v1883, %v1926
      %1928 = vmatmul.f32.gmra.mxu0 %v1901
      %v1929 = vpop.f32.mrf.mxu0
      %v1930 = vadd.f32 %v1888, %v1929
      %1931 = vdwg.mxu0
      %1932 = vmatpush.msra.mxu0 0.0
      %1933 = vmatpush.msra.mxu0 0.0
      %1934 = vmatpush.msra.mxu0 0.0
      %1935 = vmatpush.msra.mxu0 0.0
      %1936 = vmatpush.msra.mxu0 0.0
      %1937 = vmatpush.msra.mxu0 0.0
      %1938 = vmatpush.msra.mxu0 0.0
      %1939 = vmatpush.msra.mxu0 0.0
      %1940 = vmatpush.msra.mxu0 %v1861
      %1941 = vmatpush.msra.mxu0 %v1859
      %1942 = vmatpush.msra.mxu0 %v1857
      %1943 = vmatpush.msra.mxu0 %v1855
      %1944 = vmatpush.msra.mxu0 %v1853
      %1945 = vmatpush.msra.mxu0 %v1851
      %1946 = vmatpush.msra.mxu0 %v1849
      %1947 = vmatpush.msra.mxu0 %v1847
      %1948 = vmatmul.f32.gmra.mxu0 %v1892
      %v1949 = vpop.f32.mrf.mxu0
      %v1950 = vadd.f32 %v1873, %v1949
      %1951 = vmatmul.f32.gmra.mxu0 %v1895
      %v1952 = vpop.f32.mrf.mxu0
      %v1953 = vadd.f32 %v1878, %v1952
      %1954 = vmatmul.f32.gmra.mxu0 %v1898
      %v1955 = vpop.f32.mrf.mxu0
      %v1956 = vadd.f32 %v1883, %v1955
      %1957 = vmatmul.f32.gmra.mxu0 %v1901
      %v1958 = vpop.f32.mrf.mxu0
      %v1959 = vadd.f32 %v1888, %v1958
      %1960 = vdwg.mxu0
      %v1961 = vadd.f32 %v1921, %v905
      %v1962 = vadd.f32 %v1950, %v906
      %v1963 = vadd.f32 %v1924, %v907
      %v1964 = vadd.f32 %v1953, %v908
      %v1965 = vadd.f32 %v1927, %v909
      %v1966 = vadd.f32 %v1956, %v910
      %v1967 = vadd.f32 %v1930, %v911
      %v1968 = vadd.f32 %v1959, %v912
      %1969 = vst [vmem:[%s605] sm:$0xff] %v1961
      %1970 = vst [vmem:[%s605 + $0x8] sm:$0xff] %v1962
      %1971 = vst [vmem:[%s605 + $0x10] sm:$0xff] %v1963
      %1972 = vst [vmem:[%s605 + $0x18] sm:$0xff] %v1964
      %1973 = vst [vmem:[%s605 + $0x20] sm:$0xff] %v1965
      %1974 = vst [vmem:[%s605 + $0x28] sm:$0xff] %v1966
      %1975 = vst [vmem:[%s605 + $0x30] sm:$0xff] %v1967
      %1976 = vst [vmem:[%s605 + $0x38] sm:$0xff] %v1968
      %s1977 = smul.u32 2, %s39
      %p1978 = scmp.lt.s32.totalorder %s38, 1
      %s1979 = scalar_select %p1978, %s38, 1
      %p1980 = scmp.lt.s32.totalorder %s1977, 1
      %s1981 = scalar_select %p1980, %s1977, 1
      %s1982 = smul.addr %s1979, 8
      %s1983 = sadd.s32 %s1981, %s1982
      %s1984 = smul.addr %s1983, 8
      %s1985 = scalar_lea.vmem %s12, %s1984
      %s1986 = smul.u32 2, %s39
      %p1987 = scmp.lt.s32.totalorder %s38, 1
      %s1988 = scalar_select %p1987, %s38, 1
      %p1989 = scmp.lt.s32.totalorder %s1986, 1
      %s1990 = scalar_select %p1989, %s1986, 1
      %s1991 = smul.addr %s1988, 2
      %s1992 = sadd.s32 %s1990, %s1991
      %s1993 = smul.addr %s1992, 8
      %s1994 = scalar_lea.vmem %s13, %s1993
      %s1995 = smul.u32 2, %s39
      %p1996 = scmp.lt.s32.totalorder %s38, 1
      %s1997 = scalar_select %p1996, %s38, 1
      %p1998 = scmp.lt.s32.totalorder %s1995, 1
      %s1999 = scalar_select %p1998, %s1995, 1
      %s2000 = smul.addr %s1997, 8
      %s2001 = sadd.s32 %s1999, %s2000
      %s2002 = smul.addr %s2001, 8
      %s2003 = scalar_lea.vmem %s14, %s2002
      // Predicated region
      $region65: #{_att_block_forward_impl.1} parent=63 // pred_check
        %p2004 = pneg %p323
      $region66: #{_att_block_forward_impl.1} parent=63 // pred_check_branch
        %2006 = sbr.rel (%p2004) target = $region68
      $region67: #{_att_block_forward_impl.1} parent=63 // pred_region
        %s2007 = smul.u32 2, %s39
      $region68: #{_att_block_forward_impl.1} parent=63 // pred_fallthru
        _
      // Predicated region
      $region69: #{_att_block_forward_impl.1} parent=63 // pred_check
        %p2008 = pneg %p351
      $region70: #{_att_block_forward_impl.1} parent=63 // pred_check_branch
        %2010 = sbr.rel (%p2008) target = $region72
      $region71: #{_att_block_forward_impl.1} parent=63 // pred_region
        %s2011 = smul.u32 2, %s39
      $region72: #{_att_block_forward_impl.1} parent=63 // pred_fallthru
        _
      // Predicated region
      $region73: #{_att_block_forward_impl.1} parent=63 // pred_check
        %p2012 = pneg %p379
      $region74: #{_att_block_forward_impl.1} parent=63 // pred_check_branch
        %2014 = sbr.rel (%p2012) target = $region76
      $region75: #{_att_block_forward_impl.1} parent=63 // pred_region
        %s2015 = smul.u32 2, %s39
      $region76: #{_att_block_forward_impl.1} parent=63 // pred_fallthru
        _
    $region64: #{_att_block_forward_impl.1} parent=5 // pred_fallthru
      _
    %p2016 = scmp.le.s32.totalorder 2, %s29
    // Predicated region
    $region77: #{_att_block_forward_impl.1} parent=5 // pred_check
      %p2017 = pneg %p2016
    $region78: #{_att_block_forward_impl.1} parent=5 // pred_check_branch
      %2019 = sbr.rel (%p2017) target = $region80
    $region79: #{_att_block_forward_impl.1} parent=5 // pred_region
      %s2020 = ssub.s32 %s29, 2
      // Predicated region
      $region81: #{_att_block_forward_impl.1} parent=79 // pred_check
        %p2021 = pneg %p329
      $region82: #{_att_block_forward_impl.1} parent=79 // pred_check_branch
        %2023 = sbr.rel (%p2021) target = $region84
      $region83: #{_att_block_forward_impl.1} parent=79 // pred_region
        %s2024 = smul.u32 2, %s41
        %p2025 = scmp.lt.s32.totalorder %s40, 1
        %s2026 = scalar_select %p2025, %s40, 1
        %p2027 = scmp.lt.s32.totalorder %s2024, 1
        %s2028 = scalar_select %p2027, %s2024, 1
        %s2029 = smul.addr %s2026, 8
        %s2030 = sadd.s32 %s2028, %s2029
        %s2031 = smul.addr %s2030, 8
        %s2032 = scalar_lea.vmem %s12, %s2031
      $region84: #{_att_block_forward_impl.1} parent=79 // pred_fallthru
        _
      // Predicated region
      $region85: #{_att_block_forward_impl.1} parent=79 // pred_check
        %p2033 = pneg %p357
      $region86: #{_att_block_forward_impl.1} parent=79 // pred_check_branch
        %2035 = sbr.rel (%p2033) target = $region88
      $region87: #{_att_block_forward_impl.1} parent=79 // pred_region
        %s2036 = smul.u32 2, %s41
        %p2037 = scmp.lt.s32.totalorder %s40, 1
        %s2038 = scalar_select %p2037, %s40, 1
        %p2039 = scmp.lt.s32.totalorder %s2036, 1
        %s2040 = scalar_select %p2039, %s2036, 1
        %s2041 = smul.addr %s2038, 2
        %s2042 = sadd.s32 %s2040, %s2041
        %s2043 = smul.addr %s2042, 8
        %s2044 = scalar_lea.vmem %s13, %s2043
      $region88: #{_att_block_forward_impl.1} parent=79 // pred_fallthru
        _
      // Predicated region
      $region89: #{_att_block_forward_impl.1} parent=79 // pred_check
        %p2045 = pneg %p385
      $region90: #{_att_block_forward_impl.1} parent=79 // pred_check_branch
        %2047 = sbr.rel (%p2045) target = $region92
      $region91: #{_att_block_forward_impl.1} parent=79 // pred_region
        %s2048 = smul.u32 2, %s41
        %p2049 = scmp.lt.s32.totalorder %s40, 1
        %s2050 = scalar_select %p2049, %s40, 1
        %p2051 = scmp.lt.s32.totalorder %s2048, 1
        %s2052 = scalar_select %p2051, %s2048, 1
        %s2053 = smul.addr %s2050, 8
        %s2054 = sadd.s32 %s2052, %s2053
        %s2055 = smul.addr %s2054, 8
        %s2056 = scalar_lea.vmem %s14, %s2055
      $region92: #{_att_block_forward_impl.1} parent=79 // pred_fallthru
        _
    $region80: #{_att_block_forward_impl.1} parent=5 // pred_fallthru
      _
  $region6: #{_att_block_forward_impl.1} parent=0 // loop_footer
    %s33 = sadd.s32 1, %s29
  $region7: #{_att_block_forward_impl.1} parent=0 // loop_footer_branch
    %28 = sbr.rel target = $region3
  $region8: #{_att_block_forward_impl.1} parent=0 // loop_exit
    _

// kernel: _att_block_forward_impl.1
$region0: #{_att_block_forward_impl.1}
  #allocation0 [shape = 'u32[]', space=smem, size = 0x4, offset = 0x4, fixed_abs, tag = 'smem constant byte address 0x4 - core index']
  #allocation1 [shape = 'u32[72,128]{1,0:T(1,128)}', space=vmem, size = 0x9000, scoped, tag = 'internal scratch']
  #allocation2 [shape = 's32[1]{0}', space=sflag, size = 0x4, scoped, tag = 'scoped memory for _att_block_forward_impl.1']
  #allocation3 [shape = 'u8[512]{0}', space=smem, size = 0x200, scoped, tag = 'prefetched SMEM operand 0']
  %s0 = inlined_call_operand.vmem [shape: s32[2], index: 0, kind: input, shape index: {}]
  %s1 = inlined_call_operand.vmem [shape: f32[2,8,256], index: 1, kind: input, shape index: {}]
  %s2 = inlined_call_operand.vmem [shape: f32[2,32,256], index: 2, kind: input, shape index: {}]
  %s3 = inlined_call_operand.vmem [shape: f32[32,32], index: 3, kind: input, shape index: {}]
  %s4 = inlined_call_operand.vmem [shape: f32[32,1], index: 4, kind: input, shape index: {}]
  %s5 = inlined_call_operand.vmem [shape: f32[2,32,8], index: 5, kind: input, shape index: {}]
  %s6 = inlined_call_operand.vmem [shape: f32[2,8,32], index: 6, kind: input, shape index: {}]
  %s7 = inlined_call_operand.vmem [shape: f32[32,1], index: 7, kind: input, shape index: {}]
  %s8 = inlined_call_operand.vmem [shape: f32[64,32], index: 8, kind: input, shape index: {}]
  %s9 = inlined_call_operand.vmem [shape: f32[64,1], index: 9, kind: input, shape index: {}]
  %s10 = inlined_call_operand.vmem [shape: f32[32,64], index: 10, kind: input, shape index: {}]
  %s11 = inlined_call_operand.vmem [shape: f32[32,1], index: 11, kind: input, shape index: {}]
  %s12 = inlined_call_operand.vmem [shape: f32[2,32,256], index: 12, kind: output, shape index: {0}]
  %s13 = inlined_call_operand.vmem [shape: f32[2,8,256], index: 13, kind: output, shape index: {1}]
  %s14 = inlined_call_operand.vmem [shape: f32[2,32,256], index: 14, kind: output, shape index: {2}]
  %15 = xla_tuple %s12, %s13, %s14
  %s16 = sld [smem:[#allocation0]]
  $region93: #{_att_block_forward_impl.1} parent=0
    _
  %s18 = ssub.s32 1, %s16
  %s19 = scalar_select 0, %s18, %s16
  %s21 = sshll.u32 %s0, 4
  %s22 = int_to_ptr.vmem [resolvable:$true] %s21
  %24 = dma.vmem_to_smem %s22, 16, [#allocation3], [#allocation2]
  %26 = dma.done [#allocation2], 16
  %27 = sfence
  loop: start=0, step=1, limit=4
  $region2: #{_att_block_forward_impl.1} parent=0 // loop_pre_header
    _
  $region3: #{_att_block_forward_impl.1} parent=0 // loop_header
    %s29 = sphi 0, %s33
    %p30 = scmp.ge.s32.totalorder %s29, 4
    %s36 = sphi 0, %s48
    %s37 = sphi 0, %s44
    %s38 = sphi 0, %s36
    %s39 = sphi 0, %s37
    %s40 = sphi 0, %s38
    %s41 = sphi 0, %s39
    %s55 = sphi 0, %s57
    %s58 = sphi 0, %s55
    %s59 = sphi 0, %s58
    %s75 = sphi 0, %s59
    %s83 = sphi 0, %s85
    %s86 = sphi 0, %s83
    %s87 = sphi 0, %s86
    %s103 = sphi 0, %s87
    %s107 = sphi 0, %s107
    %s109 = sphi 0, %s107
    %s110 = sphi 0, %s109
    %s124 = sphi 0, %s110
    %s128 = sphi 0, %s128
    %s130 = sphi 0, %s128
    %s131 = sphi 0, %s130
    %s145 = sphi 0, %s131
    %s151 = sphi 0, %s153
    %s154 = sphi 0, %s151
    %s155 = sphi 0, %s154
    %s171 = sphi 0, %s155
    %s177 = sphi 0, %s179
    %s180 = sphi 0, %s177
    %s181 = sphi 0, %s180
    %s197 = sphi 0, %s181
    %s201 = sphi 0, %s201
    %s203 = sphi 0, %s201
    %s204 = sphi 0, %s203
    %s218 = sphi 0, %s204
    %s222 = sphi 0, %s222
    %s224 = sphi 0, %s222
    %s225 = sphi 0, %s224
    %s239 = sphi 0, %s225
    %s243 = sphi 0, %s243
    %s245 = sphi 0, %s243
    %s246 = sphi 0, %s245
    %s260 = sphi 0, %s246
    %s264 = sphi 0, %s264
    %s266 = sphi 0, %s264
    %s267 = sphi 0, %s266
    %s281 = sphi 0, %s267
    %s285 = sphi 0, %s285
    %s287 = sphi 0, %s285
    %s288 = sphi 0, %s287
    %s302 = sphi 0, %s288
    %s310 = sphi 0, %s312
    %s313 = sphi 0, %s310
    %s314 = sphi 0, %s313
    %s330 = sphi 0, %s314
    %s338 = sphi 0, %s340
    %s341 = sphi 0, %s338
    %s342 = sphi 0, %s341
    %s358 = sphi 0, %s342
    %s366 = sphi 0, %s368
    %s369 = sphi 0, %s366
    %s370 = sphi 0, %s369
    %s386 = sphi 0, %s370
  $region4: #{_att_block_forward_impl.1} parent=0 // loop_header_branch
    %32 = sbr.rel (%p30) target = $region8
  $region5: #{_att_block_forward_impl.1} parent=0 // loop_body
    %s34 = ssub.s32 %s29, 1
    %s35 = ssub.s32 %s29, 2
    %s42 = sadd.s32 1, %s37
    %p43 = scmp.ge.s32.totalorder %s42, 1
    %s44 = scalar_select %p43, 0, %s42
    %s45 = sadd.s32 1, %s36
    %s46 = scalar_select %p43, %s45, %s36
    %p47 = scmp.ge.s32.totalorder %s46, 2
    %s48 = scalar_select %p47, 0, %s46
    %s49 = sadd.s32 %s36, %s37
    %s50 = sld [smem:[#allocation3 + %s49]]
    %s51 = sadd.s32 %s48, %s44
    %s52 = sld [smem:[#allocation3 + %s51]]
    %s53 = ssub.s32 %s50, %s52
    %p54 = scmp.eq.s32.totalorder %s53, 0
    %s56 = sadd.s32 %s55, 1
    %s57 = scalar_select %p54, %s55, %s56
    %p60 = pneg %p54
    %p61 = scmp.eq.s32.totalorder %s29, 1
    %p62 = por %p60, %p61
    %p63 = scmp.ne.s32.totalorder %s55, %s58
    %p64 = scmp.eq.s32.totalorder %s29, 0
    %p65 = por %p63, %p64
    %p66 = scmp.ne.s32.totalorder %s55, %s58
    %p67 = scmp.eq.s32.totalorder %s34, 1
    %p68 = por %p66, %p67
    %p69 = scmp.ne.s32.totalorder %s58, %s59
    %p70 = scmp.eq.s32.totalorder %s34, 0
    %p71 = por %p69, %p70
    %p72 = scmp.ne.s32.totalorder %s58, %s59
    %p73 = scmp.eq.s32.totalorder %s35, 1
    %p74 = por %p72, %p73
    %p76 = scmp.ne.s32.totalorder %s59, %s75
    %p77 = scmp.eq.s32.totalorder %s35, 0
    %p78 = por %p76, %p77
    %s79 = ssub.s32 %s36, %s48
    %s80 = ssub.s32 %s37, %s44
    %s81 = sor.u32 %s79, %s80
    %p82 = scmp.eq.s32.totalorder %s81, 0
    %s84 = sadd.s32 %s83, 1
    %s85 = scalar_select %p82, %s83, %s84
    %p88 = pneg %p82
    %p89 = scmp.eq.s32.totalorder %s29, 1
    %p90 = por %p88, %p89
    %p91 = scmp.ne.s32.totalorder %s83, %s86
    %p92 = scmp.eq.s32.totalorder %s29, 0
    %p93 = por %p91, %p92
    %p94 = scmp.ne.s32.totalorder %s83, %s86
    %p95 = scmp.eq.s32.totalorder %s34, 1
    %p96 = por %p94, %p95
    %p97 = scmp.ne.s32.totalorder %s86, %s87
    %p98 = scmp.eq.s32.totalorder %s34, 0
    %p99 = por %p97, %p98
    %p100 = scmp.ne.s32.totalorder %s86, %s87
    %p101 = scmp.eq.s32.totalorder %s35, 1
    %p102 = por %p100, %p101
    %p104 = scmp.ne.s32.totalorder %s87, %s103
    %p105 = scmp.eq.s32.totalorder %s35, 0
    %p106 = por %p104, %p105
    %s108 = sadd.s32 %s107, 1
    %p111 = scmp.eq.s32.totalorder %s29, 1
    %p112 = scmp.ne.s32.totalorder %s107, %s109
    %p113 = scmp.eq.s32.totalorder %s29, 0
    %p114 = por %p112, %p113
    %p115 = scmp.ne.s32.totalorder %s107, %s109
    %p116 = scmp.eq.s32.totalorder %s34, 1
    %p117 = por %p115, %p116
    %p118 = scmp.ne.s32.totalorder %s109, %s110
    %p119 = scmp.eq.s32.totalorder %s34, 0
    %p120 = por %p118, %p119
    %p121 = scmp.ne.s32.totalorder %s109, %s110
    %p122 = scmp.eq.s32.totalorder %s35, 1
    %p123 = por %p121, %p122
    %p125 = scmp.ne.s32.totalorder %s110, %s124
    %p126 = scmp.eq.s32.totalorder %s35, 0
    %p127 = por %p125, %p126
    %s129 = sadd.s32 %s128, 1
    %p132 = scmp.eq.s32.totalorder %s29, 1
    %p133 = scmp.ne.s32.totalorder %s128, %s130
    %p134 = scmp.eq.s32.totalorder %s29, 0
    %p135 = por %p133, %p134
    %p136 = scmp.ne.s32.totalorder %s128, %s130
    %p137 = scmp.eq.s32.totalorder %s34, 1
    %p138 = por %p136, %p137
    %p139 = scmp.ne.s32.totalorder %s130, %s131
    %p140 = scmp.eq.s32.totalorder %s34, 0
    %p141 = por %p139, %p140
    %p142 = scmp.ne.s32.totalorder %s130, %s131
    %p143 = scmp.eq.s32.totalorder %s35, 1
    %p144 = por %p142, %p143
    %p146 = scmp.ne.s32.totalorder %s131, %s145
    %p147 = scmp.eq.s32.totalorder %s35, 0
    %p148 = por %p146, %p147
    %s149 = ssub.s32 %s36, %s48
    %p150 = scmp.eq.s32.totalorder %s149, 0
    %s152 = sadd.s32 %s151, 1
    %s153 = scalar_select %p150, %s151, %s152
    %p156 = pneg %p150
    %p157 = scmp.eq.s32.totalorder %s29, 1
    %p158 = por %p156, %p157
    %p159 = scmp.ne.s32.totalorder %s151, %s154
    %p160 = scmp.eq.s32.totalorder %s29, 0
    %p161 = por %p159, %p160
    %p162 = scmp.ne.s32.totalorder %s151, %s154
    %p163 = scmp.eq.s32.totalorder %s34, 1
    %p164 = por %p162, %p163
    %p165 = scmp.ne.s32.totalorder %s154, %s155
    %p166 = scmp.eq.s32.totalorder %s34, 0
    %p167 = por %p165, %p166
    %p168 = scmp.ne.s32.totalorder %s154, %s155
    %p169 = scmp.eq.s32.totalorder %s35, 1
    %p170 = por %p168, %p169
    %p172 = scmp.ne.s32.totalorder %s155, %s171
    %p173 = scmp.eq.s32.totalorder %s35, 0
    %p174 = por %p172, %p173
    %s175 = ssub.s32 %s36, %s48
    %p176 = scmp.eq.s32.totalorder %s175, 0
    %s178 = sadd.s32 %s177, 1
    %s179 = scalar_select %p176, %s177, %s178
    %p182 = pneg %p176
    %p183 = scmp.eq.s32.totalorder %s29, 1
    %p184 = por %p182, %p183
    %p185 = scmp.ne.s32.totalorder %s177, %s180
    %p186 = scmp.eq.s32.totalorder %s29, 0
    %p187 = por %p185, %p186
    %p188 = scmp.ne.s32.totalorder %s177, %s180
    %p189 = scmp.eq.s32.totalorder %s34, 1
    %p190 = por %p188, %p189
    %p191 = scmp.ne.s32.totalorder %s180, %s181
    %p192 = scmp.eq.s32.totalorder %s34, 0
    %p193 = por %p191, %p192
    %p194 = scmp.ne.s32.totalorder %s180, %s181
    %p195 = scmp.eq.s32.totalorder %s35, 1
    %p196 = por %p194, %p195
    %p198 = scmp.ne.s32.totalorder %s181, %s197
    %p199 = scmp.eq.s32.totalorder %s35, 0
    %p200 = por %p198, %p199
    %s202 = sadd.s32 %s201, 1
    %p205 = scmp.eq.s32.totalorder %s29, 1
    %p206 = scmp.ne.s32.totalorder %s201, %s203
    %p207 = scmp.eq.s32.totalorder %s29, 0
    %p208 = por %p206, %p207
    %p209 = scmp.ne.s32.totalorder %s201, %s203
    %p210 = scmp.eq.s32.totalorder %s34, 1
    %p211 = por %p209, %p210
    %p212 = scmp.ne.s32.totalorder %s203, %s204
    %p213 = scmp.eq.s32.totalorder %s34, 0
    %p214 = por %p212, %p213
    %p215 = scmp.ne.s32.totalorder %s203, %s204
    %p216 = scmp.eq.s32.totalorder %s35, 1
    %p217 = por %p215, %p216
    %p219 = scmp.ne.s32.totalorder %s204, %s218
    %p220 = scmp.eq.s32.totalorder %s35, 0
    %p221 = por %p219, %p220
    %s223 = sadd.s32 %s222, 1
    %p226 = scmp.eq.s32.totalorder %s29, 1
    %p227 = scmp.ne.s32.totalorder %s222, %s224
    %p228 = scmp.eq.s32.totalorder %s29, 0
    %p229 = por %p227, %p228
    %p230 = scmp.ne.s32.totalorder %s222, %s224
    %p231 = scmp.eq.s32.totalorder %s34, 1
    %p232 = por %p230, %p231
    %p233 = scmp.ne.s32.totalorder %s224, %s225
    %p234 = scmp.eq.s32.totalorder %s34, 0
    %p235 = por %p233, %p234
    %p236 = scmp.ne.s32.totalorder %s224, %s225
    %p237 = scmp.eq.s32.totalorder %s35, 1
    %p238 = por %p236, %p237
    %p240 = scmp.ne.s32.totalorder %s225, %s239
    %p241 = scmp.eq.s32.totalorder %s35, 0
    %p242 = por %p240, %p241
    %s244 = sadd.s32 %s243, 1
    %p247 = scmp.eq.s32.totalorder %s29, 1
    %p248 = scmp.ne.s32.totalorder %s243, %s245
    %p249 = scmp.eq.s32.totalorder %s29, 0
    %p250 = por %p248, %p249
    %p251 = scmp.ne.s32.totalorder %s243, %s245
    %p252 = scmp.eq.s32.totalorder %s34, 1
    %p253 = por %p251, %p252
    %p254 = scmp.ne.s32.totalorder %s245, %s246
    %p255 = scmp.eq.s32.totalorder %s34, 0
    %p256 = por %p254, %p255
    %p257 = scmp.ne.s32.totalorder %s245, %s246
    %p258 = scmp.eq.s32.totalorder %s35, 1
    %p259 = por %p257, %p258
    %p261 = scmp.ne.s32.totalorder %s246, %s260
    %p262 = scmp.eq.s32.totalorder %s35, 0
    %p263 = por %p261, %p262
    %s265 = sadd.s32 %s264, 1
    %p268 = scmp.eq.s32.totalorder %s29, 1
    %p269 = scmp.ne.s32.totalorder %s264, %s266
    %p270 = scmp.eq.s32.totalorder %s29, 0
    %p271 = por %p269, %p270
    %p272 = scmp.ne.s32.totalorder %s264, %s266
    %p273 = scmp.eq.s32.totalorder %s34, 1
    %p274 = por %p272, %p273
    %p275 = scmp.ne.s32.totalorder %s266, %s267
    %p276 = scmp.eq.s32.totalorder %s34, 0
    %p277 = por %p275, %p276
    %p278 = scmp.ne.s32.totalorder %s266, %s267
    %p279 = scmp.eq.s32.totalorder %s35, 1
    %p280 = por %p278, %p279
    %p282 = scmp.ne.s32.totalorder %s267, %s281
    %p283 = scmp.eq.s32.totalorder %s35, 0
    %p284 = por %p282, %p283
    %s286 = sadd.s32 %s285, 1
    %p289 = scmp.eq.s32.totalorder %s29, 1
    %p290 = scmp.ne.s32.totalorder %s285, %s287
    %p291 = scmp.eq.s32.totalorder %s29, 0
    %p292 = por %p290, %p291
    %p293 = scmp.ne.s32.totalorder %s285, %s287
    %p294 = scmp.eq.s32.totalorder %s34, 1
    %p295 = por %p293, %p294
    %p296 = scmp.ne.s32.totalorder %s287, %s288
    %p297 = scmp.eq.s32.totalorder %s34, 0
    %p298 = por %p296, %p297
    %p299 = scmp.ne.s32.totalorder %s287, %s288
    %p300 = scmp.eq.s32.totalorder %s35, 1
    %p301 = por %p299, %p300
    %p303 = scmp.ne.s32.totalorder %s288, %s302
    %p304 = scmp.eq.s32.totalorder %s35, 0
    %p305 = por %p303, %p304
    %s306 = ssub.s32 %s36, %s48
    %s307 = ssub.s32 %s37, %s44
    %s308 = sor.u32 %s306, %s307
    %p309 = scmp.eq.s32.totalorder %s308, 0
    %s311 = sadd.s32 %s310, 1
    %s312 = scalar_select %p309, %s310, %s311
    %p315 = pneg %p309
    %p316 = scmp.eq.s32.totalorder %s29, 1
    %p317 = por %p315, %p316
    %p318 = scmp.ne.s32.totalorder %s310, %s313
    %p319 = scmp.eq.s32.totalorder %s29, 0
    %p320 = por %p318, %p319
    %p321 = scmp.ne.s32.totalorder %s310, %s313
    %p322 = scmp.eq.s32.totalorder %s34, 1
    %p323 = por %p321, %p322
    %p324 = scmp.ne.s32.totalorder %s313, %s314
    %p325 = scmp.eq.s32.totalorder %s34, 0
    %p326 = por %p324, %p325
    %p327 = scmp.ne.s32.totalorder %s313, %s314
    %p328 = scmp.eq.s32.totalorder %s35, 1
    %p329 = por %p327, %p328
    %p331 = scmp.ne.s32.totalorder %s314, %s330
    %p332 = scmp.eq.s32.totalorder %s35, 0
    %p333 = por %p331, %p332
    %s334 = ssub.s32 %s36, %s48
    %s335 = ssub.s32 %s37, %s44
    %s336 = sor.u32 %s334, %s335
    %p337 = scmp.eq.s32.totalorder %s336, 0
    %s339 = sadd.s32 %s338, 1
    %s340 = scalar_select %p337, %s338, %s339
    %p343 = pneg %p337
    %p344 = scmp.eq.s32.totalorder %s29, 1
    %p345 = por %p343, %p344
    %p346 = scmp.ne.s32.totalorder %s338, %s341
    %p347 = scmp.eq.s32.totalorder %s29, 0
    %p348 = por %p346, %p347
    %p349 = scmp.ne.s32.totalorder %s338, %s341
    %p350 = scmp.eq.s32.totalorder %s34, 1
    %p351 = por %p349, %p350
    %p352 = scmp.ne.s32.totalorder %s341, %s342
    %p353 = scmp.eq.s32.totalorder %s34, 0
    %p354 = por %p352, %p353
    %p355 = scmp.ne.s32.totalorder %s341, %s342
    %p356 = scmp.eq.s32.totalorder %s35, 1
    %p357 = por %p355, %p356
    %p359 = scmp.ne.s32.totalorder %s342, %s358
    %p360 = scmp.eq.s32.totalorder %s35, 0
    %p361 = por %p359, %p360
    %s362 = ssub.s32 %s36, %s48
    %s363 = ssub.s32 %s37, %s44
    %s364 = sor.u32 %s362, %s363
    %p365 = scmp.eq.s32.totalorder %s364, 0
    %s367 = sadd.s32 %s366, 1
    %s368 = scalar_select %p365, %s366, %s367
    %p371 = pneg %p365
    %p372 = scmp.eq.s32.totalorder %s29, 1
    %p373 = por %p371, %p372
    %p374 = scmp.ne.s32.totalorder %s366, %s369
    %p375 = scmp.eq.s32.totalorder %s29, 0
    %p376 = por %p374, %p375
    %p377 = scmp.ne.s32.totalorder %s366, %s369
    %p378 = scmp.eq.s32.totalorder %s34, 1
    %p379 = por %p377, %p378
    %p380 = scmp.ne.s32.totalorder %s369, %s370
    %p381 = scmp.eq.s32.totalorder %s34, 0
    %p382 = por %p380, %p381
    %p383 = scmp.ne.s32.totalorder %s369, %s370
    %p384 = scmp.eq.s32.totalorder %s35, 1
    %p385 = por %p383, %p384
    %p387 = scmp.ne.s32.totalorder %s370, %s386
    %p388 = scmp.eq.s32.totalorder %s35, 0
    %p389 = por %p387, %p388
    %p390 = scmp.le.s32.totalorder 1, %s29
    %p391 = scmp.lt.s32.totalorder %s29, 3
    %p392 = pnand %p390, %p391
    %p393 = pneg %p392
    // Predicated region
    $region9: #{_att_block_forward_impl.1} parent=5 // pred_check
      _
    $region10: #{_att_block_forward_impl.1} parent=5 // pred_check_branch
      %395 = sbr.rel (%p392) target = $region12
    $region11: #{_att_block_forward_impl.1} parent=5 // pred_region
      %s396 = ssub.s32 %s29, 1
      // Predicated region
      $region13: #{_att_block_forward_impl.1} parent=11 // pred_check
        %p397 = pneg %p120
      $region14: #{_att_block_forward_impl.1} parent=11 // pred_check_branch
        %399 = sbr.rel (%p397) target = $region16
      $region15: #{_att_block_forward_impl.1} parent=11 // pred_region
        _
      $region16: #{_att_block_forward_impl.1} parent=11 // pred_fallthru
        _
      // Predicated region
      $region17: #{_att_block_forward_impl.1} parent=11 // pred_check
        %p400 = pneg %p141
      $region18: #{_att_block_forward_impl.1} parent=11 // pred_check_branch
        %402 = sbr.rel (%p400) target = $region20
      $region19: #{_att_block_forward_impl.1} parent=11 // pred_region
        _
      $region20: #{_att_block_forward_impl.1} parent=11 // pred_fallthru
        _
      // Predicated region
      $region21: #{_att_block_forward_impl.1} parent=11 // pred_check
        %p403 = pneg %p214
      $region22: #{_att_block_forward_impl.1} parent=11 // pred_check_branch
        %405 = sbr.rel (%p403) target = $region24
      $region23: #{_att_block_forward_impl.1} parent=11 // pred_region
        _
      $region24: #{_att_block_forward_impl.1} parent=11 // pred_fallthru
        _
      // Predicated region
      $region25: #{_att_block_forward_impl.1} parent=11 // pred_check
        %p406 = pneg %p235
      $region26: #{_att_block_forward_impl.1} parent=11 // pred_check_branch
        %408 = sbr.rel (%p406) target = $region28
      $region27: #{_att_block_forward_impl.1} parent=11 // pred_region
        _
      $region28: #{_att_block_forward_impl.1} parent=11 // pred_fallthru
        _
      // Predicated region
      $region29: #{_att_block_forward_impl.1} parent=11 // pred_check
        %p409 = pneg %p256
      $region30: #{_att_block_forward_impl.1} parent=11 // pred_check_branch
        %411 = sbr.rel (%p409) target = $region32
      $region31: #{_att_block_forward_impl.1} parent=11 // pred_region
        _
      $region32: #{_att_block_forward_impl.1} parent=11 // pred_fallthru
        _
      // Predicated region
      $region33: #{_att_block_forward_impl.1} parent=11 // pred_check
        %p412 = pneg %p277
      $region34: #{_att_block_forward_impl.1} parent=11 // pred_check_branch
        %414 = sbr.rel (%p412) target = $region36
      $region35: #{_att_block_forward_impl.1} parent=11 // pred_region
        _
      $region36: #{_att_block_forward_impl.1} parent=11 // pred_fallthru
        _
      // Predicated region
      $region37: #{_att_block_forward_impl.1} parent=11 // pred_check
        %p415 = pneg %p298
      $region38: #{_att_block_forward_impl.1} parent=11 // pred_check_branch
        %417 = sbr.rel (%p415) target = $region40
      $region39: #{_att_block_forward_impl.1} parent=11 // pred_region
        _
      $region40: #{_att_block_forward_impl.1} parent=11 // pred_fallthru
        _
    $region12: #{_att_block_forward_impl.1} parent=5 // pred_fallthru
      _
    %p418 = scmp.lt.s32.totalorder %s29, 2
    // Predicated region
    $region41: #{_att_block_forward_impl.1} parent=5 // pred_check
      %p419 = pneg %p418
    $region42: #{_att_block_forward_impl.1} parent=5 // pred_check_branch
      %421 = sbr.rel (%p419) target = $region44
    $region43: #{_att_block_forward_impl.1} parent=5 // pred_region
      // Predicated region
      $region45: #{_att_block_forward_impl.1} parent=43 // pred_check
        %p422 = pneg %p65
      $region46: #{_att_block_forward_impl.1} parent=43 // pred_check_branch
        %424 = sbr.rel (%p422) target = $region48
      $region47: #{_att_block_forward_impl.1} parent=43 // pred_region
        %s425 = sadd.s32 %s36, %s37
        %s426 = sld [smem:[#allocation3 + %s425]]
        %p427 = scmp.lt.s32.totalorder %s426, 1
        %s428 = scalar_select %p427, %s426, 1
        %s429 = smul.addr %s428, 2
        %s430 = smul.addr %s429, 8
        %s431 = scalar_lea.vmem %s1, %s430
        %s432 = sadd.s32 %s36, %s37
        %s433 = sld [smem:[#allocation3 + %s432]]
      $region48: #{_att_block_forward_impl.1} parent=43 // pred_fallthru
        _
      // Predicated region
      $region49: #{_att_block_forward_impl.1} parent=43 // pred_check
        %p434 = pneg %p93
      $region50: #{_att_block_forward_impl.1} parent=43 // pred_check_branch
        %436 = sbr.rel (%p434) target = $region52
      $region51: #{_att_block_forward_impl.1} parent=43 // pred_region
        %s437 = smul.u32 2, %s37
        %p438 = scmp.lt.s32.totalorder %s36, 1
        %s439 = scalar_select %p438, %s36, 1
        %p440 = scmp.lt.s32.totalorder %s437, 1
        %s441 = scalar_select %p440, %s437, 1
        %s442 = smul.addr %s439, 8
        %s443 = sadd.s32 %s441, %s442
        %s444 = smul.addr %s443, 8
        %s445 = scalar_lea.vmem %s2, %s444
        %s446 = smul.u32 2, %s37
      $region52: #{_att_block_forward_impl.1} parent=43 // pred_fallthru
        _
      // Predicated region
      $region53: #{_att_block_forward_impl.1} parent=43 // pred_check
        %p447 = pneg %p161
      $region54: #{_att_block_forward_impl.1} parent=43 // pred_check_branch
        %449 = sbr.rel (%p447) target = $region56
      $region55: #{_att_block_forward_impl.1} parent=43 // pred_region
        %p450 = scmp.lt.s32.totalorder %s36, 1
        %s451 = scalar_select %p450, %s36, 1
        %s452 = smul.addr %s451, 4
        %s453 = smul.addr %s452, 8
        %s454 = scalar_lea.vmem %s5, %s453
      $region56: #{_att_block_forward_impl.1} parent=43 // pred_fallthru
        _
      // Predicated region
      $region57: #{_att_block_forward_impl.1} parent=43 // pred_check
        %p455 = pneg %p187
      $region58: #{_att_block_forward_impl.1} parent=43 // pred_check_branch
        %457 = sbr.rel (%p455) target = $region60
      $region59: #{_att_block_forward_impl.1} parent=43 // pred_region
        %p458 = scmp.lt.s32.totalorder %s36, 1
        %s459 = scalar_select %p458, %s36, 1
        %s460 = smul.addr %s459, 8
        %s461 = scalar_lea.vmem %s6, %s460
      $region60: #{_att_block_forward_impl.1} parent=43 // pred_fallthru
        _
    $region44: #{_att_block_forward_impl.1} parent=5 // pred_fallthru
      _
    %p462 = scmp.le.s32.totalorder 1, %s29
    %p463 = scmp.lt.s32.totalorder %s29, 3
    %p464 = pnand %p462, %p463
    %p465 = pneg %p464
    // Predicated region
    $region61: #{_att_block_forward_impl.1} parent=5 // pred_check
      _
    $region62: #{_att_block_forward_impl.1} parent=5 // pred_check_branch
      %467 = sbr.rel (%p464) target = $region64
    $region63: #{_att_block_forward_impl.1} parent=5 // pred_region
      %s468 = ssub.s32 %s29, 1
      %s469 = sadd.s32 %s38, %s39
      %s470 = sld [smem:[#allocation3 + %s469]]
      %p471 = scmp.lt.s32.totalorder %s470, 1
      %s472 = scalar_select %p471, %s470, 1
      %s473 = smul.addr %s472, 2
      %s474 = smul.addr %s473, 8
      %s475 = scalar_lea.vmem %s1, %s474
      %p476 = pneg %p71
      %p477 = pneg %p68
      %s478 = smul.u32 2, %s39
      %p479 = scmp.lt.s32.totalorder %s38, 1
      %s480 = scalar_select %p479, %s38, 1
      %p481 = scmp.lt.s32.totalorder %s478, 1
      %s482 = scalar_select %p481, %s478, 1
      %s483 = smul.addr %s480, 8
      %s484 = sadd.s32 %s482, %s483
      %s485 = smul.addr %s484, 8
      %s486 = scalar_lea.vmem %s2, %s485
      %p487 = pneg %p99
      %p488 = pneg %p96
      %p489 = pneg %p120
      %p490 = pneg %p117
      %p491 = pneg %p141
      %p492 = pneg %p138
      %p493 = scmp.lt.s32.totalorder %s38, 1
      %s494 = scalar_select %p493, %s38, 1
      %s495 = smul.addr %s494, 4
      %s496 = smul.addr %s495, 8
      %s497 = scalar_lea.vmem %s5, %s496
      %p498 = pneg %p167
      %p499 = pneg %p164
      %p500 = scmp.lt.s32.totalorder %s38, 1
      %s501 = scalar_select %p500, %s38, 1
      %s502 = smul.addr %s501, 8
      %s503 = scalar_lea.vmem %s6, %s502
      %p504 = pneg %p193
      %p505 = pneg %p190
      %p506 = pneg %p214
      %p507 = pneg %p211
      %p508 = pneg %p235
      %p509 = pneg %p232
      %p510 = pneg %p256
      %p511 = pneg %p253
      %p512 = pneg %p277
      %p513 = pneg %p274
      %p514 = pneg %p298
      %p515 = pneg %p295
      %p516 = pneg %p326
      %p517 = pneg %p323
      %s518 = smul.u32 2, %s39
      %p519 = scmp.lt.s32.totalorder %s38, 1
      %s520 = scalar_select %p519, %s38, 1
      %p521 = scmp.lt.s32.totalorder %s518, 1
      %s522 = scalar_select %p521, %s518, 1
      %s523 = smul.addr %s520, 8
      %s524 = sadd.s32 %s522, %s523
      %s525 = smul.addr %s524, 8
      %s526 = scalar_lea.vmem %s12, %s525
      %p527 = pneg %p354
      %p528 = pneg %p351
      %s529 = smul.u32 2, %s39
      %p530 = scmp.lt.s32.totalorder %s38, 1
      %s531 = scalar_select %p530, %s38, 1
      %p532 = scmp.lt.s32.totalorder %s529, 1
      %s533 = scalar_select %p532, %s529, 1
      %s534 = smul.addr %s531, 2
      %s535 = sadd.s32 %s533, %s534
      %s536 = smul.addr %s535, 8
      %s537 = scalar_lea.vmem %s13, %s536
      %p538 = pneg %p382
      %p539 = pneg %p379
      %s540 = smul.u32 2, %s39
      %p541 = scmp.lt.s32.totalorder %s38, 1
      %s542 = scalar_select %p541, %s38, 1
      %p543 = scmp.lt.s32.totalorder %s540, 1
      %s544 = scalar_select %p543, %s540, 1
      %s545 = smul.addr %s542, 8
      %s546 = sadd.s32 %s544, %s545
      %s547 = smul.addr %s546, 8
      %s548 = scalar_lea.vmem %s14, %s547
      %s549 = sadd.s32 %s38, %s39
      %s550 = sld [smem:[#allocation3 + %s549]]
      %p551 = scmp.lt.s32.totalorder %s550, 1
      %s552 = scalar_select %p551, %s550, 1
      %s553 = smul.addr %s552, 2
      %s554 = smul.addr %s553, 8
      %s555 = scalar_lea.vmem %s1, %s554
      %s556 = sadd.s32 %s38, %s39
      %s557 = sld [smem:[#allocation3 + %s556]]
      %s558 = smul.u32 2, %s39
      %p559 = scmp.lt.s32.totalorder %s38, 1
      %s560 = scalar_select %p559, %s38, 1
      %p561 = scmp.lt.s32.totalorder %s558, 1
      %s562 = scalar_select %p561, %s558, 1
      %s563 = smul.addr %s560, 8
      %s564 = sadd.s32 %s562, %s563
      %s565 = smul.addr %s564, 8
      %s566 = scalar_lea.vmem %s2, %s565
      %s567 = smul.u32 2, %s39
      %p568 = scmp.lt.s32.totalorder %s38, 1
      %s569 = scalar_select %p568, %s38, 1
      %s570 = smul.addr %s569, 4
      %s571 = smul.addr %s570, 8
      %s572 = scalar_lea.vmem %s5, %s571
      %p573 = scmp.lt.s32.totalorder %s38, 1
      %s574 = scalar_select %p573, %s38, 1
      %s575 = smul.addr %s574, 8
      %s576 = scalar_lea.vmem %s6, %s575
      %s577 = smul.u32 2, %s39
      %p578 = scmp.lt.s32.totalorder %s38, 1
      %s579 = scalar_select %p578, %s38, 1
      %p580 = scmp.lt.s32.totalorder %s577, 1
      %s581 = scalar_select %p580, %s577, 1
      %s582 = smul.addr %s579, 8
      %s583 = sadd.s32 %s581, %s582
      %s584 = smul.addr %s583, 8
      %s585 = scalar_lea.vmem %s12, %s584
      %s586 = smul.u32 2, %s39
      %s587 = smul.u32 2, %s39
      %p588 = scmp.lt.s32.totalorder %s38, 1
      %s589 = scalar_select %p588, %s38, 1
      %p590 = scmp.lt.s32.totalorder %s587, 1
      %s591 = scalar_select %p590, %s587, 1
      %s592 = smul.addr %s589, 2
      %s593 = sadd.s32 %s591, %s592
      %s594 = smul.addr %s593, 8
      %s595 = scalar_lea.vmem %s13, %s594
      %s596 = smul.u32 2, %s39
      %s597 = smul.u32 2, %s39
      %p598 = scmp.lt.s32.totalorder %s38, 1
      %s599 = scalar_select %p598, %s38, 1
      %p600 = scmp.lt.s32.totalorder %s597, 1
      %s601 = scalar_select %p600, %s597, 1
      %s602 = smul.addr %s599, 8
      %s603 = sadd.s32 %s601, %s602
      %s604 = smul.addr %s603, 8
      %s605 = scalar_lea.vmem %s14, %s604
      %s606 = smul.u32 2, %s39
      %v607 = vld [vmem:[%s566] sm:$0xff]
      %v608 = vld [vmem:[%s566 + $0x8] sm:$0xff]
      %v609 = vld [vmem:[%s566 + $0x10] sm:$0xff]
      %v610 = vld [vmem:[%s566 + $0x18] sm:$0xff]
      %v611 = vld [vmem:[%s566 + $0x20] sm:$0xff]
      %v612 = vld [vmem:[%s566 + $0x28] sm:$0xff]
      %v613 = vld [vmem:[%s566 + $0x30] sm:$0xff]
      %v614 = vld [vmem:[%s566 + $0x38] sm:$0xff]
      %v615 = vld [vmem:[%s572] sm:$0xff]
      %v616 = vld [vmem:[%s572 + $0x8] sm:$0xff]
      %v617 = vld [vmem:[%s572 + $0x10] sm:$0xff]
      %v618 = vld [vmem:[%s572 + $0x18] sm:$0xff]
      %v619 = vld [vmem:[%s576] sm:$0xff]
      %v620 = vld [vmem:[%s3] sm:$0xff]
      %v621 = vld [vmem:[%s3 + $0x8] sm:$0xff]
      %v622 = vld [vmem:[%s3 + $0x10] sm:$0xff]
      %v623 = vld [vmem:[%s3 + $0x18] sm:$0xff]
      %v624 = vld [vmem:[%s4] sm:$0xff]
      %v625 = vld [vmem:[%s4 + $0x8] sm:$0xff]
      %v626 = vld [vmem:[%s4 + $0x10] sm:$0xff]
      %v627 = vld [vmem:[%s4 + $0x18] sm:$0xff]
      %629 = vset.pattern.permute.xlu0 0
      %630 = vperm.xlu0 %629, %v624
      %v631 = vpop.permute.xlu0 %630
      %634 = vset.pattern.permute.xlu0 0
      %635 = vperm.xlu0 %634, %v625
      %v636 = vpop.permute.xlu0 %635
      %639 = vset.pattern.permute.xlu0 0
      %640 = vperm.xlu0 %639, %v626
      %v641 = vpop.permute.xlu0 %640
      %644 = vset.pattern.permute.xlu0 0
      %645 = vperm.xlu0 %644, %v627
      %v646 = vpop.permute.xlu0 %645
      %vm648 = vcmask 261120
      %v650 = vsel %vm648, %v620, 0
      %v653 = vsel %vm648, %v621, 0
      %v656 = vsel %vm648, %v622, 0
      %v659 = vsel %vm648, %v623, 0
      %661 = vmatpush.msra.mxu0 0.0
      %662 = vmatpush.msra.mxu0 0.0
      %663 = vmatpush.msra.mxu0 0.0
      %664 = vmatpush.msra.mxu0 0.0
      %665 = vmatpush.msra.mxu0 0.0
      %666 = vmatpush.msra.mxu0 0.0
      %667 = vmatpush.msra.mxu0 0.0
      %668 = vmatpush.msra.mxu0 0.0
      %669 = vmatpush.msra.mxu0 0.0
      %670 = vmatpush.msra.mxu0 0.0
      %671 = vmatpush.msra.mxu0 0.0
      %672 = vmatpush.msra.mxu0 0.0
      %673 = vmatpush.msra.mxu0 %v613
      %674 = vmatpush.msra.mxu0 %v611
      %675 = vmatpush.msra.mxu0 %v609
      %676 = vmatpush.msra.mxu0 %v607
      %677 = vmatmul.f32.gmra.mxu0 %v650
      %v678 = vpop.f32.mrf.mxu0
      %v679 = vadd.f32 %v631, %v678
      %680 = vmatmul.f32.gmra.mxu0 %v653
      %v681 = vpop.f32.mrf.mxu0
      %v682 = vadd.f32 %v636, %v681
      %683 = vmatmul.f32.gmra.mxu0 %v656
      %v684 = vpop.f32.mrf.mxu0
      %v685 = vadd.f32 %v641, %v684
      %686 = vmatmul.f32.gmra.mxu0 %v659
      %v687 = vpop.f32.mrf.mxu0
      %v688 = vadd.f32 %v646, %v687
      %689 = vdwg.mxu0
      %690 = vmatpush.msra.mxu0 0.0
      %691 = vmatpush.msra.mxu0 0.0
      %692 = vmatpush.msra.mxu0 0.0
      %693 = vmatpush.msra.mxu0 0.0
      %694 = vmatpush.msra.mxu0 0.0
      %695 = vmatpush.msra.mxu0 0.0
      %696 = vmatpush.msra.mxu0 0.0
      %697 = vmatpush.msra.mxu0 0.0
      %698 = vmatpush.msra.mxu0 0.0
      %699 = vmatpush.msra.mxu0 0.0
      %700 = vmatpush.msra.mxu0 0.0
      %701 = vmatpush.msra.mxu0 0.0
      %702 = vmatpush.msra.mxu0 %v614
      %703 = vmatpush.msra.mxu0 %v612
      %704 = vmatpush.msra.mxu0 %v610
      %705 = vmatpush.msra.mxu0 %v608
      %706 = vmatmul.f32.gmra.mxu0 %v650
      %v707 = vpop.f32.mrf.mxu0
      %v708 = vadd.f32 %v631, %v707
      %709 = vmatmul.f32.gmra.mxu0 %v653
      %v710 = vpop.f32.mrf.mxu0
      %v711 = vadd.f32 %v636, %v710
      %712 = vmatmul.f32.gmra.mxu0 %v656
      %v713 = vpop.f32.mrf.mxu0
      %v714 = vadd.f32 %v641, %v713
      %715 = vmatmul.f32.gmra.mxu0 %v659
      %v716 = vpop.f32.mrf.mxu0
      %v717 = vadd.f32 %v646, %v716
      %718 = vdwg.mxu0
      %v719 = vld [vmem:[%s555] sm:$0xff]
      %v720 = vld [vmem:[%s555 + $0x8] sm:$0xff]
      %v722 = vsel %vm648, %v619, 0
      %724 = vmatpush.msra.mxu0 0.0
      %725 = vmatpush.msra.mxu0 0.0
      %726 = vmatpush.msra.mxu0 0.0
      %727 = vmatpush.msra.mxu0 0.0
      %728 = vmatpush.msra.mxu0 0.0
      %729 = vmatpush.msra.mxu0 0.0
      %730 = vmatpush.msra.mxu0 0.0
      %731 = vmatpush.msra.mxu0 0.0
      %732 = vmatpush.msra.mxu0 0.0
      %733 = vmatpush.msra.mxu0 0.0
      %734 = vmatpush.msra.mxu0 0.0
      %735 = vmatpush.msra.mxu0 0.0
      %736 = vmatpush.msra.mxu0 %v688
      %737 = vmatpush.msra.mxu0 %v685
      %738 = vmatpush.msra.mxu0 %v682
      %739 = vmatpush.msra.mxu0 %v679
      %740 = vmatmul.f32.gmra.mxu0 %v722
      %v741 = vpop.f32.mrf.mxu0
      %v742 = vadd.f32 %v719, %v741
      %743 = vdwg.mxu0
      %744 = vmatpush.msra.mxu0 0.0
      %745 = vmatpush.msra.mxu0 0.0
      %746 = vmatpush.msra.mxu0 0.0
      %747 = vmatpush.msra.mxu0 0.0
      %748 = vmatpush.msra.mxu0 0.0
      %749 = vmatpush.msra.mxu0 0.0
      %750 = vmatpush.msra.mxu0 0.0
      %751 = vmatpush.msra.mxu0 0.0
      %752 = vmatpush.msra.mxu0 0.0
      %753 = vmatpush.msra.mxu0 0.0
      %754 = vmatpush.msra.mxu0 0.0
      %755 = vmatpush.msra.mxu0 0.0
      %756 = vmatpush.msra.mxu0 %v717
      %757 = vmatpush.msra.mxu0 %v714
      %758 = vmatpush.msra.mxu0 %v711
      %759 = vmatpush.msra.mxu0 %v708
      %760 = vmatmul.f32.gmra.mxu0 %v722
      %v761 = vpop.f32.mrf.mxu0
      %v762 = vadd.f32 %v720, %v761
      %763 = vdwg.mxu0
      %v764 = vrot.slane %v742, 4
      %v765 = vmax.f32 %v742, %v764
      %v766 = vrot.slane %v765, 2
      %v767 = vmax.f32 %v765, %v766
      %v768 = vrot.slane %v767, 1
      %v769 = vmax.f32 %v767, %v768
      %v770 = vrot.slane %v762, 4
      %v771 = vmax.f32 %v762, %v770
      %v772 = vrot.slane %v771, 2
      %v773 = vmax.f32 %v771, %v772
      %v774 = vrot.slane %v773, 1
      %v775 = vmax.f32 %v773, %v774
      %v776 = vsub.f32 %v742, %v769
      %v777 = vsub.f32 %v762, %v775
      %v778 = vmul.f32 %v776, 1.442695
      %v779 = vpow.pop %v778
      %v780 = vmul.f32 %v777, 1.442695
      %v781 = vpow.pop %v780
      %v782 = vrot.slane %v779, 4
      %v783 = vadd.f32 %v779, %v782
      %v784 = vrot.slane %v783, 2
      %v785 = vadd.f32 %v783, %v784
      %v786 = vrot.slane %v785, 1
      %v787 = vadd.f32 %v785, %v786
      %v788 = vrot.slane %v781, 4
      %v789 = vadd.f32 %v781, %v788
      %v790 = vrot.slane %v789, 2
      %v791 = vadd.f32 %v789, %v790
      %v792 = vrot.slane %v791, 1
      %v793 = vadd.f32 %v791, %v792
      %v794 = vrcp.pop %v787
      %v795 = vmul.f32 %v787, %v794
      %v796 = vsub.f32 1.0, %v795
      %v797 = vmul.f32 %v794, %v796
      %v798 = vadd.f32 %v794, %v797
      %vm799 = vweird.f32 %v787
      %vm800 = vweird.f32 %v794
      %vm801 = vmor %vm799, %vm800
      %v802 = vsel %vm801, %v794, %v798
      %v803 = vand.u32 2147483647, %v787
      %vm804 = vcmp.eq.f32.partialorder %v803, 8.507059e+37
      %v805 = vand.u32 %v787, 2147483648
      %v806 = vor.u32 1.1754944e-38, %v805
      %v807 = vsel %vm804, %v806, %v802
      %v808 = vrcp.pop %v793
      %v809 = vmul.f32 %v793, %v808
      %v810 = vsub.f32 1.0, %v809
      %v811 = vmul.f32 %v808, %v810
      %v812 = vadd.f32 %v808, %v811
      %vm813 = vweird.f32 %v793
      %vm814 = vweird.f32 %v808
      %vm815 = vmor %vm813, %vm814
      %v816 = vsel %vm815, %v808, %v812
      %v817 = vand.u32 2147483647, %v793
      %vm818 = vcmp.eq.f32.partialorder %v817, 8.507059e+37
      %v819 = vand.u32 %v793, 2147483648
      %v820 = vor.u32 1.1754944e-38, %v819
      %v821 = vsel %vm818, %v820, %v816
      %v822 = vmul.f32 %v779, %v807
      %v823 = vmul.f32 %v781, %v821
      %824 = vst [vmem:[%s595] sm:$0xff] %v822
      %825 = vst [vmem:[%s595 + $0x8] sm:$0xff] %v823
      %vm826 = vcmask 64512
      %v828 = vsel %vm826, %v615, 0
      %v831 = vsel %vm826, %v616, 0
      %v834 = vsel %vm826, %v617, 0
      %v837 = vsel %vm826, %v618, 0
      %839 = vmatpush.msra.mxu0 0.0
      %840 = vmatpush.msra.mxu0 0.0
      %841 = vmatpush.msra.mxu0 0.0
      %842 = vmatpush.msra.mxu0 0.0
      %843 = vmatpush.msra.mxu0 0.0
      %844 = vmatpush.msra.mxu0 0.0
      %845 = vmatpush.msra.mxu0 0.0
      %846 = vmatpush.msra.mxu0 0.0
      %847 = vmatpush.msra.mxu0 0.0
      %848 = vmatpush.msra.mxu0 0.0
      %849 = vmatpush.msra.mxu0 0.0
      %850 = vmatpush.msra.mxu0 0.0
      %851 = vmatpush.msra.mxu0 0.0
      %852 = vmatpush.msra.mxu0 0.0
      %853 = vmatpush.msra.mxu0 0.0
      %854 = vmatpush.msra.mxu0 %v822
      %855 = vmatmul.f32.gmra.mxu0 %v828
      %v856 = vpop.f32.mrf.mxu0
      %v857 = vadd.f32 0.0, %v856
      %858 = vmatmul.f32.gmra.mxu0 %v831
      %v859 = vpop.f32.mrf.mxu0
      %v860 = vadd.f32 0.0, %v859
      %861 = vmatmul.f32.gmra.mxu0 %v834
      %v862 = vpop.f32.mrf.mxu0
      %v863 = vadd.f32 0.0, %v862
      %864 = vmatmul.f32.gmra.mxu0 %v837
      %v865 = vpop.f32.mrf.mxu0
      %v866 = vadd.f32 0.0, %v865
      %867 = vdwg.mxu0
      %868 = vmatpush.msra.mxu0 0.0
      %869 = vmatpush.msra.mxu0 0.0
      %870 = vmatpush.msra.mxu0 0.0
      %871 = vmatpush.msra.mxu0 0.0
      %872 = vmatpush.msra.mxu0 0.0
      %873 = vmatpush.msra.mxu0 0.0
      %874 = vmatpush.msra.mxu0 0.0
      %875 = vmatpush.msra.mxu0 0.0
      %876 = vmatpush.msra.mxu0 0.0
      %877 = vmatpush.msra.mxu0 0.0
      %878 = vmatpush.msra.mxu0 0.0
      %879 = vmatpush.msra.mxu0 0.0
      %880 = vmatpush.msra.mxu0 0.0
      %881 = vmatpush.msra.mxu0 0.0
      %882 = vmatpush.msra.mxu0 0.0
      %883 = vmatpush.msra.mxu0 %v823
      %884 = vmatmul.f32.gmra.mxu0 %v828
      %v885 = vpop.f32.mrf.mxu0
      %v886 = vadd.f32 0.0, %v885
      %887 = vmatmul.f32.gmra.mxu0 %v831
      %v888 = vpop.f32.mrf.mxu0
      %v889 = vadd.f32 0.0, %v888
      %890 = vmatmul.f32.gmra.mxu0 %v834
      %v891 = vpop.f32.mrf.mxu0
      %v892 = vadd.f32 0.0, %v891
      %893 = vmatmul.f32.gmra.mxu0 %v837
      %v894 = vpop.f32.mrf.mxu0
      %v895 = vadd.f32 0.0, %v894
      %896 = vdwg.mxu0
      %897 = vst [vmem:[%s585] sm:$0xff] %v857
      %898 = vst [vmem:[%s585 + $0x8] sm:$0xff] %v886
      %899 = vst [vmem:[%s585 + $0x10] sm:$0xff] %v860
      %900 = vst [vmem:[%s585 + $0x18] sm:$0xff] %v889
      %901 = vst [vmem:[%s585 + $0x20] sm:$0xff] %v863
      %902 = vst [vmem:[%s585 + $0x28] sm:$0xff] %v892
      %903 = vst [vmem:[%s585 + $0x30] sm:$0xff] %v866
      %904 = vst [vmem:[%s585 + $0x38] sm:$0xff] %v895
      %v905 = vadd.f32 %v857, %v607
      %v906 = vadd.f32 %v886, %v608
      %v907 = vadd.f32 %v860, %v609
      %v908 = vadd.f32 %v889, %v610
      %v909 = vadd.f32 %v863, %v611
      %v910 = vadd.f32 %v892, %v612
      %v911 = vadd.f32 %v866, %v613
      %v912 = vadd.f32 %v895, %v614
      %v913 = vmul.f32 %v905, %v905
      %v914 = vmul.f32 %v906, %v906
      %v915 = vmul.f32 %v907, %v907
      %v916 = vmul.f32 %v908, %v908
      %v917 = vmul.f32 %v909, %v909
      %v918 = vmul.f32 %v910, %v910
      %v919 = vmul.f32 %v911, %v911
      %v920 = vmul.f32 %v912, %v912
      %v922 = vsel %vm648, 1.0, 0
      %924 = vmatpush.msra.mxu0 0.0
      %925 = vmatpush.msra.mxu0 0.0
      %926 = vmatpush.msra.mxu0 0.0
      %927 = vmatpush.msra.mxu0 0.0
      %928 = vmatpush.msra.mxu0 0.0
      %929 = vmatpush.msra.mxu0 0.0
      %930 = vmatpush.msra.mxu0 0.0
      %931 = vmatpush.msra.mxu0 0.0
      %932 = vmatpush.msra.mxu0 0.0
      %933 = vmatpush.msra.mxu0 0.0
      %934 = vmatpush.msra.mxu0 0.0
      %935 = vmatpush.msra.mxu0 0.0
      %936 = vmatpush.msra.mxu0 %v919
      %937 = vmatpush.msra.mxu0 %v917
      %938 = vmatpush.msra.mxu0 %v915
      %939 = vmatpush.msra.mxu0 %v913
      %940 = vmatmul.f32.gmra.mxu0 %v922
      %v941 = vpop.f32.mrf.mxu0
      %v942 = vadd.f32 0.0, %v941
      %943 = vdwg.mxu0
      %944 = vmatpush.msra.mxu0 0.0
      %945 = vmatpush.msra.mxu0 0.0
      %946 = vmatpush.msra.mxu0 0.0
      %947 = vmatpush.msra.mxu0 0.0
      %948 = vmatpush.msra.mxu0 0.0
      %949 = vmatpush.msra.mxu0 0.0
      %950 = vmatpush.msra.mxu0 0.0
      %951 = vmatpush.msra.mxu0 0.0
      %952 = vmatpush.msra.mxu0 0.0
      %953 = vmatpush.msra.mxu0 0.0
      %954 = vmatpush.msra.mxu0 0.0
      %955 = vmatpush.msra.mxu0 0.0
      %956 = vmatpush.msra.mxu0 %v920
      %957 = vmatpush.msra.mxu0 %v918
      %958 = vmatpush.msra.mxu0 %v916
      %959 = vmatpush.msra.mxu0 %v914
      %960 = vmatmul.f32.gmra.mxu0 %v922
      %v961 = vpop.f32.mrf.mxu0
      %v962 = vadd.f32 0.0, %v961
      %963 = vdwg.mxu0
      %v964 = vrsqrt.pop %v942
      %v965 = vmul.f32 %v964, %v942
      %v966 = vmul.f32 %v965, %v964
      %v967 = vmul.f32 0.5, %v966
      %v968 = vsub.f32 1.5, %v967
      %v969 = vmul.f32 %v964, %v968
      %v970 = vmul.f32 %v942, %v969
      %vm971 = vcmp.eq.f32.partialorder %v942, inf
      %v972 = vsel %vm971, %v942, %v970
      %vm973 = vcmp.eq.f32.partialorder %v942, 0.0
      %v974 = vand.u32 %v942, 2147483648
      %v975 = vsel %vm973, %v974, %v972
      %v976 = vrsqrt.pop %v962
      %v977 = vmul.f32 %v976, %v962
      %v978 = vmul.f32 %v977, %v976
      %v979 = vmul.f32 0.5, %v978
      %v980 = vsub.f32 1.5, %v979
      %v981 = vmul.f32 %v976, %v980
      %v982 = vmul.f32 %v962, %v981
      %vm983 = vcmp.eq.f32.partialorder %v962, inf
      %v984 = vsel %vm983, %v962, %v982
      %vm985 = vcmp.eq.f32.partialorder %v962, 0.0
      %v986 = vand.u32 %v962, 2147483648
      %v987 = vsel %vm985, %v986, %v984
      %v988 = vmax.f32 %v975, 1e-12
      %v989 = vmax.f32 %v987, 1e-12
      %v990 = vrcp.pop %v988
      %v991 = vmul.f32 %v988, %v990
      %v992 = vsub.f32 1.0, %v991
      %v993 = vmul.f32 %v990, %v992
      %v994 = vadd.f32 %v990, %v993
      %vm995 = vweird.f32 %v988
      %vm996 = vweird.f32 %v990
      %vm997 = vmor %vm995, %vm996
      %v998 = vsel %vm997, %v990, %v994
      %v999 = vand.u32 2147483647, %v988
      %vm1000 = vcmp.eq.f32.partialorder %v999, 8.507059e+37
      %v1001 = vand.u32 %v988, 2147483648
      %v1002 = vor.u32 1.1754944e-38, %v1001
      %v1003 = vsel %vm1000, %v1002, %v998
      %v1004 = vrcp.pop %v989
      %v1005 = vmul.f32 %v989, %v1004
      %v1006 = vsub.f32 1.0, %v1005
      %v1007 = vmul.f32 %v1004, %v1006
      %v1008 = vadd.f32 %v1004, %v1007
      %vm1009 = vweird.f32 %v989
      %vm1010 = vweird.f32 %v1004
      %vm1011 = vmor %vm1009, %vm1010
      %v1012 = vsel %vm1011, %v1004, %v1008
      %v1013 = vand.u32 2147483647, %v989
      %vm1014 = vcmp.eq.f32.partialorder %v1013, 8.507059e+37
      %v1015 = vand.u32 %v989, 2147483648
      %v1016 = vor.u32 1.1754944e-38, %v1015
      %v1017 = vsel %vm1014, %v1016, %v1012
      %v1018 = vperm.slane %v1003, 0
      %v1019 = vperm.slane %v1017, 0
      %v1020 = vmul.f32 %v905, %v1018
      %v1021 = vmul.f32 %v906, %v1019
      %v1022 = vmul.f32 %v907, %v1018
      %v1023 = vmul.f32 %v908, %v1019
      %v1024 = vmul.f32 %v909, %v1018
      %v1025 = vmul.f32 %v910, %v1019
      %v1026 = vmul.f32 %v911, %v1018
      %v1027 = vmul.f32 %v912, %v1019
      %v1028 = vld [vmem:[%s7] sm:$0xff]
      %v1029 = vld [vmem:[%s7 + $0x8] sm:$0xff]
      %v1030 = vld [vmem:[%s7 + $0x10] sm:$0xff]
      %v1031 = vld [vmem:[%s7 + $0x18] sm:$0xff]
      %1033 = vset.pattern.permute.xlu0 0
      %1034 = vperm.xlu0 %1033, %v1028
      %v1035 = vpop.permute.xlu0 %1034
      %1038 = vset.pattern.permute.xlu0 0
      %1039 = vperm.xlu0 %1038, %v1029
      %v1040 = vpop.permute.xlu0 %1039
      %1043 = vset.pattern.permute.xlu0 0
      %1044 = vperm.xlu0 %1043, %v1030
      %v1045 = vpop.permute.xlu0 %1044
      %1048 = vset.pattern.permute.xlu0 0
      %1049 = vperm.xlu0 %1048, %v1031
      %v1050 = vpop.permute.xlu0 %1049
      %v1052 = vmul.f32 %v1020, %v1035
      %v1053 = vmul.f32 %v1021, %v1035
      %v1054 = vmul.f32 %v1022, %v1040
      %v1055 = vmul.f32 %v1023, %v1040
      %v1056 = vmul.f32 %v1024, %v1045
      %v1057 = vmul.f32 %v1025, %v1045
      %v1058 = vmul.f32 %v1026, %v1050
      %v1059 = vmul.f32 %v1027, %v1050
      %v1060 = vld [vmem:[%s8] sm:$0xff]
      %v1061 = vld [vmem:[%s8 + $0x8] sm:$0xff]
      %v1062 = vld [vmem:[%s8 + $0x10] sm:$0xff]
      %v1063 = vld [vmem:[%s8 + $0x18] sm:$0xff]
      %v1064 = vld [vmem:[%s8 + $0x20] sm:$0xff]
      %v1065 = vld [vmem:[%s8 + $0x28] sm:$0xff]
      %v1066 = vld [vmem:[%s8 + $0x30] sm:$0xff]
      %v1067 = vld [vmem:[%s8 + $0x38] sm:$0xff]
      %v1068 = vld [vmem:[%s9] sm:$0xff]
      %v1069 = vld [vmem:[%s9 + $0x8] sm:$0xff]
      %v1070 = vld [vmem:[%s9 + $0x10] sm:$0xff]
      %v1071 = vld [vmem:[%s9 + $0x18] sm:$0xff]
      %v1072 = vld [vmem:[%s9 + $0x20] sm:$0xff]
      %v1073 = vld [vmem:[%s9 + $0x28] sm:$0xff]
      %v1074 = vld [vmem:[%s9 + $0x30] sm:$0xff]
      %v1075 = vld [vmem:[%s9 + $0x38] sm:$0xff]
      %1077 = vset.pattern.permute.xlu0 0
      %1078 = vperm.xlu0 %1077, %v1068
      %v1079 = vpop.permute.xlu0 %1078
      %1082 = vset.pattern.permute.xlu0 0
      %1083 = vperm.xlu0 %1082, %v1069
      %v1084 = vpop.permute.xlu0 %1083
      %1087 = vset.pattern.permute.xlu0 0
      %1088 = vperm.xlu0 %1087, %v1070
      %v1089 = vpop.permute.xlu0 %1088
      %1092 = vset.pattern.permute.xlu0 0
      %1093 = vperm.xlu0 %1092, %v1071
      %v1094 = vpop.permute.xlu0 %1093
      %1097 = vset.pattern.permute.xlu0 0
      %1098 = vperm.xlu0 %1097, %v1072
      %v1099 = vpop.permute.xlu0 %1098
      %1102 = vset.pattern.permute.xlu0 0
      %1103 = vperm.xlu0 %1102, %v1073
      %v1104 = vpop.permute.xlu0 %1103
      %1107 = vset.pattern.permute.xlu0 0
      %1108 = vperm.xlu0 %1107, %v1074
      %v1109 = vpop.permute.xlu0 %1108
      %1112 = vset.pattern.permute.xlu0 0
      %1113 = vperm.xlu0 %1112, %v1075
      %v1114 = vpop.permute.xlu0 %1113
      %v1117 = vsel %vm648, %v1060, 0
      %v1120 = vsel %vm648, %v1061, 0
      %v1123 = vsel %vm648, %v1062, 0
      %v1126 = vsel %vm648, %v1063, 0
      %v1129 = vsel %vm648, %v1064, 0
      %v1132 = vsel %vm648, %v1065, 0
      %v1135 = vsel %vm648, %v1066, 0
      %v1138 = vsel %vm648, %v1067, 0
      %1140 = vmatpush.msra.mxu0 0.0
      %1141 = vmatpush.msra.mxu0 0.0
      %1142 = vmatpush.msra.mxu0 0.0
      %1143 = vmatpush.msra.mxu0 0.0
      %1144 = vmatpush.msra.mxu0 0.0
      %1145 = vmatpush.msra.mxu0 0.0
      %1146 = vmatpush.msra.mxu0 0.0
      %1147 = vmatpush.msra.mxu0 0.0
      %1148 = vmatpush.msra.mxu0 0.0
      %1149 = vmatpush.msra.mxu0 0.0
      %1150 = vmatpush.msra.mxu0 0.0
      %1151 = vmatpush.msra.mxu0 0.0
      %1152 = vmatpush.msra.mxu0 %v1058
      %1153 = vmatpush.msra.mxu0 %v1056
      %1154 = vmatpush.msra.mxu0 %v1054
      %1155 = vmatpush.msra.mxu0 %v1052
      %1156 = vmatmul.f32.gmra.mxu0 %v1117
      %v1157 = vpop.f32.mrf.mxu0
      %v1158 = vadd.f32 %v1079, %v1157
      %1159 = vmatmul.f32.gmra.mxu0 %v1120
      %v1160 = vpop.f32.mrf.mxu0
      %v1161 = vadd.f32 %v1084, %v1160
      %1162 = vmatmul.f32.gmra.mxu0 %v1123
      %v1163 = vpop.f32.mrf.mxu0
      %v1164 = vadd.f32 %v1089, %v1163
      %1165 = vmatmul.f32.gmra.mxu0 %v1126
      %v1166 = vpop.f32.mrf.mxu0
      %v1167 = vadd.f32 %v1094, %v1166
      %1168 = vmatmul.f32.gmra.mxu0 %v1129
      %v1169 = vpop.f32.mrf.mxu0
      %v1170 = vadd.f32 %v1099, %v1169
      %1171 = vmatmul.f32.gmra.mxu0 %v1132
      %v1172 = vpop.f32.mrf.mxu0
      %v1173 = vadd.f32 %v1104, %v1172
      %1174 = vmatmul.f32.gmra.mxu0 %v1135
      %v1175 = vpop.f32.mrf.mxu0
      %v1176 = vadd.f32 %v1109, %v1175
      %1177 = vmatmul.f32.gmra.mxu0 %v1138
      %v1178 = vpop.f32.mrf.mxu0
      %v1179 = vadd.f32 %v1114, %v1178
      %1180 = vdwg.mxu0
      %1181 = vmatpush.msra.mxu0 0.0
      %1182 = vmatpush.msra.mxu0 0.0
      %1183 = vmatpush.msra.mxu0 0.0
      %1184 = vmatpush.msra.mxu0 0.0
      %1185 = vmatpush.msra.mxu0 0.0
      %1186 = vmatpush.msra.mxu0 0.0
      %1187 = vmatpush.msra.mxu0 0.0
      %1188 = vmatpush.msra.mxu0 0.0
      %1189 = vmatpush.msra.mxu0 0.0
      %1190 = vmatpush.msra.mxu0 0.0
      %1191 = vmatpush.msra.mxu0 0.0
      %1192 = vmatpush.msra.mxu0 0.0
      %1193 = vmatpush.msra.mxu0 %v1059
      %1194 = vmatpush.msra.mxu0 %v1057
      %1195 = vmatpush.msra.mxu0 %v1055
      %1196 = vmatpush.msra.mxu0 %v1053
      %1197 = vmatmul.f32.gmra.mxu0 %v1117
      %v1198 = vpop.f32.mrf.mxu0
      %v1199 = vadd.f32 %v1079, %v1198
      %1200 = vmatmul.f32.gmra.mxu0 %v1120
      %v1201 = vpop.f32.mrf.mxu0
      %v1202 = vadd.f32 %v1084, %v1201
      %1203 = vmatmul.f32.gmra.mxu0 %v1123
      %v1204 = vpop.f32.mrf.mxu0
      %v1205 = vadd.f32 %v1089, %v1204
      %1206 = vmatmul.f32.gmra.mxu0 %v1126
      %v1207 = vpop.f32.mrf.mxu0
      %v1208 = vadd.f32 %v1094, %v1207
      %1209 = vmatmul.f32.gmra.mxu0 %v1129
      %v1210 = vpop.f32.mrf.mxu0
      %v1211 = vadd.f32 %v1099, %v1210
      %1212 = vmatmul.f32.gmra.mxu0 %v1132
      %v1213 = vpop.f32.mrf.mxu0
      %v1214 = vadd.f32 %v1104, %v1213
      %1215 = vmatmul.f32.gmra.mxu0 %v1135
      %v1216 = vpop.f32.mrf.mxu0
      %v1217 = vadd.f32 %v1109, %v1216
      %1218 = vmatmul.f32.gmra.mxu0 %v1138
      %v1219 = vpop.f32.mrf.mxu0
      %v1220 = vadd.f32 %v1114, %v1219
      %1221 = vdwg.mxu0
      %v1222 = vmul.f32 %v1158, 0.5
      %v1223 = vmul.f32 %v1199, 0.5
      %v1224 = vmul.f32 %v1161, 0.5
      %v1225 = vmul.f32 %v1202, 0.5
      %v1226 = vmul.f32 %v1164, 0.5
      %v1227 = vmul.f32 %v1205, 0.5
      %v1228 = vmul.f32 %v1167, 0.5
      %v1229 = vmul.f32 %v1208, 0.5
      %v1230 = vmul.f32 %v1170, 0.5
      %v1231 = vmul.f32 %v1211, 0.5
      %v1232 = vmul.f32 %v1173, 0.5
      %v1233 = vmul.f32 %v1214, 0.5
      %v1234 = vmul.f32 %v1176, 0.5
      %v1235 = vmul.f32 %v1217, 0.5
      %v1236 = vmul.f32 %v1179, 0.5
      %v1237 = vmul.f32 %v1220, 0.5
      %v1238 = vmul.f32 %v1158, 0.70710677
      %v1239 = vmul.f32 %v1199, 0.70710677
      %v1240 = vmul.f32 %v1161, 0.70710677
      %v1241 = vmul.f32 %v1202, 0.70710677
      %v1242 = vmul.f32 %v1164, 0.70710677
      %v1243 = vmul.f32 %v1205, 0.70710677
      %v1244 = vmul.f32 %v1167, 0.70710677
      %v1245 = vmul.f32 %v1208, 0.70710677
      %v1246 = vmul.f32 %v1170, 0.70710677
      %v1247 = vmul.f32 %v1211, 0.70710677
      %v1248 = vmul.f32 %v1173, 0.70710677
      %v1249 = vmul.f32 %v1214, 0.70710677
      %v1250 = vmul.f32 %v1176, 0.70710677
      %v1251 = vmul.f32 %v1217, 0.70710677
      %v1252 = vmul.f32 %v1179, 0.70710677
      %v1253 = vmul.f32 %v1220, 0.70710677
      %vm1254 = vcmp.lt.f32.partialorder %v1238, 0.0
      %vm1255 = vcmp.lt.f32.partialorder %v1239, 0.0
      %vm1256 = vcmp.lt.f32.partialorder %v1240, 0.0
      %vm1257 = vcmp.lt.f32.partialorder %v1241, 0.0
      %vm1258 = vcmp.lt.f32.partialorder %v1242, 0.0
      %vm1259 = vcmp.lt.f32.partialorder %v1243, 0.0
      %vm1260 = vcmp.lt.f32.partialorder %v1244, 0.0
      %vm1261 = vcmp.lt.f32.partialorder %v1245, 0.0
      %vm1262 = vcmp.lt.f32.partialorder %v1246, 0.0
      %vm1263 = vcmp.lt.f32.partialorder %v1247, 0.0
      %vm1264 = vcmp.lt.f32.partialorder %v1248, 0.0
      %vm1265 = vcmp.lt.f32.partialorder %v1249, 0.0
      %vm1266 = vcmp.lt.f32.partialorder %v1250, 0.0
      %vm1267 = vcmp.lt.f32.partialorder %v1251, 0.0
      %vm1268 = vcmp.lt.f32.partialorder %v1252, 0.0
      %vm1269 = vcmp.lt.f32.partialorder %v1253, 0.0
      %v1270 = vsel %vm1254, -1.0, 1.0
      %v1271 = vsel %vm1255, -1.0, 1.0
      %v1272 = vsel %vm1256, -1.0, 1.0
      %v1273 = vsel %vm1257, -1.0, 1.0
      %v1274 = vsel %vm1258, -1.0, 1.0
      %v1275 = vsel %vm1259, -1.0, 1.0
      %v1276 = vsel %vm1260, -1.0, 1.0
      %v1277 = vsel %vm1261, -1.0, 1.0
      %v1278 = vsel %vm1262, -1.0, 1.0
      %v1279 = vsel %vm1263, -1.0, 1.0
      %v1280 = vsel %vm1264, -1.0, 1.0
      %v1281 = vsel %vm1265, -1.0, 1.0
      %v1282 = vsel %vm1266, -1.0, 1.0
      %v1283 = vsel %vm1267, -1.0, 1.0
      %v1284 = vsel %vm1268, -1.0, 1.0
      %v1285 = vsel %vm1269, -1.0, 1.0
      %v1286 = vand.u32 2147483647, %v1238
      %v1287 = vand.u32 2147483647, %v1239
      %v1288 = vand.u32 2147483647, %v1240
      %v1289 = vand.u32 2147483647, %v1241
      %v1290 = vand.u32 2147483647, %v1242
      %v1291 = vand.u32 2147483647, %v1243
      %v1292 = vand.u32 2147483647, %v1244
      %v1293 = vand.u32 2147483647, %v1245
      %v1294 = vand.u32 2147483647, %v1246
      %v1295 = vand.u32 2147483647, %v1247
      %v1296 = vand.u32 2147483647, %v1248
      %v1297 = vand.u32 2147483647, %v1249
      %v1298 = vand.u32 2147483647, %v1250
      %v1299 = vand.u32 2147483647, %v1251
      %v1300 = vand.u32 2147483647, %v1252
      %v1301 = vand.u32 2147483647, %v1253
      %v1302 = vmul.f32 %v1286, 0.3275911
      %v1303 = vmul.f32 %v1287, 0.3275911
      %v1304 = vmul.f32 %v1288, 0.3275911
      %v1305 = vmul.f32 %v1289, 0.3275911
      %v1306 = vmul.f32 %v1290, 0.3275911
      %v1307 = vmul.f32 %v1291, 0.3275911
      %v1308 = vmul.f32 %v1292, 0.3275911
      %v1309 = vmul.f32 %v1293, 0.3275911
      %v1310 = vmul.f32 %v1294, 0.3275911
      %v1311 = vmul.f32 %v1295, 0.3275911
      %v1312 = vmul.f32 %v1296, 0.3275911
      %v1313 = vmul.f32 %v1297, 0.3275911
      %v1314 = vmul.f32 %v1298, 0.3275911
      %v1315 = vmul.f32 %v1299, 0.3275911
      %v1316 = vmul.f32 %v1300, 0.3275911
      %v1317 = vmul.f32 %v1301, 0.3275911
      %v1318 = vadd.f32 %v1302, 1.0
      %v1319 = vadd.f32 %v1303, 1.0
      %v1320 = vadd.f32 %v1304, 1.0
      %v1321 = vadd.f32 %v1305, 1.0
      %v1322 = vadd.f32 %v1306, 1.0
      %v1323 = vadd.f32 %v1307, 1.0
      %v1324 = vadd.f32 %v1308, 1.0
      %v1325 = vadd.f32 %v1309, 1.0
      %v1326 = vadd.f32 %v1310, 1.0
      %v1327 = vadd.f32 %v1311, 1.0
      %v1328 = vadd.f32 %v1312, 1.0
      %v1329 = vadd.f32 %v1313, 1.0
      %v1330 = vadd.f32 %v1314, 1.0
      %v1331 = vadd.f32 %v1315, 1.0
      %v1332 = vadd.f32 %v1316, 1.0
      %v1333 = vadd.f32 %v1317, 1.0
      %v1334 = vrcp.pop %v1318
      %v1335 = vmul.f32 %v1318, %v1334
      %v1336 = vsub.f32 1.0, %v1335
      %v1337 = vmul.f32 %v1334, %v1336
      %v1338 = vadd.f32 %v1334, %v1337
      %vm1339 = vweird.f32 %v1318
      %vm1340 = vweird.f32 %v1334
      %vm1341 = vmor %vm1339, %vm1340
      %v1342 = vsel %vm1341, %v1334, %v1338
      %v1343 = vand.u32 2147483647, %v1318
      %vm1344 = vcmp.eq.f32.partialorder %v1343, 8.507059e+37
      %v1345 = vand.u32 %v1318, 2147483648
      %v1346 = vor.u32 1.1754944e-38, %v1345
      %v1347 = vsel %vm1344, %v1346, %v1342
      %v1348 = vmul.f32 1.0, %v1347
      %v1349 = vrcp.pop %v1319
      %v1350 = vmul.f32 %v1319, %v1349
      %v1351 = vsub.f32 1.0, %v1350
      %v1352 = vmul.f32 %v1349, %v1351
      %v1353 = vadd.f32 %v1349, %v1352
      %vm1354 = vweird.f32 %v1319
      %vm1355 = vweird.f32 %v1349
      %vm1356 = vmor %vm1354, %vm1355
      %v1357 = vsel %vm1356, %v1349, %v1353
      %v1358 = vand.u32 2147483647, %v1319
      %vm1359 = vcmp.eq.f32.partialorder %v1358, 8.507059e+37
      %v1360 = vand.u32 %v1319, 2147483648
      %v1361 = vor.u32 1.1754944e-38, %v1360
      %v1362 = vsel %vm1359, %v1361, %v1357
      %v1363 = vmul.f32 1.0, %v1362
      %v1364 = vrcp.pop %v1320
      %v1365 = vmul.f32 %v1320, %v1364
      %v1366 = vsub.f32 1.0, %v1365
      %v1367 = vmul.f32 %v1364, %v1366
      %v1368 = vadd.f32 %v1364, %v1367
      %vm1369 = vweird.f32 %v1320
      %vm1370 = vweird.f32 %v1364
      %vm1371 = vmor %vm1369, %vm1370
      %v1372 = vsel %vm1371, %v1364, %v1368
      %v1373 = vand.u32 2147483647, %v1320
      %vm1374 = vcmp.eq.f32.partialorder %v1373, 8.507059e+37
      %v1375 = vand.u32 %v1320, 2147483648
      %v1376 = vor.u32 1.1754944e-38, %v1375
      %v1377 = vsel %vm1374, %v1376, %v1372
      %v1378 = vmul.f32 1.0, %v1377
      %v1379 = vrcp.pop %v1321
      %v1380 = vmul.f32 %v1321, %v1379
      %v1381 = vsub.f32 1.0, %v1380
      %v1382 = vmul.f32 %v1379, %v1381
      %v1383 = vadd.f32 %v1379, %v1382
      %vm1384 = vweird.f32 %v1321
      %vm1385 = vweird.f32 %v1379
      %vm1386 = vmor %vm1384, %vm1385
      %v1387 = vsel %vm1386, %v1379, %v1383
      %v1388 = vand.u32 2147483647, %v1321
      %vm1389 = vcmp.eq.f32.partialorder %v1388, 8.507059e+37
      %v1390 = vand.u32 %v1321, 2147483648
      %v1391 = vor.u32 1.1754944e-38, %v1390
      %v1392 = vsel %vm1389, %v1391, %v1387
      %v1393 = vmul.f32 1.0, %v1392
      %v1394 = vrcp.pop %v1322
      %v1395 = vmul.f32 %v1322, %v1394
      %v1396 = vsub.f32 1.0, %v1395
      %v1397 = vmul.f32 %v1394, %v1396
      %v1398 = vadd.f32 %v1394, %v1397
      %vm1399 = vweird.f32 %v1322
      %vm1400 = vweird.f32 %v1394
      %vm1401 = vmor %vm1399, %vm1400
      %v1402 = vsel %vm1401, %v1394, %v1398
      %v1403 = vand.u32 2147483647, %v1322
      %vm1404 = vcmp.eq.f32.partialorder %v1403, 8.507059e+37
      %v1405 = vand.u32 %v1322, 2147483648
      %v1406 = vor.u32 1.1754944e-38, %v1405
      %v1407 = vsel %vm1404, %v1406, %v1402
      %v1408 = vmul.f32 1.0, %v1407
      %v1409 = vrcp.pop %v1323
      %v1410 = vmul.f32 %v1323, %v1409
      %v1411 = vsub.f32 1.0, %v1410
      %v1412 = vmul.f32 %v1409, %v1411
      %v1413 = vadd.f32 %v1409, %v1412
      %vm1414 = vweird.f32 %v1323
      %vm1415 = vweird.f32 %v1409
      %vm1416 = vmor %vm1414, %vm1415
      %v1417 = vsel %vm1416, %v1409, %v1413
      %v1418 = vand.u32 2147483647, %v1323
      %vm1419 = vcmp.eq.f32.partialorder %v1418, 8.507059e+37
      %v1420 = vand.u32 %v1323, 2147483648
      %v1421 = vor.u32 1.1754944e-38, %v1420
      %v1422 = vsel %vm1419, %v1421, %v1417
      %v1423 = vmul.f32 1.0, %v1422
      %v1424 = vrcp.pop %v1324
      %v1425 = vmul.f32 %v1324, %v1424
      %v1426 = vsub.f32 1.0, %v1425
      %v1427 = vmul.f32 %v1424, %v1426
      %v1428 = vadd.f32 %v1424, %v1427
      %vm1429 = vweird.f32 %v1324
      %vm1430 = vweird.f32 %v1424
      %vm1431 = vmor %vm1429, %vm1430
      %v1432 = vsel %vm1431, %v1424, %v1428
      %v1433 = vand.u32 2147483647, %v1324
      %vm1434 = vcmp.eq.f32.partialorder %v1433, 8.507059e+37
      %v1435 = vand.u32 %v1324, 2147483648
      %v1436 = vor.u32 1.1754944e-38, %v1435
      %v1437 = vsel %vm1434, %v1436, %v1432
      %v1438 = vmul.f32 1.0, %v1437
      %v1439 = vrcp.pop %v1325
      %v1440 = vmul.f32 %v1325, %v1439
      %v1441 = vsub.f32 1.0, %v1440
      %v1442 = vmul.f32 %v1439, %v1441
      %v1443 = vadd.f32 %v1439, %v1442
      %vm1444 = vweird.f32 %v1325
      %vm1445 = vweird.f32 %v1439
      %vm1446 = vmor %vm1444, %vm1445
      %v1447 = vsel %vm1446, %v1439, %v1443
      %v1448 = vand.u32 2147483647, %v1325
      %vm1449 = vcmp.eq.f32.partialorder %v1448, 8.507059e+37
      %v1450 = vand.u32 %v1325, 2147483648
      %v1451 = vor.u32 1.1754944e-38, %v1450
      %v1452 = vsel %vm1449, %v1451, %v1447
      %v1453 = vmul.f32 1.0, %v1452
      %v1454 = vrcp.pop %v1326
      %v1455 = vmul.f32 %v1326, %v1454
      %v1456 = vsub.f32 1.0, %v1455
      %v1457 = vmul.f32 %v1454, %v1456
      %v1458 = vadd.f32 %v1454, %v1457
      %vm1459 = vweird.f32 %v1326
      %vm1460 = vweird.f32 %v1454
      %vm1461 = vmor %vm1459, %vm1460
      %v1462 = vsel %vm1461, %v1454, %v1458
      %v1463 = vand.u32 2147483647, %v1326
      %vm1464 = vcmp.eq.f32.partialorder %v1463, 8.507059e+37
      %v1465 = vand.u32 %v1326, 2147483648
      %v1466 = vor.u32 1.1754944e-38, %v1465
      %v1467 = vsel %vm1464, %v1466, %v1462
      %v1468 = vmul.f32 1.0, %v1467
      %v1469 = vrcp.pop %v1327
      %v1470 = vmul.f32 %v1327, %v1469
      %v1471 = vsub.f32 1.0, %v1470
      %v1472 = vmul.f32 %v1469, %v1471
      %v1473 = vadd.f32 %v1469, %v1472
      %vm1474 = vweird.f32 %v1327
      %vm1475 = vweird.f32 %v1469
      %vm1476 = vmor %vm1474, %vm1475
      %v1477 = vsel %vm1476, %v1469, %v1473
      %v1478 = vand.u32 2147483647, %v1327
      %vm1479 = vcmp.eq.f32.partialorder %v1478, 8.507059e+37
      %v1480 = vand.u32 %v1327, 2147483648
      %v1481 = vor.u32 1.1754944e-38, %v1480
      %v1482 = vsel %vm1479, %v1481, %v1477
      %v1483 = vmul.f32 1.0, %v1482
      %v1484 = vrcp.pop %v1328
      %v1485 = vmul.f32 %v1328, %v1484
      %v1486 = vsub.f32 1.0, %v1485
      %v1487 = vmul.f32 %v1484, %v1486
      %v1488 = vadd.f32 %v1484, %v1487
      %vm1489 = vweird.f32 %v1328
      %vm1490 = vweird.f32 %v1484
      %vm1491 = vmor %vm1489, %vm1490
      %v1492 = vsel %vm1491, %v1484, %v1488
      %v1493 = vand.u32 2147483647, %v1328
      %vm1494 = vcmp.eq.f32.partialorder %v1493, 8.507059e+37
      %v1495 = vand.u32 %v1328, 2147483648
      %v1496 = vor.u32 1.1754944e-38, %v1495
      %v1497 = vsel %vm1494, %v1496, %v1492
      %v1498 = vmul.f32 1.0, %v1497
      %v1499 = vrcp.pop %v1329
      %v1500 = vmul.f32 %v1329, %v1499
      %v1501 = vsub.f32 1.0, %v1500
      %v1502 = vmul.f32 %v1499, %v1501
      %v1503 = vadd.f32 %v1499, %v1502
      %vm1504 = vweird.f32 %v1329
      %vm1505 = vweird.f32 %v1499
      %vm1506 = vmor %vm1504, %vm1505
      %v1507 = vsel %vm1506, %v1499, %v1503
      %v1508 = vand.u32 2147483647, %v1329
      %vm1509 = vcmp.eq.f32.partialorder %v1508, 8.507059e+37
      %v1510 = vand.u32 %v1329, 2147483648
      %v1511 = vor.u32 1.1754944e-38, %v1510
      %v1512 = vsel %vm1509, %v1511, %v1507
      %v1513 = vmul.f32 1.0, %v1512
      %v1514 = vrcp.pop %v1330
      %v1515 = vmul.f32 %v1330, %v1514
      %v1516 = vsub.f32 1.0, %v1515
      %v1517 = vmul.f32 %v1514, %v1516
      %v1518 = vadd.f32 %v1514, %v1517
      %vm1519 = vweird.f32 %v1330
      %vm1520 = vweird.f32 %v1514
      %vm1521 = vmor %vm1519, %vm1520
      %v1522 = vsel %vm1521, %v1514, %v1518
      %v1523 = vand.u32 2147483647, %v1330
      %vm1524 = vcmp.eq.f32.partialorder %v1523, 8.507059e+37
      %v1525 = vand.u32 %v1330, 2147483648
      %v1526 = vor.u32 1.1754944e-38, %v1525
      %v1527 = vsel %vm1524, %v1526, %v1522
      %v1528 = vmul.f32 1.0, %v1527
      %v1529 = vrcp.pop %v1331
      %v1530 = vmul.f32 %v1331, %v1529
      %v1531 = vsub.f32 1.0, %v1530
      %v1532 = vmul.f32 %v1529, %v1531
      %v1533 = vadd.f32 %v1529, %v1532
      %vm1534 = vweird.f32 %v1331
      %vm1535 = vweird.f32 %v1529
      %vm1536 = vmor %vm1534, %vm1535
      %v1537 = vsel %vm1536, %v1529, %v1533
      %v1538 = vand.u32 2147483647, %v1331
      %vm1539 = vcmp.eq.f32.partialorder %v1538, 8.507059e+37
      %v1540 = vand.u32 %v1331, 2147483648
      %v1541 = vor.u32 1.1754944e-38, %v1540
      %v1542 = vsel %vm1539, %v1541, %v1537
      %v1543 = vmul.f32 1.0, %v1542
      %v1544 = vrcp.pop %v1332
      %v1545 = vmul.f32 %v1332, %v1544
      %v1546 = vsub.f32 1.0, %v1545
      %v1547 = vmul.f32 %v1544, %v1546
      %v1548 = vadd.f32 %v1544, %v1547
      %vm1549 = vweird.f32 %v1332
      %vm1550 = vweird.f32 %v1544
      %vm1551 = vmor %vm1549, %vm1550
      %v1552 = vsel %vm1551, %v1544, %v1548
      %v1553 = vand.u32 2147483647, %v1332
      %vm1554 = vcmp.eq.f32.partialorder %v1553, 8.507059e+37
      %v1555 = vand.u32 %v1332, 2147483648
      %v1556 = vor.u32 1.1754944e-38, %v1555
      %v1557 = vsel %vm1554, %v1556, %v1552
      %v1558 = vmul.f32 1.0, %v1557
      %v1559 = vrcp.pop %v1333
      %v1560 = vmul.f32 %v1333, %v1559
      %v1561 = vsub.f32 1.0, %v1560
      %v1562 = vmul.f32 %v1559, %v1561
      %v1563 = vadd.f32 %v1559, %v1562
      %vm1564 = vweird.f32 %v1333
      %vm1565 = vweird.f32 %v1559
      %vm1566 = vmor %vm1564, %vm1565
      %v1567 = vsel %vm1566, %v1559, %v1563
      %v1568 = vand.u32 2147483647, %v1333
      %vm1569 = vcmp.eq.f32.partialorder %v1568, 8.507059e+37
      %v1570 = vand.u32 %v1333, 2147483648
      %v1571 = vor.u32 1.1754944e-38, %v1570
      %v1572 = vsel %vm1569, %v1571, %v1567
      %v1573 = vmul.f32 1.0, %v1572
      %v1574 = vmul.f32 %v1348, 1.0614054
      %v1575 = vmul.f32 %v1363, 1.0614054
      %v1576 = vmul.f32 %v1378, 1.0614054
      %v1577 = vmul.f32 %v1393, 1.0614054
      %v1578 = vmul.f32 %v1408, 1.0614054
      %v1579 = vmul.f32 %v1423, 1.0614054
      %v1580 = vmul.f32 %v1438, 1.0614054
      %v1581 = vmul.f32 %v1453, 1.0614054
      %v1582 = vmul.f32 %v1468, 1.0614054
      %v1583 = vmul.f32 %v1483, 1.0614054
      %v1584 = vmul.f32 %v1498, 1.0614054
      %v1585 = vmul.f32 %v1513, 1.0614054
      %v1586 = vmul.f32 %v1528, 1.0614054
      %v1587 = vmul.f32 %v1543, 1.0614054
      %v1588 = vmul.f32 %v1558, 1.0614054
      %v1589 = vmul.f32 %v1573, 1.0614054
      %v1590 = vadd.f32 %v1574, -1.4531521
      %v1591 = vadd.f32 %v1575, -1.4531521
      %v1592 = vadd.f32 %v1576, -1.4531521
      %v1593 = vadd.f32 %v1577, -1.4531521
      %v1594 = vadd.f32 %v1578, -1.4531521
      %v1595 = vadd.f32 %v1579, -1.4531521
      %v1596 = vadd.f32 %v1580, -1.4531521
      %v1597 = vadd.f32 %v1581, -1.4531521
      %v1598 = vadd.f32 %v1582, -1.4531521
      %v1599 = vadd.f32 %v1583, -1.4531521
      %v1600 = vadd.f32 %v1584, -1.4531521
      %v1601 = vadd.f32 %v1585, -1.4531521
      %v1602 = vadd.f32 %v1586, -1.4531521
      %v1603 = vadd.f32 %v1587, -1.4531521
      %v1604 = vadd.f32 %v1588, -1.4531521
      %v1605 = vadd.f32 %v1589, -1.4531521
      %v1606 = vmul.f32 %v1590, %v1348
      %v1607 = vmul.f32 %v1591, %v1363
      %v1608 = vmul.f32 %v1592, %v1378
      %v1609 = vmul.f32 %v1593, %v1393
      %v1610 = vmul.f32 %v1594, %v1408
      %v1611 = vmul.f32 %v1595, %v1423
      %v1612 = vmul.f32 %v1596, %v1438
      %v1613 = vmul.f32 %v1597, %v1453
      %v1614 = vmul.f32 %v1598, %v1468
      %v1615 = vmul.f32 %v1599, %v1483
      %v1616 = vmul.f32 %v1600, %v1498
      %v1617 = vmul.f32 %v1601, %v1513
      %v1618 = vmul.f32 %v1602, %v1528
      %v1619 = vmul.f32 %v1603, %v1543
      %v1620 = vmul.f32 %v1604, %v1558
      %v1621 = vmul.f32 %v1605, %v1573
      %v1622 = vadd.f32 %v1606, 1.4214138
      %v1623 = vadd.f32 %v1607, 1.4214138
      %v1624 = vadd.f32 %v1608, 1.4214138
      %v1625 = vadd.f32 %v1609, 1.4214138
      %v1626 = vadd.f32 %v1610, 1.4214138
      %v1627 = vadd.f32 %v1611, 1.4214138
      %v1628 = vadd.f32 %v1612, 1.4214138
      %v1629 = vadd.f32 %v1613, 1.4214138
      %v1630 = vadd.f32 %v1614, 1.4214138
      %v1631 = vadd.f32 %v1615, 1.4214138
      %v1632 = vadd.f32 %v1616, 1.4214138
      %v1633 = vadd.f32 %v1617, 1.4214138
      %v1634 = vadd.f32 %v1618, 1.4214138
      %v1635 = vadd.f32 %v1619, 1.4214138
      %v1636 = vadd.f32 %v1620, 1.4214138
      %v1637 = vadd.f32 %v1621, 1.4214138
      %v1638 = vmul.f32 %v1622, %v1348
      %v1639 = vmul.f32 %v1623, %v1363
      %v1640 = vmul.f32 %v1624, %v1378
      %v1641 = vmul.f32 %v1625, %v1393
      %v1642 = vmul.f32 %v1626, %v1408
      %v1643 = vmul.f32 %v1627, %v1423
      %v1644 = vmul.f32 %v1628, %v1438
      %v1645 = vmul.f32 %v1629, %v1453
      %v1646 = vmul.f32 %v1630, %v1468
      %v1647 = vmul.f32 %v1631, %v1483
      %v1648 = vmul.f32 %v1632, %v1498
      %v1649 = vmul.f32 %v1633, %v1513
      %v1650 = vmul.f32 %v1634, %v1528
      %v1651 = vmul.f32 %v1635, %v1543
      %v1652 = vmul.f32 %v1636, %v1558
      %v1653 = vmul.f32 %v1637, %v1573
      %v1654 = vadd.f32 %v1638, -0.28449672
      %v1655 = vadd.f32 %v1639, -0.28449672
      %v1656 = vadd.f32 %v1640, -0.28449672
      %v1657 = vadd.f32 %v1641, -0.28449672
      %v1658 = vadd.f32 %v1642, -0.28449672
      %v1659 = vadd.f32 %v1643, -0.28449672
      %v1660 = vadd.f32 %v1644, -0.28449672
      %v1661 = vadd.f32 %v1645, -0.28449672
      %v1662 = vadd.f32 %v1646, -0.28449672
      %v1663 = vadd.f32 %v1647, -0.28449672
      %v1664 = vadd.f32 %v1648, -0.28449672
      %v1665 = vadd.f32 %v1649, -0.28449672
      %v1666 = vadd.f32 %v1650, -0.28449672
      %v1667 = vadd.f32 %v1651, -0.28449672
      %v1668 = vadd.f32 %v1652, -0.28449672
      %v1669 = vadd.f32 %v1653, -0.28449672
      %v1670 = vmul.f32 %v1654, %v1348
      %v1671 = vmul.f32 %v1655, %v1363
      %v1672 = vmul.f32 %v1656, %v1378
      %v1673 = vmul.f32 %v1657, %v1393
      %v1674 = vmul.f32 %v1658, %v1408
      %v1675 = vmul.f32 %v1659, %v1423
      %v1676 = vmul.f32 %v1660, %v1438
      %v1677 = vmul.f32 %v1661, %v1453
      %v1678 = vmul.f32 %v1662, %v1468
      %v1679 = vmul.f32 %v1663, %v1483
      %v1680 = vmul.f32 %v1664, %v1498
      %v1681 = vmul.f32 %v1665, %v1513
      %v1682 = vmul.f32 %v1666, %v1528
      %v1683 = vmul.f32 %v1667, %v1543
      %v1684 = vmul.f32 %v1668, %v1558
      %v1685 = vmul.f32 %v1669, %v1573
      %v1686 = vadd.f32 %v1670, 0.2548296
      %v1687 = vadd.f32 %v1671, 0.2548296
      %v1688 = vadd.f32 %v1672, 0.2548296
      %v1689 = vadd.f32 %v1673, 0.2548296
      %v1690 = vadd.f32 %v1674, 0.2548296
      %v1691 = vadd.f32 %v1675, 0.2548296
      %v1692 = vadd.f32 %v1676, 0.2548296
      %v1693 = vadd.f32 %v1677, 0.2548296
      %v1694 = vadd.f32 %v1678, 0.2548296
      %v1695 = vadd.f32 %v1679, 0.2548296
      %v1696 = vadd.f32 %v1680, 0.2548296
      %v1697 = vadd.f32 %v1681, 0.2548296
      %v1698 = vadd.f32 %v1682, 0.2548296
      %v1699 = vadd.f32 %v1683, 0.2548296
      %v1700 = vadd.f32 %v1684, 0.2548296
      %v1701 = vadd.f32 %v1685, 0.2548296
      %v1702 = vmul.f32 %v1686, %v1348
      %v1703 = vmul.f32 %v1687, %v1363
      %v1704 = vmul.f32 %v1688, %v1378
      %v1705 = vmul.f32 %v1689, %v1393
      %v1706 = vmul.f32 %v1690, %v1408
      %v1707 = vmul.f32 %v1691, %v1423
      %v1708 = vmul.f32 %v1692, %v1438
      %v1709 = vmul.f32 %v1693, %v1453
      %v1710 = vmul.f32 %v1694, %v1468
      %v1711 = vmul.f32 %v1695, %v1483
      %v1712 = vmul.f32 %v1696, %v1498
      %v1713 = vmul.f32 %v1697, %v1513
      %v1714 = vmul.f32 %v1698, %v1528
      %v1715 = vmul.f32 %v1699, %v1543
      %v1716 = vmul.f32 %v1700, %v1558
      %v1717 = vmul.f32 %v1701, %v1573
      %v1718 = vsub.f32 0.0, %v1286
      %v1719 = vsub.f32 0.0, %v1287
      %v1720 = vsub.f32 0.0, %v1288
      %v1721 = vsub.f32 0.0, %v1289
      %v1722 = vsub.f32 0.0, %v1290
      %v1723 = vsub.f32 0.0, %v1291
      %v1724 = vsub.f32 0.0, %v1292
      %v1725 = vsub.f32 0.0, %v1293
      %v1726 = vsub.f32 0.0, %v1294
      %v1727 = vsub.f32 0.0, %v1295
      %v1728 = vsub.f32 0.0, %v1296
      %v1729 = vsub.f32 0.0, %v1297
      %v1730 = vsub.f32 0.0, %v1298
      %v1731 = vsub.f32 0.0, %v1299
      %v1732 = vsub.f32 0.0, %v1300
      %v1733 = vsub.f32 0.0, %v1301
      %v1734 = vmul.f32 %v1718, %v1286
      %v1735 = vmul.f32 %v1719, %v1287
      %v1736 = vmul.f32 %v1720, %v1288
      %v1737 = vmul.f32 %v1721, %v1289
      %v1738 = vmul.f32 %v1722, %v1290
      %v1739 = vmul.f32 %v1723, %v1291
      %v1740 = vmul.f32 %v1724, %v1292
      %v1741 = vmul.f32 %v1725, %v1293
      %v1742 = vmul.f32 %v1726, %v1294
      %v1743 = vmul.f32 %v1727, %v1295
      %v1744 = vmul.f32 %v1728, %v1296
      %v1745 = vmul.f32 %v1729, %v1297
      %v1746 = vmul.f32 %v1730, %v1298
      %v1747 = vmul.f32 %v1731, %v1299
      %v1748 = vmul.f32 %v1732, %v1300
      %v1749 = vmul.f32 %v1733, %v1301
      %v1750 = vmul.f32 %v1734, 1.442695
      %v1751 = vpow.pop %v1750
      %v1752 = vmul.f32 %v1735, 1.442695
      %v1753 = vpow.pop %v1752
      %v1754 = vmul.f32 %v1736, 1.442695
      %v1755 = vpow.pop %v1754
      %v1756 = vmul.f32 %v1737, 1.442695
      %v1757 = vpow.pop %v1756
      %v1758 = vmul.f32 %v1738, 1.442695
      %v1759 = vpow.pop %v1758
      %v1760 = vmul.f32 %v1739, 1.442695
      %v1761 = vpow.pop %v1760
      %v1762 = vmul.f32 %v1740, 1.442695
      %v1763 = vpow.pop %v1762
      %v1764 = vmul.f32 %v1741, 1.442695
      %v1765 = vpow.pop %v1764
      %v1766 = vmul.f32 %v1742, 1.442695
      %v1767 = vpow.pop %v1766
      %v1768 = vmul.f32 %v1743, 1.442695
      %v1769 = vpow.pop %v1768
      %v1770 = vmul.f32 %v1744, 1.442695
      %v1771 = vpow.pop %v1770
      %v1772 = vmul.f32 %v1745, 1.442695
      %v1773 = vpow.pop %v1772
      %v1774 = vmul.f32 %v1746, 1.442695
      %v1775 = vpow.pop %v1774
      %v1776 = vmul.f32 %v1747, 1.442695
      %v1777 = vpow.pop %v1776
      %v1778 = vmul.f32 %v1748, 1.442695
      %v1779 = vpow.pop %v1778
      %v1780 = vmul.f32 %v1749, 1.442695
      %v1781 = vpow.pop %v1780
      %v1782 = vmul.f32 %v1702, %v1751
      %v1783 = vmul.f32 %v1703, %v1753
      %v1784 = vmul.f32 %v1704, %v1755
      %v1785 = vmul.f32 %v1705, %v1757
      %v1786 = vmul.f32 %v1706, %v1759
      %v1787 = vmul.f32 %v1707, %v1761
      %v1788 = vmul.f32 %v1708, %v1763
      %v1789 = vmul.f32 %v1709, %v1765
      %v1790 = vmul.f32 %v1710, %v1767
      %v1791 = vmul.f32 %v1711, %v1769
      %v1792 = vmul.f32 %v1712, %v1771
      %v1793 = vmul.f32 %v1713, %v1773
      %v1794 = vmul.f32 %v1714, %v1775
      %v1795 = vmul.f32 %v1715, %v1777
      %v1796 = vmul.f32 %v1716, %v1779
      %v1797 = vmul.f32 %v1717, %v1781
      %v1798 = vsub.f32 1.0, %v1782
      %v1799 = vsub.f32 1.0, %v1783
      %v1800 = vsub.f32 1.0, %v1784
      %v1801 = vsub.f32 1.0, %v1785
      %v1802 = vsub.f32 1.0, %v1786
      %v1803 = vsub.f32 1.0, %v1787
      %v1804 = vsub.f32 1.0, %v1788
      %v1805 = vsub.f32 1.0, %v1789
      %v1806 = vsub.f32 1.0, %v1790
      %v1807 = vsub.f32 1.0, %v1791
      %v1808 = vsub.f32 1.0, %v1792
      %v1809 = vsub.f32 1.0, %v1793
      %v1810 = vsub.f32 1.0, %v1794
      %v1811 = vsub.f32 1.0, %v1795
      %v1812 = vsub.f32 1.0, %v1796
      %v1813 = vsub.f32 1.0, %v1797
      %v1814 = vmul.f32 %v1270, %v1798
      %v1815 = vmul.f32 %v1271, %v1799
      %v1816 = vmul.f32 %v1272, %v1800
      %v1817 = vmul.f32 %v1273, %v1801
      %v1818 = vmul.f32 %v1274, %v1802
      %v1819 = vmul.f32 %v1275, %v1803
      %v1820 = vmul.f32 %v1276, %v1804
      %v1821 = vmul.f32 %v1277, %v1805
      %v1822 = vmul.f32 %v1278, %v1806
      %v1823 = vmul.f32 %v1279, %v1807
      %v1824 = vmul.f32 %v1280, %v1808
      %v1825 = vmul.f32 %v1281, %v1809
      %v1826 = vmul.f32 %v1282, %v1810
      %v1827 = vmul.f32 %v1283, %v1811
      %v1828 = vmul.f32 %v1284, %v1812
      %v1829 = vmul.f32 %v1285, %v1813
      %v1830 = vadd.f32 %v1814, 1.0
      %v1831 = vadd.f32 %v1815, 1.0
      %v1832 = vadd.f32 %v1816, 1.0
      %v1833 = vadd.f32 %v1817, 1.0
      %v1834 = vadd.f32 %v1818, 1.0
      %v1835 = vadd.f32 %v1819, 1.0
      %v1836 = vadd.f32 %v1820, 1.0
      %v1837 = vadd.f32 %v1821, 1.0
      %v1838 = vadd.f32 %v1822, 1.0
      %v1839 = vadd.f32 %v1823, 1.0
      %v1840 = vadd.f32 %v1824, 1.0
      %v1841 = vadd.f32 %v1825, 1.0
      %v1842 = vadd.f32 %v1826, 1.0
      %v1843 = vadd.f32 %v1827, 1.0
      %v1844 = vadd.f32 %v1828, 1.0
      %v1845 = vadd.f32 %v1829, 1.0
      %v1846 = vmul.f32 %v1222, %v1830
      %v1847 = vmul.f32 %v1223, %v1831
      %v1848 = vmul.f32 %v1224, %v1832
      %v1849 = vmul.f32 %v1225, %v1833
      %v1850 = vmul.f32 %v1226, %v1834
      %v1851 = vmul.f32 %v1227, %v1835
      %v1852 = vmul.f32 %v1228, %v1836
      %v1853 = vmul.f32 %v1229, %v1837
      %v1854 = vmul.f32 %v1230, %v1838
      %v1855 = vmul.f32 %v1231, %v1839
      %v1856 = vmul.f32 %v1232, %v1840
      %v1857 = vmul.f32 %v1233, %v1841
      %v1858 = vmul.f32 %v1234, %v1842
      %v1859 = vmul.f32 %v1235, %v1843
      %v1860 = vmul.f32 %v1236, %v1844
      %v1861 = vmul.f32 %v1237, %v1845
      %v1862 = vld [vmem:[%s10] sm:$0xff]
      %v1863 = vld [vmem:[%s10 + $0x8] sm:$0xff]
      %v1864 = vld [vmem:[%s10 + $0x10] sm:$0xff]
      %v1865 = vld [vmem:[%s10 + $0x18] sm:$0xff]
      %v1866 = vld [vmem:[%s11] sm:$0xff]
      %v1867 = vld [vmem:[%s11 + $0x8] sm:$0xff]
      %v1868 = vld [vmem:[%s11 + $0x10] sm:$0xff]
      %v1869 = vld [vmem:[%s11 + $0x18] sm:$0xff]
      %1871 = vset.pattern.permute.xlu0 0
      %1872 = vperm.xlu0 %1871, %v1866
      %v1873 = vpop.permute.xlu0 %1872
      %1876 = vset.pattern.permute.xlu0 0
      %1877 = vperm.xlu0 %1876, %v1867
      %v1878 = vpop.permute.xlu0 %1877
      %1881 = vset.pattern.permute.xlu0 0
      %1882 = vperm.xlu0 %1881, %v1868
      %v1883 = vpop.permute.xlu0 %1882
      %1886 = vset.pattern.permute.xlu0 0
      %1887 = vperm.xlu0 %1886, %v1869
      %v1888 = vpop.permute.xlu0 %1887
      %vm1890 = vcmask 523264
      %v1892 = vsel %vm1890, %v1862, 0
      %v1895 = vsel %vm1890, %v1863, 0
      %v1898 = vsel %vm1890, %v1864, 0
      %v1901 = vsel %vm1890, %v1865, 0
      %1903 = vmatpush.msra.mxu0 0.0
      %1904 = vmatpush.msra.mxu0 0.0
      %1905 = vmatpush.msra.mxu0 0.0
      %1906 = vmatpush.msra.mxu0 0.0
      %1907 = vmatpush.msra.mxu0 0.0
      %1908 = vmatpush.msra.mxu0 0.0
      %1909 = vmatpush.msra.mxu0 0.0
      %1910 = vmatpush.msra.mxu0 0.0
      %1911 = vmatpush.msra.mxu0 %v1860
      %1912 = vmatpush.msra.mxu0 %v1858
      %1913 = vmatpush.msra.mxu0 %v1856
      %1914 = vmatpush.msra.mxu0 %v1854
      %1915 = vmatpush.msra.mxu0 %v1852
      %1916 = vmatpush.msra.mxu0 %v1850
      %1917 = vmatpush.msra.mxu0 %v1848
      %1918 = vmatpush.msra.mxu0 %v1846
      %1919 = vmatmul.f32.gmra.mxu0 %v1892
      %v1920 = vpop.f32.mrf.mxu0
      %v1921 = vadd.f32 %v1873, %v1920
      %1922 = vmatmul.f32.gmra.mxu0 %v1895
      %v1923 = vpop.f32.mrf.mxu0
      %v1924 = vadd.f32 %v1878, %v1923
      %1925 = vmatmul.f32.gmra.mxu0 %v1898
      %v1926 = vpop.f32.mrf.mxu0
      %v1927 = vadd.f32 %v1883, %v1926
      %1928 = vmatmul.f32.gmra.mxu0 %v1901
      %v1929 = vpop.f32.mrf.mxu0
      %v1930 = vadd.f32 %v1888, %v1929
      %1931 = vdwg.mxu0
      %1932 = vmatpush.msra.mxu0 0.0
      %1933 = vmatpush.msra.mxu0 0.0
      %1934 = vmatpush.msra.mxu0 0.0
      %1935 = vmatpush.msra.mxu0 0.0
      %1936 = vmatpush.msra.mxu0 0.0
      %1937 = vmatpush.msra.mxu0 0.0
      %1938 = vmatpush.msra.mxu0 0.0
      %1939 = vmatpush.msra.mxu0 0.0
      %1940 = vmatpush.msra.mxu0 %v1861
      %1941 = vmatpush.msra.mxu0 %v1859
      %1942 = vmatpush.msra.mxu0 %v1857
      %1943 = vmatpush.msra.mxu0 %v1855
      %1944 = vmatpush.msra.mxu0 %v1853
      %1945 = vmatpush.msra.mxu0 %v1851
      %1946 = vmatpush.msra.mxu0 %v1849
      %1947 = vmatpush.msra.mxu0 %v1847
      %1948 = vmatmul.f32.gmra.mxu0 %v1892
      %v1949 = vpop.f32.mrf.mxu0
      %v1950 = vadd.f32 %v1873, %v1949
      %1951 = vmatmul.f32.gmra.mxu0 %v1895
      %v1952 = vpop.f32.mrf.mxu0
      %v1953 = vadd.f32 %v1878, %v1952
      %1954 = vmatmul.f32.gmra.mxu0 %v1898
      %v1955 = vpop.f32.mrf.mxu0
      %v1956 = vadd.f32 %v1883, %v1955
      %1957 = vmatmul.f32.gmra.mxu0 %v1901
      %v1958 = vpop.f32.mrf.mxu0
      %v1959 = vadd.f32 %v1888, %v1958
      %1960 = vdwg.mxu0
      %v1961 = vadd.f32 %v1921, %v905
      %v1962 = vadd.f32 %v1950, %v906
      %v1963 = vadd.f32 %v1924, %v907
      %v1964 = vadd.f32 %v1953, %v908
      %v1965 = vadd.f32 %v1927, %v909
      %v1966 = vadd.f32 %v1956, %v910
      %v1967 = vadd.f32 %v1930, %v911
      %v1968 = vadd.f32 %v1959, %v912
      %1969 = vst [vmem:[%s605] sm:$0xff] %v1961
      %1970 = vst [vmem:[%s605 + $0x8] sm:$0xff] %v1962
      %1971 = vst [vmem:[%s605 + $0x10] sm:$0xff] %v1963
      %1972 = vst [vmem:[%s605 + $0x18] sm:$0xff] %v1964
      %1973 = vst [vmem:[%s605 + $0x20] sm:$0xff] %v1965
      %1974 = vst [vmem:[%s605 + $0x28] sm:$0xff] %v1966
      %1975 = vst [vmem:[%s605 + $0x30] sm:$0xff] %v1967
      %1976 = vst [vmem:[%s605 + $0x38] sm:$0xff] %v1968
      %s1977 = smul.u32 2, %s39
      %p1978 = scmp.lt.s32.totalorder %s38, 1
      %s1979 = scalar_select %p1978, %s38, 1
      %p1980 = scmp.lt.s32.totalorder %s1977, 1
      %s1981 = scalar_select %p1980, %s1977, 1
      %s1982 = smul.addr %s1979, 8
      %s1983 = sadd.s32 %s1981, %s1982
      %s1984 = smul.addr %s1983, 8
      %s1985 = scalar_lea.vmem %s12, %s1984
      %s1986 = smul.u32 2, %s39
      %p1987 = scmp.lt.s32.totalorder %s38, 1
      %s1988 = scalar_select %p1987, %s38, 1
      %p1989 = scmp.lt.s32.totalorder %s1986, 1
      %s1990 = scalar_select %p1989, %s1986, 1
      %s1991 = smul.addr %s1988, 2
      %s1992 = sadd.s32 %s1990, %s1991
      %s1993 = smul.addr %s1992, 8
      %s1994 = scalar_lea.vmem %s13, %s1993
      %s1995 = smul.u32 2, %s39
      %p1996 = scmp.lt.s32.totalorder %s38, 1
      %s1997 = scalar_select %p1996, %s38, 1
      %p1998 = scmp.lt.s32.totalorder %s1995, 1
      %s1999 = scalar_select %p1998, %s1995, 1
      %s2000 = smul.addr %s1997, 8
      %s2001 = sadd.s32 %s1999, %s2000
      %s2002 = smul.addr %s2001, 8
      %s2003 = scalar_lea.vmem %s14, %s2002
      // Predicated region
      $region65: #{_att_block_forward_impl.1} parent=63 // pred_check
        %p2004 = pneg %p323
      $region66: #{_att_block_forward_impl.1} parent=63 // pred_check_branch
        %2006 = sbr.rel (%p2004) target = $region68
      $region67: #{_att_block_forward_impl.1} parent=63 // pred_region
        %s2007 = smul.u32 2, %s39
      $region68: #{_att_block_forward_impl.1} parent=63 // pred_fallthru
        _
      // Predicated region
      $region69: #{_att_block_forward_impl.1} parent=63 // pred_check
        %p2008 = pneg %p351
      $region70: #{_att_block_forward_impl.1} parent=63 // pred_check_branch
        %2010 = sbr.rel (%p2008) target = $region72
      $region71: #{_att_block_forward_impl.1} parent=63 // pred_region
        %s2011 = smul.u32 2, %s39
      $region72: #{_att_block_forward_impl.1} parent=63 // pred_fallthru
        _
      // Predicated region
      $region73: #{_att_block_forward_impl.1} parent=63 // pred_check
        %p2012 = pneg %p379
      $region74: #{_att_block_forward_impl.1} parent=63 // pred_check_branch
        %2014 = sbr.rel (%p2012) target = $region76
      $region75: #{_att_block_forward_impl.1} parent=63 // pred_region
        %s2015 = smul.u32 2, %s39
      $region76: #{_att_block_forward_impl.1} parent=63 // pred_fallthru
        _
    $region64: #{_att_block_forward_impl.1} parent=5 // pred_fallthru
      _
    %p2016 = scmp.le.s32.totalorder 2, %s29
    // Predicated region
    $region77: #{_att_block_forward_impl.1} parent=5 // pred_check
      %p2017 = pneg %p2016
    $region78: #{_att_block_forward_impl.1} parent=5 // pred_check_branch
      %2019 = sbr.rel (%p2017) target = $region80
    $region79: #{_att_block_forward_impl.1} parent=5 // pred_region
      %s2020 = ssub.s32 %s29, 2
      // Predicated region
      $region81: #{_att_block_forward_impl.1} parent=79 // pred_check
        %p2021 = pneg %p329
      $region82: #{_att_block_forward_impl.1} parent=79 // pred_check_branch
        %2023 = sbr.rel (%p2021) target = $region84
      $region83: #{_att_block_forward_impl.1} parent=79 // pred_region
        %s2024 = smul.u32 2, %s41
        %p2025 = scmp.lt.s32.totalorder %s40, 1
        %s2026 = scalar_select %p2025, %s40, 1
        %p2027 = scmp.lt.s32.totalorder %s2024, 1
        %s2028 = scalar_select %p2027, %s2024, 1
        %s2029 = smul.addr %s2026, 8
        %s2030 = sadd.s32 %s2028, %s2029
        %s2031 = smul.addr %s2030, 8
        %s2032 = scalar_lea.vmem %s12, %s2031
      $region84: #{_att_block_forward_impl.1} parent=79 // pred_fallthru
        _
      // Predicated region
      $region85: #{_att_block_forward_impl.1} parent=79 // pred_check
        %p2033 = pneg %p357
      $region86: #{_att_block_forward_impl.1} parent=79 // pred_check_branch
        %2035 = sbr.rel (%p2033) target = $region88
      $region87: #{_att_block_forward_impl.1} parent=79 // pred_region
        %s2036 = smul.u32 2, %s41
        %p2037 = scmp.lt.s32.totalorder %s40, 1
        %s2038 = scalar_select %p2037, %s40, 1
        %p2039 = scmp.lt.s32.totalorder %s2036, 1
        %s2040 = scalar_select %p2039, %s2036, 1
        %s2041 = smul.addr %s2038, 2
        %s2042 = sadd.s32 %s2040, %s2041
        %s2043 = smul.addr %s2042, 8
        %s2044 = scalar_lea.vmem %s13, %s2043
      $region88: #{_att_block_forward_impl.1} parent=79 // pred_fallthru
        _
      // Predicated region
      $region89: #{_att_block_forward_impl.1} parent=79 // pred_check
        %p2045 = pneg %p385
      $region90: #{_att_block_forward_impl.1} parent=79 // pred_check_branch
        %2047 = sbr.rel (%p2045) target = $region92
      $region91: #{_att_block_forward_impl.1} parent=79 // pred_region
        %s2048 = smul.u32 2, %s41
        %p2049 = scmp.lt.s32.totalorder %s40, 1
        %s2050 = scalar_select %p2049, %s40, 1
        %p2051 = scmp.lt.s32.totalorder %s2048, 1
        %s2052 = scalar_select %p2051, %s2048, 1
        %s2053 = smul.addr %s2050, 8
        %s2054 = sadd.s32 %s2052, %s2053
        %s2055 = smul.addr %s2054, 8
        %s2056 = scalar_lea.vmem %s14, %s2055
      $region92: #{_att_block_forward_impl.1} parent=79 // pred_fallthru
        _
    $region80: #{_att_block_forward_impl.1} parent=5 // pred_fallthru
      _
  $region6: #{_att_block_forward_impl.1} parent=0 // loop_footer
    %s33 = sadd.s32 1, %s29
  $region7: #{_att_block_forward_impl.1} parent=0 // loop_footer_branch
    %28 = sbr.rel target = $region3
  $region8: #{_att_block_forward_impl.1} parent=0 // loop_exit
    _

</llo_original>
